<compile_context>
chip_gen: v6e
topology: v6e:2x2x1
jax: 0.10.0
libtpu: 0.0.40
codegen_flags: <defaults>
</compile_context>

<pallas_src>
import jax
import jax.numpy as jnp
from jax import lax
from jax.experimental import pallas as pl
from jax.experimental.pallas import tpu as pltpu

EPS = 1e-5
f32 = jnp.float32
MXU_DTYPE = jnp.bfloat16          # MXU operands & HBM intermediates; accum/BN math in f32
VMEM_LIMIT = 32 * 1024 * 1024     # TODO(synk): make generation-aware and add spatial tiling
                                  # for production UNet sizes (v7x has only 64 MiB VMEM).


def _cparams():
    return pltpu.CompilerParams(dimension_semantics=("parallel",),
                                vmem_limit_bytes=VMEM_LIMIT)


def _round_up(v, m):
    return (v + m - 1) // m * m


def upsample_block_forward(x_nchw, y_nchw, params):
    """Pallas implementation of Upsample_block.forward (PyTorch NCHW in / NCHW out).

    BatchNorm runs in training mode (batch statistics, biased variance), matching
    nn.BatchNorm2d under .train().
    # TODO(synk): eval-mode BN (running_mean / running_var) is not implemented.
    """
    n, cin, h, w = x_nchw.shape
    cout = params["bt"].shape[0]
    c_y = y_nchw.shape[1]                      # skip channels (= cin - cout in the UNet)
    cout_p = _round_up(max(cout, 8), 8)        # pad Cout to the f32 sublane granule
    cin1 = cout_p + c_y                        # conv1 input channels in the fused concat

    hx, wx = h + 2, w + 2                      # pad-1 input grid (transposed conv)
    sx = hx * wx
    gd_x = 2 * wx + 2                          # trailing guard for transconv tap slices
    ho, wo = 2 * h, 2 * w                      # output spatial size
    hp, wp = ho + 2, wo + 2                    # pad-1 output grid (3x3 convs)
    s2 = hp * wp
    gd_c = wp + 1                              # per-side guard for 3x3 tap slices
    sg = s2 + 2 * gd_c
    count = float(n * ho * wo)                 # BN normalizer (valid positions only)
    phases = ((0, 0), (0, 1), (1, 0), (1, 1))  # (ry, rx) sub-pixel phases

    # ------------------------------------------------------------------------------
    # Weight prep: fold all taps into the contraction dim (one deep-K GEMM per conv).
    # ------------------------------------------------------------------------------
    # ConvTranspose2d(k=4, s=2, p=1) phase decomposition: output(2m+ry, 2l+rx) reads
    # x_pad[m+dy, l+dx] with kernel entry (3-2dy+ry, 3-2dx+rx), dy in {ry,ry+1},
    # dx in {rx,rx+1}.  Stack the 4 phases as row groups of one (4*Cout_p, 9*Cin)
    # matrix whose tap column-blocks are zero where a phase does not use that shift.
    wt = params["wt"].astype(f32)                                # (Cin, Cout, 4, 4)
    w_tc = jnp.zeros((4, cout_p, 9, cin), f32)
    for p, (ry, rx) in enumerate(phases):
        for dy in (ry, ry + 1):
            for dx in (rx, rx + 1):
                w_tc = w_tc.at[p, :cout, dy * 3 + dx, :].set(
                    wt[:, :, 3 - 2 * dy + ry, 3 - 2 * dx + rx].T)
    w_tc = w_tc.reshape(4 * cout_p, 9 * cin).astype(MXU_DTYPE)

    # conv1 over cat([transconv_out (Cout_p chans, zero-padded), y (c_y chans)]).
    w1 = params["w1"].astype(f32)                                # (Cout, Cout+c_y, 3, 3)
    w_c1 = jnp.zeros((cout_p, 9, cin1), f32)
    for kh in range(3):
        for kw in range(3):
            t9 = kh * 3 + kw
            w_c1 = w_c1.at[:cout, t9, :cout].set(w1[:, :cout, kh, kw])
            w_c1 = w_c1.at[:cout, t9, cout_p:cout_p + c_y].set(w1[:, cout:, kh, kw])
    w_c1 = w_c1.reshape(cout_p, 9 * cin1).astype(MXU_DTYPE)

    w2 = params["w2"].astype(f32)                                # (Cout, Cout, 3, 3)
    w_c2 = jnp.zeros((cout_p, 9, cout_p), f32)
    for kh in range(3):
        for kw in range(3):
            w_c2 = w_c2.at[:cout, kh * 3 + kw, :cout].set(w2[:, :, kh, kw])
    w_c2 = w_c2.reshape(cout_p, 9 * cout_p).astype(MXU_DTYPE)

    def _col(v):                                  # (Cout,) -> zero-padded (Cout_p, 1) f32
        return jnp.pad(v.astype(f32), (0, cout_p - v.shape[0])).reshape(cout_p, 1)

    bt4 = jnp.tile(_col(params["bt"]), (4, 1))    # same bias for every phase row-group
    b1 = _col(params["b1"]); g1 = _col(params["g1"]); be1 = _col(params["be1"])
    b2 = _col(params["b2"]); g2 = _col(params["g2"]); be2 = _col(params["be2"])

    # ------------------------------------------------------------------------------
    # Input prep (one-time XLA): pad-1 ring, flatten spatial on lanes, pre-pad guard
    # lanes, and store MXU operands as bf16 in HBM.
    # ------------------------------------------------------------------------------
    x_g = jnp.pad(x_nchw.astype(f32), ((0, 0), (0, 0), (1, 1), (1, 1)))
    x_g = jnp.pad(x_g.reshape(n, cin, sx), ((0, 0), (0, 0), (0, gd_x)))
    x_g = x_g.astype(MXU_DTYPE)                                  # (n, Cin, sx + gd_x)

    mask_g = jnp.pad(jnp.ones((ho, wo), f32), ((1, 1), (1, 1))).reshape(1, s2)
    mask_g = jnp.pad(mask_g, ((0, 0), (gd_c, gd_c)))             # (1, sg)

    # ========================= kernel 1: transposed conv ===========================
    # One (4*Cout_p, 9*Cin) x (9*Cin, sx) GEMM per sample yields all 4 phase maps.
    def transconv_kernel(x_ref, w_ref, b_ref, o_ref):
        xg = x_ref[0]                                            # (Cin, sx+gd_x) bf16
        stacked = jnp.concatenate(
            [xg[:, dy * wx + dx: dy * wx + dx + sx]
             for dy in range(3) for dx in range(3)], axis=0)     # (9*Cin, sx)
        t4 = jnp.dot(w_ref[...], stacked, preferred_element_type=f32) + b_ref[...]
        o_ref[0] = t4.astype(o_ref.dtype)

    t_phases = pl.pallas_call(
        transconv_kernel,
        out_shape=jax.ShapeDtypeStruct((n, 4 * cout_p, sx), MXU_DTYPE),
        grid=(n,),
        in_specs=[pl.BlockSpec((1, cin, sx + gd_x), lambda i: (i, 0, 0)),
                  pl.BlockSpec((4 * cout_p, 9 * cin), lambda i: (0, 0)),
                  pl.BlockSpec((4 * cout_p, 1), lambda i: (0, 0))],
        out_specs=pl.BlockSpec((1, 4 * cout_p, sx), lambda i: (i, 0, 0)),
        compiler_params=_cparams(),
    )(x_g, w_tc, bt4)

    # Layout glue (one XLA reshape+transpose, all bf16): interleave the 4 phase maps
    # into the 2Hx2W grid, add the pad-1 ring, fuse the channel concat with y, and
    # pre-pad the tap guard lanes once.
    # TODO(synk): fully fuse this into kernel 1/2 (strided-lane stores into VMEM) to
    # keep the transconv activations on-chip.
    t = t_phases.reshape(n, 2, 2, cout_p, hx, wx)[:, :, :, :, :h, :w]
    t = jnp.transpose(t, (0, 3, 4, 1, 5, 2)).reshape(n, cout_p, ho, wo)
    t = jnp.pad(t, ((0, 0), (0, 0), (1, 1), (1, 1))).reshape(n, cout_p, s2)
    y_p = jnp.pad(y_nchw.astype(MXU_DTYPE), ((0, 0), (0, 0), (1, 1), (1, 1)))
    y_p = y_p.reshape(n, c_y, s2)
    cat1 = jnp.concatenate([t, y_p], axis=1)                     # (n, Cin1, s2)
    cat1 = jnp.pad(cat1, ((0, 0), (0, 0), (gd_c, gd_c)))         # (n, Cin1, sg)

    # =============== kernel 2: conv1 + per-sample BN1 partial stats ================
    def conv1_kernel(c_ref, w_ref, b_ref, m_ref, z_ref, st_ref):
        cat = c_ref[0]                                           # (Cin1, sg) bf16
        stacked = jnp.concatenate(
            [cat[:, gd_c + (kh - 1) * wp + (kw - 1):
                  gd_c + (kh - 1) * wp + (kw - 1) + s2]
             for kh in range(3) for kw in range(3)], axis=0)     # (9*Cin1, s2)
        z = jnp.dot(w_ref[...], stacked, preferred_element_type=f32) + b_ref[...]
        # guarded bf16 output: zero the guard lanes once so kernel 3 can slice freely.
        z_ref[0, :, gd_c:gd_c + s2] = z.astype(z_ref.dtype)
        z_ref[0, :, 0:gd_c] = jnp.zeros((cout_p, gd_c), z_ref.dtype)
        z_ref[0, :, gd_c + s2:sg] = jnp.zeros((cout_p, gd_c), z_ref.dtype)
        m = m_ref[...]                                           # (1, sg)
        zm = z * m[:, gd_c:gd_c + s2]                            # valid positions only
        st_ref[0] = jnp.concatenate(
            [jnp.sum(zm, axis=1, keepdims=True),
             jnp.sum(zm * z, axis=1, keepdims=True)], axis=1)

    z1g, st1 = pl.pallas_call(
        conv1_kernel,
        out_shape=(jax.ShapeDtypeStruct((n, cout_p, sg), MXU_DTYPE),
                   jax.ShapeDtypeStruct((n, cout_p, 2), f32)),
        grid=(n,),
        in_specs=[pl.BlockSpec((1, cin1, sg), lambda i: (i, 0, 0)),
                  pl.BlockSpec((cout_p, 9 * cin1), lambda i: (0, 0)),
                  pl.BlockSpec((cout_p, 1), lambda i: (0, 0)),
                  pl.BlockSpec((1, sg), lambda i: (0, 0))],
        out_specs=(pl.BlockSpec((1, cout_p, sg), lambda i: (i, 0, 0)),
                   pl.BlockSpec((1, cout_p, 2), lambda i: (i, 0, 0))),
        compiler_params=_cparams(),
    )(cat1, w_c1, b1, mask_g)

    # Exact batch statistics from the per-sample partial sums (tiny XLA reduce).
    # TODO(synk): E[x^2]-mean^2 in f32 can cancel if channel means become large.
    def _bn_affine(st, g, be):
        s = jnp.sum(st, axis=0)                                  # (Cout_p, 2)
        mean = s[:, 0:1] * (1.0 / count)
        var = s[:, 1:2] * (1.0 / count) - mean * mean
        scale = g * lax.rsqrt(var + EPS)
        return scale, be - mean * scale

    sc1, sh1 = _bn_affine(st1, g1, be1)

    # ========= kernel 3: apply BN1+ReLU, conv2, per-sample BN2 partial stats =======
    def bn1_conv2_kernel(z1_ref, sc_ref, sh_ref, w_ref, b_ref, m_ref, z_ref, st_ref):
        z1 = z1_ref[0].astype(f32)                               # (Cout_p, sg)
        m = m_ref[...]                                           # (1, sg)
        a = jnp.maximum(z1 * sc_ref[...] + sh_ref[...], 0.0) * m # zero ring & guards
        a = a.astype(MXU_DTYPE)
        stacked = jnp.concatenate(
            [a[:, gd_c + (kh - 1) * wp + (kw - 1):
                gd_c + (kh - 1) * wp + (kw - 1) + s2]
             for kh in range(3) for kw in range(3)], axis=0)     # (9*Cout_p, s2)
        z = jnp.dot(w_ref[...], stacked, preferred_element_type=f32) + b_ref[...]
        z_ref[0] = z.astype(z_ref.dtype)
        zm = z * m[:, gd_c:gd_c + s2]
        st_ref[0] = jnp.concatenate(
            [jnp.sum(zm, axis=1, keepdims=True),
             jnp.sum(zm * z, axis=1, keepdims=True)], axis=1)

    z2, st2 = pl.pallas_call(
        bn1_conv2_kernel,
        out_shape=(jax.ShapeDtypeStruct((n, cout_p, s2), MXU_DTYPE),
                   jax.ShapeDtypeStruct((n, cout_p, 2), f32)),
        grid=(n,),
        in_specs=[pl.BlockSpec((1, cout_p, sg), lambda i: (i, 0, 0)),
                  pl.BlockSpec((cout_p, 1), lambda i: (0, 0)),
                  pl.BlockSpec((cout_p, 1), lambda i: (0, 0)),
                  pl.BlockSpec((cout_p, 9 * cout_p), lambda i: (0, 0)),
                  pl.BlockSpec((cout_p, 1), lambda i: (0, 0)),
                  pl.BlockSpec((1, sg), lambda i: (0, 0))],
        out_specs=(pl.BlockSpec((1, cout_p, s2), lambda i: (i, 0, 0)),
                   pl.BlockSpec((1, cout_p, 2), lambda i: (i, 0, 0))),
        compiler_params=_cparams(),
    )(z1g, sc1, sh1, w_c2, b2, mask_g)

    sc2, sh2 = _bn_affine(st2, g2, be2)

    # ========================= kernel 4: apply BN2 + ReLU ==========================
    # TODO(synk): could fold into kernel 3 via a two-pass grid + input_output_aliases
    # to save one HBM round trip of z2.
    def bn2_relu_kernel(z2_ref, sc_ref, sh_ref, o_ref):
        o_ref[0] = jnp.maximum(z2_ref[0].astype(f32) * sc_ref[...] + sh_ref[...], 0.0)

    out_flat = pl.pallas_call(
        bn2_relu_kernel,
        out_shape=jax.ShapeDtypeStruct((n, cout_p, s2), f32),
        grid=(n,),
        in_specs=[pl.BlockSpec((1, cout_p, s2), lambda i: (i, 0, 0)),
                  pl.BlockSpec((cout_p, 1), lambda i: (0, 0)),
                  pl.BlockSpec((cout_p, 1), lambda i: (0, 0))],
        out_specs=pl.BlockSpec((1, cout_p, s2), lambda i: (i, 0, 0)),
        compiler_params=_cparams(),
    )(z2, sc2, sh2)

    # drop padded channels and the padding ring -> NCHW output, exactly like PyTorch.
    return out_flat.reshape(n, cout_p, hp, wp)[:, :cout, 1:1 + ho, 1:1 + wo]


# ---------------------------------------------------------------------------
# Pure-JAX reference (independent path via lax.conv_general_dilated, all f32)
# ---------------------------------------------------------------------------
def _bn_relu_ref(z, g, b):
    mean = jnp.mean(z, axis=(0, 1, 2), keepdims=True)
    var = jnp.mean((z - mean) ** 2, axis=(0, 1, 2), keepdims=True)
    return jnp.maximum((z - mean) * lax.rsqrt(var + EPS) * g + b, 0.0)


def reference_forward(x_nchw, y_nchw, p):
    dn = ("NHWC", "HWIO", "NHWC")
    hi = lax.Precision.HIGHEST
    x = jnp.transpose(x_nchw, (0, 2, 3, 1)).astype(f32)
    y = jnp.transpose(y_nchw, (0, 2, 3, 1)).astype(f32)
    wt = jnp.transpose(p["wt"][:, :, ::-1, ::-1], (2, 3, 0, 1))
    t = lax.conv_general_dilated(x, wt, (1, 1), ((2, 2), (2, 2)),
                                 lhs_dilation=(2, 2), dimension_numbers=dn,
                                 precision=hi) + p["bt"]
    c = jnp.concatenate([t, y], axis=-1)
    w1 = jnp.transpose(p["w1"], (2, 3, 1, 0))
    z1 = lax.conv_general_dilated(c, w1, (1, 1), ((1, 1), (1, 1)),
                                  dimension_numbers=dn, precision=hi) + p["b1"]
    z1 = _bn_relu_ref(z1, p["g1"], p["be1"])
    w2 = jnp.transpose(p["w2"], (2, 3, 1, 0))
    z2 = lax.conv_general_dilated(z1, w2, (1, 1), ((1, 1), (1, 1)),
                                  dimension_numbers=dn, precision=hi) + p["b2"]
    z2 = _bn_relu_ref(z2, p["g2"], p["be2"])
    return jnp.transpose(z2, (0, 3, 1, 2))


# ---------------------------------------------------------------------------
if __name__ == "__main__":
    IN_C, OUT_C = 8, 4          # UNet skip: in_channels == 2 * out_channels
    N, H, W = 2, 16, 16         # x is the low-res feature map; y is the skip (2H x 2W)

    key = jax.random.PRNGKey(0)
    ks = jax.random.split(key, 12)
    params = {
        "wt": 0.1 * jax.random.normal(ks[0], (IN_C, OUT_C, 4, 4), jnp.float32),
        "bt": 0.1 * jax.random.normal(ks[1], (OUT_C,), jnp.float32),
        "w1": 0.1 * jax.random.normal(ks[2], (OUT_C, IN_C, 3, 3), jnp.float32),
        "b1": 0.1 * jax.random.normal(ks[3], (OUT_C,), jnp.float32),
        "g1": 1.0 + 0.1 * jax.random.normal(ks[4], (OUT_C,), jnp.float32),
        "be1": 0.1 * jax.random.normal(ks[5], (OUT_C,), jnp.float32),
        "w2": 0.1 * jax.random.normal(ks[6], (OUT_C, OUT_C, 3, 3), jnp.float32),
        "b2": 0.1 * jax.random.normal(ks[7], (OUT_C,), jnp.float32),
        "g2": 1.0 + 0.1 * jax.random.normal(ks[8], (OUT_C,), jnp.float32),
        "be2": 0.1 * jax.random.normal(ks[9], (OUT_C,), jnp.float32),
    }
    x = jax.random.normal(ks[10], (N, IN_C, H, W), jnp.float32)
    y = jax.random.normal(ks[11], (N, OUT_C, 2 * H, 2 * W), jnp.float32)

    out = jax.block_until_ready(jax.jit(upsample_block_forward)(x, y, params))
    assert out.shape == (N, OUT_C, 2 * H, 2 * W), out.shape

    ref = jax.block_until_ready(reference_forward(x, y, params))
    err = float(jnp.max(jnp.abs(out - ref)))
    # bf16 MXU operands + bf16 HBM intermediates (f32 accumulation / f32 BN math)
    # compared against an all-f32 HIGHEST-precision reference.
    assert err < 5e-2, err

    print("KERNEL_OK")
</pallas_src>

<mosaic_0001>
module attributes {stable_mosaic.version = 11 : i64} {
  func.func @transconv_kernel(%arg0: i32, %arg1: memref<1x8x362xbf16, #tpu.memory_space<vmem>>, %arg2: memref<32x72xbf16, #tpu.memory_space<vmem>>, %arg3: memref<32x1xf32, #tpu.memory_space<vmem>>, %arg4: memref<1x32x324xbf16, #tpu.memory_space<vmem>>) attributes {dimension_semantics = [#tpu.dimension_semantics<parallel>], iteration_bounds = array<i64: 2>, scalar_prefetch = 0 : i64, scratch_operands = 0 : i64, tpu.core_type = #tpu.core_type<tc>, window_params = [{transform_indices = @transform_0, window_bounds = array<i64: 1, 8, 362>}, {pipeline_mode = #tpu.pipeline_mode<synchronous>, transform_indices = @transform_1, window_bounds = array<i64: 32, 72>}, {pipeline_mode = #tpu.pipeline_mode<synchronous>, transform_indices = @transform_2, window_bounds = array<i64: 32, 1>}, {transform_indices = @transform_3, window_bounds = array<i64: 1, 32, 324>}]} {
    %c0 = arith.constant 0 : index
    %c0_0 = arith.constant 0 : index
    %c0_1 = arith.constant 0 : index
    %0 = vector.load %arg1[%c0, %c0_0, %c0_1] : memref<1x8x362xbf16, #tpu.memory_space<vmem>>, vector<1x8x362xbf16>
    %1 = vector.shape_cast %0 : vector<1x8x362xbf16> to vector<8x362xbf16>
    %2 = vector.extract_strided_slice %1 {offsets = [0, 0], sizes = [8, 324], strides = [1, 1]} : vector<8x362xbf16> to vector<8x324xbf16>
    %3 = vector.extract_strided_slice %1 {offsets = [0, 1], sizes = [8, 324], strides = [1, 1]} : vector<8x362xbf16> to vector<8x324xbf16>
    %4 = vector.extract_strided_slice %1 {offsets = [0, 2], sizes = [8, 324], strides = [1, 1]} : vector<8x362xbf16> to vector<8x324xbf16>
    %5 = vector.extract_strided_slice %1 {offsets = [0, 18], sizes = [8, 324], strides = [1, 1]} : vector<8x362xbf16> to vector<8x324xbf16>
    %6 = vector.extract_strided_slice %1 {offsets = [0, 19], sizes = [8, 324], strides = [1, 1]} : vector<8x362xbf16> to vector<8x324xbf16>
    %7 = vector.extract_strided_slice %1 {offsets = [0, 20], sizes = [8, 324], strides = [1, 1]} : vector<8x362xbf16> to vector<8x324xbf16>
    %8 = vector.extract_strided_slice %1 {offsets = [0, 36], sizes = [8, 324], strides = [1, 1]} : vector<8x362xbf16> to vector<8x324xbf16>
    %9 = vector.extract_strided_slice %1 {offsets = [0, 37], sizes = [8, 324], strides = [1, 1]} : vector<8x362xbf16> to vector<8x324xbf16>
    %10 = vector.extract_strided_slice %1 {offsets = [0, 38], sizes = [8, 324], strides = [1, 1]} : vector<8x362xbf16> to vector<8x324xbf16>
    %11 = tpu.concatenate %2, %3, %4, %5, %6, %7, %8, %9, %10 in 0 : vector<8x324xbf16>, vector<8x324xbf16>, vector<8x324xbf16>, vector<8x324xbf16>, vector<8x324xbf16>, vector<8x324xbf16>, vector<8x324xbf16>, vector<8x324xbf16>, vector<8x324xbf16> -> vector<72x324xbf16>
    %c0_2 = arith.constant 0 : index
    %c0_3 = arith.constant 0 : index
    %12 = vector.load %arg2[%c0_2, %c0_3] : memref<32x72xbf16, #tpu.memory_space<vmem>>, vector<32x72xbf16>
    %cst = arith.constant dense<0.000000e+00> : vector<32x324xf32>
    %13 = tpu.matmul %12, %11, %cst {dimension_numbers = #tpu.dot_dimension_numbers<[1], [0], [0], [1], [0, 0, 1, 1], [], []>} : vector<32x72xbf16>, vector<72x324xbf16>, vector<32x324xf32> -> vector<32x324xf32>
    %c0_4 = arith.constant 0 : index
    %c0_5 = arith.constant 0 : index
    %14 = vector.load %arg3[%c0_4, %c0_5] : memref<32x1xf32, #tpu.memory_space<vmem>>, vector<32x1xf32>
    %15 = vector.broadcast %14 : vector<32x1xf32> to vector<32x324xf32>
    %16 = arith.addf %13, %15 : vector<32x324xf32>
    %17 = arith.truncf %16 : vector<32x324xf32> to vector<32x324xbf16>
    %c0_6 = arith.constant 0 : index
    %c0_7 = arith.constant 0 : index
    %c0_8 = arith.constant 0 : index
    %18 = vector.load %arg4[%c0_6, %c0_7, %c0_8] : memref<1x32x324xbf16, #tpu.memory_space<vmem>>, vector<1x32x324xbf16>
    %19 = vector.shape_cast %18 : vector<1x32x324xbf16> to vector<32x324xbf16>
    %20 = vector.shape_cast %17 : vector<32x324xbf16> to vector<1x32x324xbf16>
    tpu.vector_store %arg4[%c0_6, %c0_7, %c0_8], %20 {strides = array<i32>} : memref<1x32x324xbf16, #tpu.memory_space<vmem>>, vector<1x32x324xbf16>,
    return
  }
  func.func @transform_0(%arg0: i32) -> (i32, i32, i32) {
    %c0_i32 = arith.constant 0 : i32
    %c0_i32_0 = arith.constant 0 : i32
    %c0_i32_1 = arith.constant 0 : i32
    return %arg0, %c0_i32, %c0_i32_0 : i32, i32, i32
  }
  func.func @transform_1(%arg0: i32) -> (i32, i32) {
    %c0_i32 = arith.constant 0 : i32
    %c0_i32_0 = arith.constant 0 : i32
    %c0_i32_1 = arith.constant 0 : i32
    return %c0_i32, %c0_i32_0 : i32, i32
  }
  func.func @transform_2(%arg0: i32) -> (i32, i32) {
    %c0_i32 = arith.constant 0 : i32
    %c0_i32_0 = arith.constant 0 : i32
    %c0_i32_1 = arith.constant 0 : i32
    return %c0_i32, %c0_i32_0 : i32, i32
  }
  func.func @transform_3(%arg0: i32) -> (i32, i32, i32) {
    %c0_i32 = arith.constant 0 : i32
    %c0_i32_0 = arith.constant 0 : i32
    %c0_i32_1 = arith.constant 0 : i32
    return %arg0, %c0_i32, %c0_i32_0 : i32, i32, i32
  }
}

module attributes {stable_mosaic.version = 11 : i64} {
  func.func @conv1_kernel(%arg0: i32, %arg1: memref<1x12x1226xbf16, #tpu.memory_space<vmem>>, %arg2: memref<8x108xbf16, #tpu.memory_space<vmem>>, %arg3: memref<8x1xf32, #tpu.memory_space<vmem>>, %arg4: memref<1x1226xf32, #tpu.memory_space<vmem>>, %arg5: memref<1x8x1226xbf16, #tpu.memory_space<vmem>>, %arg6: memref<1x8x2xf32, #tpu.memory_space<vmem>>) attributes {dimension_semantics = [#tpu.dimension_semantics<parallel>], iteration_bounds = array<i64: 2>, scalar_prefetch = 0 : i64, scratch_operands = 0 : i64, tpu.core_type = #tpu.core_type<tc>, window_params = [{transform_indices = @transform_0, window_bounds = array<i64: 1, 12, 1226>}, {pipeline_mode = #tpu.pipeline_mode<synchronous>, transform_indices = @transform_1, window_bounds = array<i64: 8, 108>}, {pipeline_mode = #tpu.pipeline_mode<synchronous>, transform_indices = @transform_2, window_bounds = array<i64: 8, 1>}, {pipeline_mode = #tpu.pipeline_mode<synchronous>, transform_indices = @transform_3, window_bounds = array<i64: 1, 1226>}, {transform_indices = @transform_4, window_bounds = array<i64: 1, 8, 1226>}, {transform_indices = @transform_5, window_bounds = array<i64: 1, 8, 2>}]} {
    %c0 = arith.constant 0 : index
    %c0_0 = arith.constant 0 : index
    %c0_1 = arith.constant 0 : index
    %0 = vector.load %arg1[%c0, %c0_0, %c0_1] : memref<1x12x1226xbf16, #tpu.memory_space<vmem>>, vector<1x12x1226xbf16>
    %1 = vector.shape_cast %0 : vector<1x12x1226xbf16> to vector<12x1226xbf16>
    %2 = vector.extract_strided_slice %1 {offsets = [0, 0], sizes = [12, 1156], strides = [1, 1]} : vector<12x1226xbf16> to vector<12x1156xbf16>
    %3 = vector.extract_strided_slice %1 {offsets = [0, 1], sizes = [12, 1156], strides = [1, 1]} : vector<12x1226xbf16> to vector<12x1156xbf16>
    %4 = vector.extract_strided_slice %1 {offsets = [0, 2], sizes = [12, 1156], strides = [1, 1]} : vector<12x1226xbf16> to vector<12x1156xbf16>
    %5 = vector.extract_strided_slice %1 {offsets = [0, 34], sizes = [12, 1156], strides = [1, 1]} : vector<12x1226xbf16> to vector<12x1156xbf16>
    %6 = vector.extract_strided_slice %1 {offsets = [0, 35], sizes = [12, 1156], strides = [1, 1]} : vector<12x1226xbf16> to vector<12x1156xbf16>
    %7 = vector.extract_strided_slice %1 {offsets = [0, 36], sizes = [12, 1156], strides = [1, 1]} : vector<12x1226xbf16> to vector<12x1156xbf16>
    %8 = vector.extract_strided_slice %1 {offsets = [0, 68], sizes = [12, 1156], strides = [1, 1]} : vector<12x1226xbf16> to vector<12x1156xbf16>
    %9 = vector.extract_strided_slice %1 {offsets = [0, 69], sizes = [12, 1156], strides = [1, 1]} : vector<12x1226xbf16> to vector<12x1156xbf16>
    %10 = vector.extract_strided_slice %1 {offsets = [0, 70], sizes = [12, 1156], strides = [1, 1]} : vector<12x1226xbf16> to vector<12x1156xbf16>
    %11 = tpu.concatenate %2, %3, %4, %5, %6, %7, %8, %9, %10 in 0 : vector<12x1156xbf16>, vector<12x1156xbf16>, vector<12x1156xbf16>, vector<12x1156xbf16>, vector<12x1156xbf16>, vector<12x1156xbf16>, vector<12x1156xbf16>, vector<12x1156xbf16>, vector<12x1156xbf16> -> vector<108x1156xbf16>
    %c0_2 = arith.constant 0 : index
    %c0_3 = arith.constant 0 : index
    %12 = vector.load %arg2[%c0_2, %c0_3] : memref<8x108xbf16, #tpu.memory_space<vmem>>, vector<8x108xbf16>
    %cst = arith.constant dense<0.000000e+00> : vector<8x1156xf32>
    %13 = tpu.matmul %12, %11, %cst {dimension_numbers = #tpu.dot_dimension_numbers<[1], [0], [0], [1], [0, 0, 1, 1], [], []>} : vector<8x108xbf16>, vector<108x1156xbf16>, vector<8x1156xf32> -> vector<8x1156xf32>
    %c0_4 = arith.constant 0 : index
    %c0_5 = arith.constant 0 : index
    %14 = vector.load %arg3[%c0_4, %c0_5] : memref<8x1xf32, #tpu.memory_space<vmem>>, vector<8x1xf32>
    %15 = vector.broadcast %14 : vector<8x1xf32> to vector<8x1156xf32>
    %16 = arith.addf %13, %15 : vector<8x1156xf32>
    %17 = arith.truncf %16 : vector<8x1156xf32> to vector<8x1156xbf16>
    %c0_6 = arith.constant 0 : index
    %c0_7 = arith.constant 0 : index
    %c35 = arith.constant 35 : index
    %18 = vector.load %arg5[%c0_6, %c0_7, %c35] : memref<1x8x1226xbf16, #tpu.memory_space<vmem>>, vector<1x8x1156xbf16>
    %19 = vector.shape_cast %18 : vector<1x8x1156xbf16> to vector<8x1156xbf16>
    %20 = vector.shape_cast %17 : vector<8x1156xbf16> to vector<1x8x1156xbf16>
    tpu.vector_store %arg5[%c0_6, %c0_7, %c35], %20 {strides = array<i32>} : memref<1x8x1226xbf16, #tpu.memory_space<vmem>>, vector<1x8x1156xbf16>,
    %cst_8 = arith.constant 0.000000e+00 : bf16
    %21 = vector.broadcast %cst_8 : bf16 to vector<8x35xbf16>
    %c0_9 = arith.constant 0 : index
    %c0_10 = arith.constant 0 : index
    %c0_11 = arith.constant 0 : index
    %22 = vector.load %arg5[%c0_9, %c0_10, %c0_11] : memref<1x8x1226xbf16, #tpu.memory_space<vmem>>, vector<1x8x35xbf16>
    %23 = vector.shape_cast %22 : vector<1x8x35xbf16> to vector<8x35xbf16>
    %24 = vector.shape_cast %21 : vector<8x35xbf16> to vector<1x8x35xbf16>
    tpu.vector_store %arg5[%c0_9, %c0_10, %c0_11], %24 {strides = array<i32>} : memref<1x8x1226xbf16, #tpu.memory_space<vmem>>, vector<1x8x35xbf16>,
    %cst_12 = arith.constant 0.000000e+00 : bf16
    %25 = vector.broadcast %cst_12 : bf16 to vector<8x35xbf16>
    %c0_13 = arith.constant 0 : index
    %c0_14 = arith.constant 0 : index
    %c1191 = arith.constant 1191 : index
    %26 = vector.load %arg5[%c0_13, %c0_14, %c1191] : memref<1x8x1226xbf16, #tpu.memory_space<vmem>>, vector<1x8x35xbf16>
    %27 = vector.shape_cast %26 : vector<1x8x35xbf16> to vector<8x35xbf16>
    %28 = vector.shape_cast %25 : vector<8x35xbf16> to vector<1x8x35xbf16>
    tpu.vector_store %arg5[%c0_13, %c0_14, %c1191], %28 {strides = array<i32>} : memref<1x8x1226xbf16, #tpu.memory_space<vmem>>, vector<1x8x35xbf16>,
    %c0_15 = arith.constant 0 : index
    %c0_16 = arith.constant 0 : index
    %29 = vector.load %arg4[%c0_15, %c0_16] : memref<1x1226xf32, #tpu.memory_space<vmem>>, vector<1x1226xf32>
    %30 = vector.extract_strided_slice %29 {offsets = [0, 35], sizes = [1, 1156], strides = [1, 1]} : vector<1x1226xf32> to vector<1x1156xf32>
    %31 = vector.broadcast %30 : vector<1x1156xf32> to vector<8x1156xf32>
    %32 = arith.mulf %16, %31 : vector<8x1156xf32>
    %cst_17 = arith.constant dense<0.000000e+00> : vector<8xf32>
    %33 = vector.multi_reduction <add>, %32, %cst_17 [1] : vector<8x1156xf32> to vector<8xf32>
    %34 = vector.shape_cast %33 : vector<8xf32> to vector<8x1xf32>
    %35 = arith.mulf %32, %16 : vector<8x1156xf32>
    %cst_18 = arith.constant dense<0.000000e+00> : vector<8xf32>
    %36 = vector.multi_reduction <add>, %35, %cst_18 [1] : vector<8x1156xf32> to vector<8xf32>
    %37 = vector.shape_cast %36 : vector<8xf32> to vector<8x1xf32>
    %38 = tpu.concatenate %34, %37 in 1 : vector<8x1xf32>, vector<8x1xf32> -> vector<8x2xf32>
    %c0_19 = arith.constant 0 : index
    %c0_20 = arith.constant 0 : index
    %c0_21 = arith.constant 0 : index
    %39 = vector.load %arg6[%c0_19, %c0_20, %c0_21] : memref<1x8x2xf32, #tpu.memory_space<vmem>>, vector<1x8x2xf32>
    %40 = vector.shape_cast %39 : vector<1x8x2xf32> to vector<8x2xf32>
    %41 = vector.shape_cast %38 : vector<8x2xf32> to vector<1x8x2xf32>
    tpu.vector_store %arg6[%c0_19, %c0_20, %c0_21], %41 {strides = array<i32>} : memref<1x8x2xf32, #tpu.memory_space<vmem>>, vector<1x8x2xf32>,
    return
  }
  func.func @transform_0(%arg0: i32) -> (i32, i32, i32) {
    %c0_i32 = arith.constant 0 : i32
    %c0_i32_0 = arith.constant 0 : i32
    %c0_i32_1 = arith.constant 0 : i32
    return %arg0, %c0_i32, %c0_i32_0 : i32, i32, i32
  }
  func.func @transform_1(%arg0: i32) -> (i32, i32) {
    %c0_i32 = arith.constant 0 : i32
    %c0_i32_0 = arith.constant 0 : i32
    %c0_i32_1 = arith.constant 0 : i32
    return %c0_i32, %c0_i32_0 : i32, i32
  }
  func.func @transform_2(%arg0: i32) -> (i32, i32) {
    %c0_i32 = arith.constant 0 : i32
    %c0_i32_0 = arith.constant 0 : i32
    %c0_i32_1 = arith.constant 0 : i32
    return %c0_i32, %c0_i32_0 : i32, i32
  }
  func.func @transform_3(%arg0: i32) -> (i32, i32) {
    %c0_i32 = arith.constant 0 : i32
    %c0_i32_0 = arith.constant 0 : i32
    %c0_i32_1 = arith.constant 0 : i32
    return %c0_i32, %c0_i32_0 : i32, i32
  }
  func.func @transform_4(%arg0: i32) -> (i32, i32, i32) {
    %c0_i32 = arith.constant 0 : i32
    %c0_i32_0 = arith.constant 0 : i32
    %c0_i32_1 = arith.constant 0 : i32
    return %arg0, %c0_i32, %c0_i32_0 : i32, i32, i32
  }
  func.func @transform_5(%arg0: i32) -> (i32, i32, i32) {
    %c0_i32 = arith.constant 0 : i32
    %c0_i32_0 = arith.constant 0 : i32
    %c0_i32_1 = arith.constant 0 : i32
    return %arg0, %c0_i32, %c0_i32_0 : i32, i32, i32
  }
}

module attributes {stable_mosaic.version = 11 : i64} {
  func.func @bn1_conv2_kernel(%arg0: i32, %arg1: memref<1x8x1226xbf16, #tpu.memory_space<vmem>>, %arg2: memref<8x1xf32, #tpu.memory_space<vmem>>, %arg3: memref<8x1xf32, #tpu.memory_space<vmem>>, %arg4: memref<8x72xbf16, #tpu.memory_space<vmem>>, %arg5: memref<8x1xf32, #tpu.memory_space<vmem>>, %arg6: memref<1x1226xf32, #tpu.memory_space<vmem>>, %arg7: memref<1x8x1156xbf16, #tpu.memory_space<vmem>>, %arg8: memref<1x8x2xf32, #tpu.memory_space<vmem>>) attributes {dimension_semantics = [#tpu.dimension_semantics<parallel>], iteration_bounds = array<i64: 2>, scalar_prefetch = 0 : i64, scratch_operands = 0 : i64, tpu.core_type = #tpu.core_type<tc>, window_params = [{transform_indices = @transform_0, window_bounds = array<i64: 1, 8, 1226>}, {pipeline_mode = #tpu.pipeline_mode<synchronous>, transform_indices = @transform_1, window_bounds = array<i64: 8, 1>}, {pipeline_mode = #tpu.pipeline_mode<synchronous>, transform_indices = @transform_2, window_bounds = array<i64: 8, 1>}, {pipeline_mode = #tpu.pipeline_mode<synchronous>, transform_indices = @transform_3, window_bounds = array<i64: 8, 72>}, {pipeline_mode = #tpu.pipeline_mode<synchronous>, transform_indices = @transform_4, window_bounds = array<i64: 8, 1>}, {pipeline_mode = #tpu.pipeline_mode<synchronous>, transform_indices = @transform_5, window_bounds = array<i64: 1, 1226>}, {transform_indices = @transform_6, window_bounds = array<i64: 1, 8, 1156>}, {transform_indices = @transform_7, window_bounds = array<i64: 1, 8, 2>}]} {
    %c0 = arith.constant 0 : index
    %c0_0 = arith.constant 0 : index
    %c0_1 = arith.constant 0 : index
    %0 = vector.load %arg1[%c0, %c0_0, %c0_1] : memref<1x8x1226xbf16, #tpu.memory_space<vmem>>, vector<1x8x1226xbf16>
    %1 = vector.shape_cast %0 : vector<1x8x1226xbf16> to vector<8x1226xbf16>
    %2 = arith.extf %1 : vector<8x1226xbf16> to vector<8x1226xf32>
    %c0_2 = arith.constant 0 : index
    %c0_3 = arith.constant 0 : index
    %3 = vector.load %arg6[%c0_2, %c0_3] : memref<1x1226xf32, #tpu.memory_space<vmem>>, vector<1x1226xf32>
    %c0_4 = arith.constant 0 : index
    %c0_5 = arith.constant 0 : index
    %4 = vector.load %arg2[%c0_4, %c0_5] : memref<8x1xf32, #tpu.memory_space<vmem>>, vector<8x1xf32>
    %5 = vector.broadcast %4 : vector<8x1xf32> to vector<8x1226xf32>
    %6 = arith.mulf %2, %5 : vector<8x1226xf32>
    %c0_6 = arith.constant 0 : index
    %c0_7 = arith.constant 0 : index
    %7 = vector.load %arg3[%c0_6, %c0_7] : memref<8x1xf32, #tpu.memory_space<vmem>>, vector<8x1xf32>
    %8 = vector.broadcast %7 : vector<8x1xf32> to vector<8x1226xf32>
    %9 = arith.addf %6, %8 : vector<8x1226xf32>
    %cst = arith.constant 0.000000e+00 : f32
    %10 = vector.broadcast %cst : f32 to vector<8x1226xf32>
    %11 = arith.maximumf %9, %10 : vector<8x1226xf32>
    %12 = vector.broadcast %3 : vector<1x1226xf32> to vector<8x1226xf32>
    %13 = arith.mulf %11, %12 : vector<8x1226xf32>
    %14 = arith.truncf %13 : vector<8x1226xf32> to vector<8x1226xbf16>
    %15 = vector.extract_strided_slice %14 {offsets = [0, 0], sizes = [8, 1156], strides = [1, 1]} : vector<8x1226xbf16> to vector<8x1156xbf16>
    %16 = vector.extract_strided_slice %14 {offsets = [0, 1], sizes = [8, 1156], strides = [1, 1]} : vector<8x1226xbf16> to vector<8x1156xbf16>
    %17 = vector.extract_strided_slice %14 {offsets = [0, 2], sizes = [8, 1156], strides = [1, 1]} : vector<8x1226xbf16> to vector<8x1156xbf16>
    %18 = vector.extract_strided_slice %14 {offsets = [0, 34], sizes = [8, 1156], strides = [1, 1]} : vector<8x1226xbf16> to vector<8x1156xbf16>
    %19 = vector.extract_strided_slice %14 {offsets = [0, 35], sizes = [8, 1156], strides = [1, 1]} : vector<8x1226xbf16> to vector<8x1156xbf16>
    %20 = vector.extract_strided_slice %14 {offsets = [0, 36], sizes = [8, 1156], strides = [1, 1]} : vector<8x1226xbf16> to vector<8x1156xbf16>
    %21 = vector.extract_strided_slice %14 {offsets = [0, 68], sizes = [8, 1156], strides = [1, 1]} : vector<8x1226xbf16> to vector<8x1156xbf16>
    %22 = vector.extract_strided_slice %14 {offsets = [0, 69], sizes = [8, 1156], strides = [1, 1]} : vector<8x1226xbf16> to vector<8x1156xbf16>
    %23 = vector.extract_strided_slice %14 {offsets = [0, 70], sizes = [8, 1156], strides = [1, 1]} : vector<8x1226xbf16> to vector<8x1156xbf16>
    %24 = tpu.concatenate %15, %16, %17, %18, %19, %20, %21, %22, %23 in 0 : vector<8x1156xbf16>, vector<8x1156xbf16>, vector<8x1156xbf16>, vector<8x1156xbf16>, vector<8x1156xbf16>, vector<8x1156xbf16>, vector<8x1156xbf16>, vector<8x1156xbf16>, vector<8x1156xbf16> -> vector<72x1156xbf16>
    %c0_8 = arith.constant 0 : index
    %c0_9 = arith.constant 0 : index
    %25 = vector.load %arg4[%c0_8, %c0_9] : memref<8x72xbf16, #tpu.memory_space<vmem>>, vector<8x72xbf16>
    %cst_10 = arith.constant dense<0.000000e+00> : vector<8x1156xf32>
    %26 = tpu.matmul %25, %24, %cst_10 {dimension_numbers = #tpu.dot_dimension_numbers<[1], [0], [0], [1], [0, 0, 1, 1], [], []>} : vector<8x72xbf16>, vector<72x1156xbf16>, vector<8x1156xf32> -> vector<8x1156xf32>
    %c0_11 = arith.constant 0 : index
    %c0_12 = arith.constant 0 : index
    %27 = vector.load %arg5[%c0_11, %c0_12] : memref<8x1xf32, #tpu.memory_space<vmem>>, vector<8x1xf32>
    %28 = vector.broadcast %27 : vector<8x1xf32> to vector<8x1156xf32>
    %29 = arith.addf %26, %28 : vector<8x1156xf32>
    %30 = arith.truncf %29 : vector<8x1156xf32> to vector<8x1156xbf16>
    %c0_13 = arith.constant 0 : index
    %c0_14 = arith.constant 0 : index
    %c0_15 = arith.constant 0 : index
    %31 = vector.load %arg7[%c0_13, %c0_14, %c0_15] : memref<1x8x1156xbf16, #tpu.memory_space<vmem>>, vector<1x8x1156xbf16>
    %32 = vector.shape_cast %31 : vector<1x8x1156xbf16> to vector<8x1156xbf16>
    %33 = vector.shape_cast %30 : vector<8x1156xbf16> to vector<1x8x1156xbf16>
    tpu.vector_store %arg7[%c0_13, %c0_14, %c0_15], %33 {strides = array<i32>} : memref<1x8x1156xbf16, #tpu.memory_space<vmem>>, vector<1x8x1156xbf16>,
    %34 = vector.extract_strided_slice %3 {offsets = [0, 35], sizes = [1, 1156], strides = [1, 1]} : vector<1x1226xf32> to vector<1x1156xf32>
    %35 = vector.broadcast %34 : vector<1x1156xf32> to vector<8x1156xf32>
    %36 = arith.mulf %29, %35 : vector<8x1156xf32>
    %cst_16 = arith.constant dense<0.000000e+00> : vector<8xf32>
    %37 = vector.multi_reduction <add>, %36, %cst_16 [1] : vector<8x1156xf32> to vector<8xf32>
    %38 = vector.shape_cast %37 : vector<8xf32> to vector<8x1xf32>
    %39 = arith.mulf %36, %29 : vector<8x1156xf32>
    %cst_17 = arith.constant dense<0.000000e+00> : vector<8xf32>
    %40 = vector.multi_reduction <add>, %39, %cst_17 [1] : vector<8x1156xf32> to vector<8xf32>
    %41 = vector.shape_cast %40 : vector<8xf32> to vector<8x1xf32>
    %42 = tpu.concatenate %38, %41 in 1 : vector<8x1xf32>, vector<8x1xf32> -> vector<8x2xf32>
    %c0_18 = arith.constant 0 : index
    %c0_19 = arith.constant 0 : index
    %c0_20 = arith.constant 0 : index
    %43 = vector.load %arg8[%c0_18, %c0_19, %c0_20] : memref<1x8x2xf32, #tpu.memory_space<vmem>>, vector<1x8x2xf32>
    %44 = vector.shape_cast %43 : vector<1x8x2xf32> to vector<8x2xf32>
    %45 = vector.shape_cast %42 : vector<8x2xf32> to vector<1x8x2xf32>
    tpu.vector_store %arg8[%c0_18, %c0_19, %c0_20], %45 {strides = array<i32>} : memref<1x8x2xf32, #tpu.memory_space<vmem>>, vector<1x8x2xf32>,
    return
  }
  func.func @transform_0(%arg0: i32) -> (i32, i32, i32) {
    %c0_i32 = arith.constant 0 : i32
    %c0_i32_0 = arith.constant 0 : i32
    %c0_i32_1 = arith.constant 0 : i32
    return %arg0, %c0_i32, %c0_i32_0 : i32, i32, i32
  }
  func.func @transform_1(%arg0: i32) -> (i32, i32) {
    %c0_i32 = arith.constant 0 : i32
    %c0_i32_0 = arith.constant 0 : i32
    %c0_i32_1 = arith.constant 0 : i32
    return %c0_i32, %c0_i32_0 : i32, i32
  }
  func.func @transform_2(%arg0: i32) -> (i32, i32) {
    %c0_i32 = arith.constant 0 : i32
    %c0_i32_0 = arith.constant 0 : i32
    %c0_i32_1 = arith.constant 0 : i32
    return %c0_i32, %c0_i32_0 : i32, i32
  }
  func.func @transform_3(%arg0: i32) -> (i32, i32) {
    %c0_i32 = arith.constant 0 : i32
    %c0_i32_0 = arith.constant 0 : i32
    %c0_i32_1 = arith.constant 0 : i32
    return %c0_i32, %c0_i32_0 : i32, i32
  }
  func.func @transform_4(%arg0: i32) -> (i32, i32) {
    %c0_i32 = arith.constant 0 : i32
    %c0_i32_0 = arith.constant 0 : i32
    %c0_i32_1 = arith.constant 0 : i32
    return %c0_i32, %c0_i32_0 : i32, i32
  }
  func.func @transform_5(%arg0: i32) -> (i32, i32) {
    %c0_i32 = arith.constant 0 : i32
    %c0_i32_0 = arith.constant 0 : i32
    %c0_i32_1 = arith.constant 0 : i32
    return %c0_i32, %c0_i32_0 : i32, i32
  }
  func.func @transform_6(%arg0: i32) -> (i32, i32, i32) {
    %c0_i32 = arith.constant 0 : i32
    %c0_i32_0 = arith.constant 0 : i32
    %c0_i32_1 = arith.constant 0 : i32
    return %arg0, %c0_i32, %c0_i32_0 : i32, i32, i32
  }
  func.func @transform_7(%arg0: i32) -> (i32, i32, i32) {
    %c0_i32 = arith.constant 0 : i32
    %c0_i32_0 = arith.constant 0 : i32
    %c0_i32_1 = arith.constant 0 : i32
    return %arg0, %c0_i32, %c0_i32_0 : i32, i32, i32
  }
}

module attributes {stable_mosaic.version = 11 : i64} {
  func.func @bn2_relu_kernel(%arg0: i32, %arg1: memref<1x8x1156xbf16, #tpu.memory_space<vmem>>, %arg2: memref<8x1xf32, #tpu.memory_space<vmem>>, %arg3: memref<8x1xf32, #tpu.memory_space<vmem>>, %arg4: memref<1x8x1156xf32, #tpu.memory_space<vmem>>) attributes {dimension_semantics = [#tpu.dimension_semantics<parallel>], iteration_bounds = array<i64: 2>, scalar_prefetch = 0 : i64, scratch_operands = 0 : i64, tpu.core_type = #tpu.core_type<tc>, window_params = [{transform_indices = @transform_0, window_bounds = array<i64: 1, 8, 1156>}, {pipeline_mode = #tpu.pipeline_mode<synchronous>, transform_indices = @transform_1, window_bounds = array<i64: 8, 1>}, {pipeline_mode = #tpu.pipeline_mode<synchronous>, transform_indices = @transform_2, window_bounds = array<i64: 8, 1>}, {transform_indices = @transform_3, window_bounds = array<i64: 1, 8, 1156>}]} {
    %c0 = arith.constant 0 : index
    %c0_0 = arith.constant 0 : index
    %c0_1 = arith.constant 0 : index
    %0 = vector.load %arg1[%c0, %c0_0, %c0_1] : memref<1x8x1156xbf16, #tpu.memory_space<vmem>>, vector<1x8x1156xbf16>
    %1 = vector.shape_cast %0 : vector<1x8x1156xbf16> to vector<8x1156xbf16>
    %2 = arith.extf %1 : vector<8x1156xbf16> to vector<8x1156xf32>
    %c0_2 = arith.constant 0 : index
    %c0_3 = arith.constant 0 : index
    %3 = vector.load %arg2[%c0_2, %c0_3] : memref<8x1xf32, #tpu.memory_space<vmem>>, vector<8x1xf32>
    %4 = vector.broadcast %3 : vector<8x1xf32> to vector<8x1156xf32>
    %5 = arith.mulf %2, %4 : vector<8x1156xf32>
    %c0_4 = arith.constant 0 : index
    %c0_5 = arith.constant 0 : index
    %6 = vector.load %arg3[%c0_4, %c0_5] : memref<8x1xf32, #tpu.memory_space<vmem>>, vector<8x1xf32>
    %7 = vector.broadcast %6 : vector<8x1xf32> to vector<8x1156xf32>
    %8 = arith.addf %5, %7 : vector<8x1156xf32>
    %cst = arith.constant 0.000000e+00 : f32
    %9 = vector.broadcast %cst : f32 to vector<8x1156xf32>
    %10 = arith.maximumf %8, %9 : vector<8x1156xf32>
    %c0_6 = arith.constant 0 : index
    %c0_7 = arith.constant 0 : index
    %c0_8 = arith.constant 0 : index
    %11 = vector.load %arg4[%c0_6, %c0_7, %c0_8] : memref<1x8x1156xf32, #tpu.memory_space<vmem>>, vector<1x8x1156xf32>
    %12 = vector.shape_cast %11 : vector<1x8x1156xf32> to vector<8x1156xf32>
    %13 = vector.shape_cast %10 : vector<8x1156xf32> to vector<1x8x1156xf32>
    tpu.vector_store %arg4[%c0_6, %c0_7, %c0_8], %13 {strides = array<i32>} : memref<1x8x1156xf32, #tpu.memory_space<vmem>>, vector<1x8x1156xf32>,
    return
  }
  func.func @transform_0(%arg0: i32) -> (i32, i32, i32) {
    %c0_i32 = arith.constant 0 : i32
    %c0_i32_0 = arith.constant 0 : i32
    %c0_i32_1 = arith.constant 0 : i32
    return %arg0, %c0_i32, %c0_i32_0 : i32, i32, i32
  }
  func.func @transform_1(%arg0: i32) -> (i32, i32) {
    %c0_i32 = arith.constant 0 : i32
    %c0_i32_0 = arith.constant 0 : i32
    %c0_i32_1 = arith.constant 0 : i32
    return %c0_i32, %c0_i32_0 : i32, i32
  }
  func.func @transform_2(%arg0: i32) -> (i32, i32) {
    %c0_i32 = arith.constant 0 : i32
    %c0_i32_0 = arith.constant 0 : i32
    %c0_i32_1 = arith.constant 0 : i32
    return %c0_i32, %c0_i32_0 : i32, i32
  }
  func.func @transform_3(%arg0: i32) -> (i32, i32, i32) {
    %c0_i32 = arith.constant 0 : i32
    %c0_i32_0 = arith.constant 0 : i32
    %c0_i32_1 = arith.constant 0 : i32
    return %arg0, %c0_i32, %c0_i32_0 : i32, i32, i32
  }
}

</mosaic_0001>

<llo_original>
// kernel: upsample_block_forward.4
$region0: #{upsample_block_forward.4}
  #allocation0 [shape = 'u32[]', space=smem, size = 0x4, offset = 0x4, fixed_abs, tag = 'smem constant byte address 0x4 - core index']
  #allocation1 [shape = 'u32[144,128]{1,0:T(1,128)}', space=vmem, size = 0x12000, scoped, tag = 'internal scratch']
  %s0 = inlined_call_operand.vmem [shape: bf16[2,8,362], index: 0, kind: input, shape index: {}]
  %s1 = inlined_call_operand.vmem [shape: bf16[32,72], index: 1, kind: input, shape index: {}]
  %s2 = inlined_call_operand.vmem [shape: f32[32,1], index: 2, kind: input, shape index: {}]
  %s3 = inlined_call_operand.vmem [shape: bf16[2,32,324], index: 3, kind: output, shape index: {}]
  %s4 = sld [smem:[#allocation0]]
  $region45: #{upsample_block_forward.4} parent=0
    _
  %s6 = ssub.s32 1, %s4
  %s7 = scalar_select 0, %s6, %s4
  loop: start=0, step=1, limit=4
  $region2: #{upsample_block_forward.4} parent=0 // loop_pre_header
    _
  $region3: #{upsample_block_forward.4} parent=0 // loop_header
    %s9 = sphi 0, %s13
    %p10 = scmp.ge.s32.totalorder %s9, 4
    %s19 = sphi 0, %s21
    %s22 = sphi 0, %s19
    %s23 = sphi 0, %s22
    %s39 = sphi 0, %s23
    %s43 = sphi 0, %s43
    %s45 = sphi 0, %s43
    %s46 = sphi 0, %s45
    %s60 = sphi 0, %s46
    %s64 = sphi 0, %s64
    %s66 = sphi 0, %s64
    %s67 = sphi 0, %s66
    %s81 = sphi 0, %s67
    %s87 = sphi 0, %s89
    %s90 = sphi 0, %s87
    %s91 = sphi 0, %s90
    %s107 = sphi 0, %s91
  $region4: #{upsample_block_forward.4} parent=0 // loop_header_branch
    %12 = sbr.rel (%p10) target = $region8
  $region5: #{upsample_block_forward.4} parent=0 // loop_body
    %s14 = ssub.s32 %s9, 1
    %s15 = ssub.s32 %s9, 2
    %s16 = sadd.s32 %s9, 1
    %s17 = ssub.s32 %s9, %s16
    %p18 = scmp.eq.s32.totalorder %s17, 0
    %s20 = sadd.s32 %s19, 1
    %s21 = scalar_select %p18, %s19, %s20
    %p24 = pneg %p18
    %p25 = scmp.eq.s32.totalorder %s9, 1
    %p26 = por %p24, %p25
    %p27 = scmp.ne.s32.totalorder %s19, %s22
    %p28 = scmp.eq.s32.totalorder %s9, 0
    %p29 = por %p27, %p28
    %p30 = scmp.ne.s32.totalorder %s19, %s22
    %p31 = scmp.eq.s32.totalorder %s14, 1
    %p32 = por %p30, %p31
    %p33 = scmp.ne.s32.totalorder %s22, %s23
    %p34 = scmp.eq.s32.totalorder %s14, 0
    %p35 = por %p33, %p34
    %p36 = scmp.ne.s32.totalorder %s22, %s23
    %p37 = scmp.eq.s32.totalorder %s15, 1
    %p38 = por %p36, %p37
    %p40 = scmp.ne.s32.totalorder %s23, %s39
    %p41 = scmp.eq.s32.totalorder %s15, 0
    %p42 = por %p40, %p41
    %s44 = sadd.s32 %s43, 1
    %p47 = scmp.eq.s32.totalorder %s9, 1
    %p48 = scmp.ne.s32.totalorder %s43, %s45
    %p49 = scmp.eq.s32.totalorder %s9, 0
    %p50 = por %p48, %p49
    %p51 = scmp.ne.s32.totalorder %s43, %s45
    %p52 = scmp.eq.s32.totalorder %s14, 1
    %p53 = por %p51, %p52
    %p54 = scmp.ne.s32.totalorder %s45, %s46
    %p55 = scmp.eq.s32.totalorder %s14, 0
    %p56 = por %p54, %p55
    %p57 = scmp.ne.s32.totalorder %s45, %s46
    %p58 = scmp.eq.s32.totalorder %s15, 1
    %p59 = por %p57, %p58
    %p61 = scmp.ne.s32.totalorder %s46, %s60
    %p62 = scmp.eq.s32.totalorder %s15, 0
    %p63 = por %p61, %p62
    %s65 = sadd.s32 %s64, 1
    %p68 = scmp.eq.s32.totalorder %s9, 1
    %p69 = scmp.ne.s32.totalorder %s64, %s66
    %p70 = scmp.eq.s32.totalorder %s9, 0
    %p71 = por %p69, %p70
    %p72 = scmp.ne.s32.totalorder %s64, %s66
    %p73 = scmp.eq.s32.totalorder %s14, 1
    %p74 = por %p72, %p73
    %p75 = scmp.ne.s32.totalorder %s66, %s67
    %p76 = scmp.eq.s32.totalorder %s14, 0
    %p77 = por %p75, %p76
    %p78 = scmp.ne.s32.totalorder %s66, %s67
    %p79 = scmp.eq.s32.totalorder %s15, 1
    %p80 = por %p78, %p79
    %p82 = scmp.ne.s32.totalorder %s67, %s81
    %p83 = scmp.eq.s32.totalorder %s15, 0
    %p84 = por %p82, %p83
    %s85 = ssub.s32 %s9, %s16
    %p86 = scmp.eq.s32.totalorder %s85, 0
    %s88 = sadd.s32 %s87, 1
    %s89 = scalar_select %p86, %s87, %s88
    %p92 = pneg %p86
    %p93 = scmp.eq.s32.totalorder %s9, 1
    %p94 = por %p92, %p93
    %p95 = scmp.ne.s32.totalorder %s87, %s90
    %p96 = scmp.eq.s32.totalorder %s9, 0
    %p97 = por %p95, %p96
    %p98 = scmp.ne.s32.totalorder %s87, %s90
    %p99 = scmp.eq.s32.totalorder %s14, 1
    %p100 = por %p98, %p99
    %p101 = scmp.ne.s32.totalorder %s90, %s91
    %p102 = scmp.eq.s32.totalorder %s14, 0
    %p103 = por %p101, %p102
    %p104 = scmp.ne.s32.totalorder %s90, %s91
    %p105 = scmp.eq.s32.totalorder %s15, 1
    %p106 = por %p104, %p105
    %p108 = scmp.ne.s32.totalorder %s91, %s107
    %p109 = scmp.eq.s32.totalorder %s15, 0
    %p110 = por %p108, %p109
    %p111 = scmp.le.s32.totalorder 1, %s9
    %p112 = scmp.lt.s32.totalorder %s9, 3
    %p113 = pnand %p111, %p112
    %p114 = pneg %p113
    // Predicated region
    $region9: #{upsample_block_forward.4} parent=5 // pred_check
      _
    $region10: #{upsample_block_forward.4} parent=5 // pred_check_branch
      %116 = sbr.rel (%p113) target = $region12
    $region11: #{upsample_block_forward.4} parent=5 // pred_region
      %s117 = ssub.s32 %s9, 1
      // Predicated region
      $region13: #{upsample_block_forward.4} parent=11 // pred_check
        %p118 = pneg %p56
      $region14: #{upsample_block_forward.4} parent=11 // pred_check_branch
        %120 = sbr.rel (%p118) target = $region16
      $region15: #{upsample_block_forward.4} parent=11 // pred_region
        _
      $region16: #{upsample_block_forward.4} parent=11 // pred_fallthru
        _
      // Predicated region
      $region17: #{upsample_block_forward.4} parent=11 // pred_check
        %p121 = pneg %p77
      $region18: #{upsample_block_forward.4} parent=11 // pred_check_branch
        %123 = sbr.rel (%p121) target = $region20
      $region19: #{upsample_block_forward.4} parent=11 // pred_region
        _
      $region20: #{upsample_block_forward.4} parent=11 // pred_fallthru
        _
    $region12: #{upsample_block_forward.4} parent=5 // pred_fallthru
      _
    %p124 = scmp.lt.s32.totalorder %s9, 2
    // Predicated region
    $region21: #{upsample_block_forward.4} parent=5 // pred_check
      %p125 = pneg %p124
    $region22: #{upsample_block_forward.4} parent=5 // pred_check_branch
      %127 = sbr.rel (%p125) target = $region24
    $region23: #{upsample_block_forward.4} parent=5 // pred_region
      // Predicated region
      $region25: #{upsample_block_forward.4} parent=23 // pred_check
        %p128 = pneg %p29
      $region26: #{upsample_block_forward.4} parent=23 // pred_check_branch
        %130 = sbr.rel (%p128) target = $region28
      $region27: #{upsample_block_forward.4} parent=23 // pred_region
        %p131 = scmp.lt.s32.totalorder %s9, 1
        %s132 = scalar_select %p131, %s9, 1
        %s133 = smul.addr %s132, 3
        %s134 = smul.addr %s133, 4
        %s135 = scalar_lea.vmem %s0, %s134
      $region28: #{upsample_block_forward.4} parent=23 // pred_fallthru
        _
    $region24: #{upsample_block_forward.4} parent=5 // pred_fallthru
      _
    %p136 = scmp.le.s32.totalorder 1, %s9
    %p137 = scmp.lt.s32.totalorder %s9, 3
    %p138 = pnand %p136, %p137
    %p139 = pneg %p138
    // Predicated region
    $region29: #{upsample_block_forward.4} parent=5 // pred_check
      _
    $region30: #{upsample_block_forward.4} parent=5 // pred_check_branch
      %141 = sbr.rel (%p138) target = $region32
    $region31: #{upsample_block_forward.4} parent=5 // pred_region
      %s142 = ssub.s32 %s9, 1
      %p143 = scmp.lt.s32.totalorder %s14, 1
      %s144 = scalar_select %p143, %s14, 1
      %s145 = smul.addr %s144, 3
      %s146 = smul.addr %s145, 4
      %s147 = scalar_lea.vmem %s0, %s146
      %p148 = pneg %p35
      %p149 = pneg %p32
      %p150 = pneg %p56
      %p151 = pneg %p53
      %p152 = pneg %p77
      %p153 = pneg %p74
      %p154 = pneg %p103
      %p155 = pneg %p100
      %p156 = scmp.lt.s32.totalorder %s14, 1
      %s157 = scalar_select %p156, %s14, 1
      %s158 = smul.addr %s157, 12
      %s159 = smul.addr %s158, 4
      %s160 = scalar_lea.vmem %s3, %s159
      %p161 = scmp.lt.s32.totalorder %s14, 1
      %s162 = scalar_select %p161, %s14, 1
      %s163 = smul.addr %s162, 3
      %s164 = smul.addr %s163, 4
      %s165 = scalar_lea.vmem %s0, %s164
      %p166 = scmp.lt.s32.totalorder %s14, 1
      %s167 = scalar_select %p166, %s14, 1
      %s168 = smul.addr %s167, 12
      %s169 = smul.addr %s168, 4
      %s170 = scalar_lea.vmem %s3, %s169
      %v172 = vld [vmem:[%s165] sm:$0xff]
      %v173 = vld [vmem:[%s165 + $0x8] sm:$0xf]
      %v176 = vunpack.c.l.b16 %v172
      %v177 = vunpack.c.h.b16 %v172
      %v178 = vunpack.c.l.b16 %v173
      %v179 = vpack.c.b16 %v176, %v176
      %v180 = vpack.c.b16 %v177, %v177
      %v181 = vpack.c.b16 %v178, %v178
      %182 = vrot.lane.b32.xlu0 %v179, 127
      %v183 = vpop.permute.xlu0 %182
      %184 = vrot.lane.b32.xlu0 %v180, 127
      %v185 = vpop.permute.xlu0 %184
      %186 = vrot.lane.b32.xlu0 %v181, 127
      %v187 = vpop.permute.xlu0 %186
      %vm188 = vcmask 1039360
      %v189 = vsel %vm188, %v183, %v185
      %v190 = vsel %vm188, %v185, %v187
      %191 = vrot.lane.b32.xlu0 %v179, 126
      %v192 = vpop.permute.xlu0 %191
      %193 = vrot.lane.b32.xlu0 %v180, 126
      %v194 = vpop.permute.xlu0 %193
      %195 = vrot.lane.b32.xlu0 %v181, 126
      %v196 = vpop.permute.xlu0 %195
      %vm197 = vcmask 1031168
      %v198 = vsel %vm197, %v192, %v194
      %v199 = vsel %vm197, %v194, %v196
      %200 = vrot.lane.b32.xlu0 %v179, 110
      %v201 = vpop.permute.xlu0 %200
      %202 = vrot.lane.b32.xlu0 %v180, 110
      %v203 = vpop.permute.xlu0 %202
      %204 = vrot.lane.b32.xlu0 %v181, 110
      %v205 = vpop.permute.xlu0 %204
      %vm206 = vcmask 900096
      %v207 = vsel %vm206, %v201, %v203
      %v208 = vsel %vm206, %v203, %v205
      %209 = vrot.lane.b32.xlu0 %v179, 109
      %v210 = vpop.permute.xlu0 %209
      %211 = vrot.lane.b32.xlu0 %v180, 109
      %v212 = vpop.permute.xlu0 %211
      %213 = vrot.lane.b32.xlu0 %v181, 109
      %v214 = vpop.permute.xlu0 %213
      %vm215 = vcmask 891904
      %v216 = vsel %vm215, %v210, %v212
      %v217 = vsel %vm215, %v212, %v214
      %218 = vrot.lane.b32.xlu0 %v179, 108
      %v219 = vpop.permute.xlu0 %218
      %220 = vrot.lane.b32.xlu0 %v180, 108
      %v221 = vpop.permute.xlu0 %220
      %222 = vrot.lane.b32.xlu0 %v181, 108
      %v223 = vpop.permute.xlu0 %222
      %vm224 = vcmask 883712
      %v225 = vsel %vm224, %v219, %v221
      %v226 = vsel %vm224, %v221, %v223
      %227 = vrot.lane.b32.xlu0 %v179, 92
      %v228 = vpop.permute.xlu0 %227
      %229 = vrot.lane.b32.xlu0 %v180, 92
      %v230 = vpop.permute.xlu0 %229
      %231 = vrot.lane.b32.xlu0 %v181, 92
      %v232 = vpop.permute.xlu0 %231
      %vm233 = vcmask 752640
      %v234 = vsel %vm233, %v228, %v230
      %v235 = vsel %vm233, %v230, %v232
      %236 = vrot.lane.b32.xlu0 %v179, 91
      %v237 = vpop.permute.xlu0 %236
      %238 = vrot.lane.b32.xlu0 %v180, 91
      %v239 = vpop.permute.xlu0 %238
      %240 = vrot.lane.b32.xlu0 %v181, 91
      %v241 = vpop.permute.xlu0 %240
      %vm242 = vcmask 744448
      %v243 = vsel %vm242, %v237, %v239
      %v244 = vsel %vm242, %v239, %v241
      %245 = vrot.lane.b32.xlu0 %v179, 90
      %v246 = vpop.permute.xlu0 %245
      %247 = vrot.lane.b32.xlu0 %v180, 90
      %v248 = vpop.permute.xlu0 %247
      %249 = vrot.lane.b32.xlu0 %v181, 90
      %v250 = vpop.permute.xlu0 %249
      %vm251 = vcmask 736256
      %v252 = vsel %vm251, %v246, %v248
      %v253 = vsel %vm251, %v248, %v250
      %vm254 = vcmask 1043456
      %v257 = vsel %vm254, %v179, %v189
      %v261 = vsel %vm254, %v180, %v190
      %v265 = vsel %vm254, %v181, %v187
      %v269 = vsel %vm254, %v198, %v207
      %v273 = vsel %vm254, %v199, %v208
      %v277 = vsel %vm254, %v196, %v205
      %v281 = vsel %vm254, %v216, %v225
      %v285 = vsel %vm254, %v217, %v226
      %v289 = vsel %vm254, %v214, %v223
      %v293 = vsel %vm254, %v234, %v243
      %v297 = vsel %vm254, %v235, %v244
      %v301 = vsel %vm254, %v232, %v241
      %v303 = vld [vmem:[%s1] sm:$0xf]
      %v304 = vld [vmem:[%s1 + $0x4] sm:$0xf]
      %v305 = vld [vmem:[%s1 + $0x8] sm:$0xf]
      %v306 = vld [vmem:[%s1 + $0xc] sm:$0xf]
      %v307 = vld [vmem:[%s2] sm:$0xff]
      %v308 = vld [vmem:[%s2 + $0x8] sm:$0xff]
      %v309 = vld [vmem:[%s2 + $0x10] sm:$0xff]
      %v310 = vld [vmem:[%s2 + $0x18] sm:$0xff]
      %312 = vset.pattern.permute.xlu0 0
      %313 = vperm.xlu0 %312, %v307
      %v314 = vpop.permute.xlu0 %313
      %317 = vset.pattern.permute.xlu0 0
      %318 = vperm.xlu0 %317, %v308
      %v319 = vpop.permute.xlu0 %318
      %322 = vset.pattern.permute.xlu0 0
      %323 = vperm.xlu0 %322, %v309
      %v324 = vpop.permute.xlu0 %323
      %327 = vset.pattern.permute.xlu0 0
      %328 = vperm.xlu0 %327, %v310
      %v329 = vpop.permute.xlu0 %328
      %v335 = vunpack.c.l.b16 %v303
      %v336 = vunpack.c.l.b16 %v304
      %v337 = vunpack.c.l.b16 %v305
      %v338 = vunpack.c.l.b16 %v306
      %v339 = vpack.c.b16 %v336, %v335
      %v340 = vpack.c.b16 %v338, %v337
      %vm341 = vcmask 588800
      %v343 = vsel %vm341, %v339, 0
      %v346 = vsel %vm341, %v340, 0
      %v349 = vsel %vm254, %v252, 0
      %v352 = vsel %vm254, %v253, 0
      %v355 = vsel %vm254, %v250, 0
      %357 = vmatprep.subr.bf16.mxu0 0
      %358 = vmatpush1.bf16.msra.mxu0 0
      %359 = vmatprep.subr.bf16.mxu0 0
      %360 = vmatpush1.bf16.msra.mxu0 0
      %361 = vmatprep.subr.bf16.mxu0 0
      %362 = vmatpush1.bf16.msra.mxu0 0
      %363 = vmatprep.subr.bf16.mxu0 %v352
      %364 = vmatpush1.bf16.msra.mxu0 %v349
      %365 = vmatprep.subr.bf16.mxu0 %v297
      %366 = vmatpush1.bf16.msra.mxu0 %v293
      %367 = vmatprep.subr.bf16.mxu0 %v285
      %368 = vmatpush1.bf16.msra.mxu0 %v281
      %369 = vmatprep.subr.bf16.mxu0 %v273
      %370 = vmatpush1.bf16.msra.mxu0 %v269
      %371 = vmatprep.subr.bf16.mxu0 %v261
      %372 = vmatpush1.bf16.msra.mxu0 %v257
      %373 = vmatprep.subr.bf16.mxu0 0
      %374 = vmatpush2.bf16.msra.mxu0 0
      %375 = vmatprep.subr.bf16.mxu0 0
      %376 = vmatpush2.bf16.msra.mxu0 0
      %377 = vmatprep.subr.bf16.mxu0 0
      %378 = vmatpush2.bf16.msra.mxu0 0
      %379 = vmatprep.subr.bf16.mxu0 0
      %380 = vmatpush2.bf16.msra.mxu0 0
      %381 = vmatprep.subr.bf16.mxu0 0
      %382 = vmatpush2.bf16.msra.mxu0 0
      %383 = vmatprep.subr.bf16.mxu0 0
      %384 = vmatpush2.bf16.msra.mxu0 0
      %385 = vmatprep.subr.bf16.mxu0 0
      %386 = vmatpush2.bf16.msra.mxu0 0
      %387 = vmatprep.subr.bf16.mxu0 0
      %388 = vmatpush2.bf16.msra.mxu0 0
      %389 = vmatprep.mubr.bf16.mxu0 0
      %390 = vmatmul.mubr.bf16.gmra.mxu0 %v343
      %v391 = vpop.f32.mrf.mxu0
      %v392 = vadd.f32 %v314, %v391
      %v393 = vpop.f32.mrf.mxu0
      %v394 = vadd.f32 %v314, %v393
      %v395 = vpop.f32.mrf.mxu0
      %v396 = vadd.f32 %v319, %v395
      %v397 = vpop.f32.mrf.mxu0
      %v398 = vadd.f32 %v319, %v397
      %399 = vmatprep.mubr.bf16.mxu0 0
      %400 = vmatmul.mubr.bf16.gmra.mxu0 %v346
      %v401 = vpop.f32.mrf.mxu0
      %v402 = vadd.f32 %v324, %v401
      %v403 = vpop.f32.mrf.mxu0
      %v404 = vadd.f32 %v324, %v403
      %v405 = vpop.f32.mrf.mxu0
      %v406 = vadd.f32 %v329, %v405
      %v407 = vpop.f32.mrf.mxu0
      %v408 = vadd.f32 %v329, %v407
      %409 = vdwg.mxu0
      %410 = vmatprep.subr.bf16.mxu0 0
      %411 = vmatpush1.bf16.msra.mxu0 0
      %412 = vmatprep.subr.bf16.mxu0 0
      %413 = vmatpush1.bf16.msra.mxu0 0
      %414 = vmatprep.subr.bf16.mxu0 0
      %415 = vmatpush1.bf16.msra.mxu0 0
      %416 = vmatprep.subr.bf16.mxu0 0
      %417 = vmatpush1.bf16.msra.mxu0 %v355
      %418 = vmatprep.subr.bf16.mxu0 0
      %419 = vmatpush1.bf16.msra.mxu0 %v301
      %420 = vmatprep.subr.bf16.mxu0 0
      %421 = vmatpush1.bf16.msra.mxu0 %v289
      %422 = vmatprep.subr.bf16.mxu0 0
      %423 = vmatpush1.bf16.msra.mxu0 %v277
      %424 = vmatprep.subr.bf16.mxu0 0
      %425 = vmatpush1.bf16.msra.mxu0 %v265
      %426 = vmatprep.subr.bf16.mxu0 0
      %427 = vmatpush2.bf16.msra.mxu0 0
      %428 = vmatprep.subr.bf16.mxu0 0
      %429 = vmatpush2.bf16.msra.mxu0 0
      %430 = vmatprep.subr.bf16.mxu0 0
      %431 = vmatpush2.bf16.msra.mxu0 0
      %432 = vmatprep.subr.bf16.mxu0 0
      %433 = vmatpush2.bf16.msra.mxu0 0
      %434 = vmatprep.subr.bf16.mxu0 0
      %435 = vmatpush2.bf16.msra.mxu0 0
      %436 = vmatprep.subr.bf16.mxu0 0
      %437 = vmatpush2.bf16.msra.mxu0 0
      %438 = vmatprep.subr.bf16.mxu0 0
      %439 = vmatpush2.bf16.msra.mxu0 0
      %440 = vmatprep.subr.bf16.mxu0 0
      %441 = vmatpush2.bf16.msra.mxu0 0
      %442 = vmatprep.mubr.bf16.mxu0 0
      %443 = vmatmul.mubr.bf16.gmra.mxu0 %v343
      %v444 = vpop.f32.mrf.mxu0
      %v445 = vadd.f32 %v314, %v444
      %v446 = vpop.f32.mrf.mxu0
      %v447 = vpop.f32.mrf.mxu0
      %v448 = vadd.f32 %v319, %v447
      %v449 = vpop.f32.mrf.mxu0
      %450 = vmatprep.mubr.bf16.mxu0 0
      %451 = vmatmul.mubr.bf16.gmra.mxu0 %v346
      %v452 = vpop.f32.mrf.mxu0
      %v453 = vadd.f32 %v324, %v452
      %v454 = vpop.f32.mrf.mxu0
      %v455 = vpop.f32.mrf.mxu0
      %v456 = vadd.f32 %v329, %v455
      %v457 = vpop.f32.mrf.mxu0
      %458 = vdwg.mxu0
      %v459 = vpack.c.bf16 %v396, %v392
      %v460 = vpack.c.bf16 %v398, %v394
      %v461 = vpack.c.bf16 %v448, %v445
      %v462 = vpack.c.bf16 %v406, %v402
      %v463 = vpack.c.bf16 %v408, %v404
      %v464 = vpack.c.bf16 %v456, %v453
      %v471 = vunpack.c.l.b16 %v459
      %v472 = vunpack.c.l.b16 %v460
      %v473 = vunpack.c.l.b16 %v461
      %v474 = vunpack.c.h.b16 %v459
      %v475 = vunpack.c.h.b16 %v460
      %v476 = vunpack.c.h.b16 %v461
      %v477 = vunpack.c.l.b16 %v462
      %v478 = vunpack.c.l.b16 %v463
      %v479 = vunpack.c.l.b16 %v464
      %v480 = vunpack.c.h.b16 %v462
      %v481 = vunpack.c.h.b16 %v463
      %v482 = vunpack.c.h.b16 %v464
      %v483 = vpack.c.b16 %v472, %v471
      %v484 = vpack.c.b16 %v473, %v473
      %v485 = vpack.c.b16 %v475, %v474
      %v486 = vpack.c.b16 %v476, %v476
      %v487 = vpack.c.b16 %v478, %v477
      %v488 = vpack.c.b16 %v479, %v479
      %v489 = vpack.c.b16 %v481, %v480
      %v490 = vpack.c.b16 %v482, %v482
      %499 = vst [vmem:[%s170] sm:$0xff] %v483
      %vm500 = vcmask 551936
      %501 = vst.msk [vmem:[%s170 + $0x8] sm:$0xf] %vm500, %v484
      %502 = vst [vmem:[%s170 + $0xc] sm:$0xff] %v485
      %503 = vst.msk [vmem:[%s170 + $0x14] sm:$0xf] %vm500, %v486
      %504 = vst [vmem:[%s170 + $0x18] sm:$0xff] %v487
      %505 = vst.msk [vmem:[%s170 + $0x20] sm:$0xf] %vm500, %v488
      %506 = vst [vmem:[%s170 + $0x24] sm:$0xff] %v489
      %507 = vst.msk [vmem:[%s170 + $0x2c] sm:$0xf] %vm500, %v490
      %p508 = scmp.lt.s32.totalorder %s14, 1
      %s509 = scalar_select %p508, %s14, 1
      %s510 = smul.addr %s509, 12
      %s511 = smul.addr %s510, 4
      %s512 = scalar_lea.vmem %s3, %s511
      // Predicated region
      $region33: #{upsample_block_forward.4} parent=31 // pred_check
        %p513 = pneg %p100
      $region34: #{upsample_block_forward.4} parent=31 // pred_check_branch
        %515 = sbr.rel (%p513) target = $region36
      $region35: #{upsample_block_forward.4} parent=31 // pred_region
        _
      $region36: #{upsample_block_forward.4} parent=31 // pred_fallthru
        _
    $region32: #{upsample_block_forward.4} parent=5 // pred_fallthru
      _
    %p516 = scmp.le.s32.totalorder 2, %s9
    // Predicated region
    $region37: #{upsample_block_forward.4} parent=5 // pred_check
      %p517 = pneg %p516
    $region38: #{upsample_block_forward.4} parent=5 // pred_check_branch
      %519 = sbr.rel (%p517) target = $region40
    $region39: #{upsample_block_forward.4} parent=5 // pred_region
      %s520 = ssub.s32 %s9, 2
      // Predicated region
      $region41: #{upsample_block_forward.4} parent=39 // pred_check
        %p521 = pneg %p106
      $region42: #{upsample_block_forward.4} parent=39 // pred_check_branch
        %523 = sbr.rel (%p521) target = $region44
      $region43: #{upsample_block_forward.4} parent=39 // pred_region
        %p524 = scmp.lt.s32.totalorder %s15, 1
        %s525 = scalar_select %p524, %s15, 1
        %s526 = smul.addr %s525, 12
        %s527 = smul.addr %s526, 4
        %s528 = scalar_lea.vmem %s3, %s527
      $region44: #{upsample_block_forward.4} parent=39 // pred_fallthru
        _
    $region40: #{upsample_block_forward.4} parent=5 // pred_fallthru
      _
  $region6: #{upsample_block_forward.4} parent=0 // loop_footer
    %s13 = sadd.s32 1, %s9
  $region7: #{upsample_block_forward.4} parent=0 // loop_footer_branch
    %8 = sbr.rel target = $region3
  $region8: #{upsample_block_forward.4} parent=0 // loop_exit
    _

// kernel: upsample_block_forward.5
$region0: #{upsample_block_forward.5}
  #allocation0 [shape = 'u32[]', space=smem, size = 0x4, offset = 0x4, fixed_abs, tag = 'smem constant byte address 0x4 - core index']
  #allocation1 [shape = 'u32[144,128]{1,0:T(1,128)}', space=vmem, size = 0x12000, scoped, tag = 'internal scratch']
  %s0 = inlined_call_operand.vmem [shape: bf16[2,12,1226], index: 0, kind: input, shape index: {}]
  %s1 = inlined_call_operand.vmem [shape: bf16[8,108], index: 1, kind: input, shape index: {}]
  %s2 = inlined_call_operand.vmem [shape: f32[8,1], index: 2, kind: input, shape index: {}]
  %s3 = inlined_call_operand.vmem [shape: f32[1,1226], index: 3, kind: input, shape index: {}]
  %s4 = inlined_call_operand.vmem [shape: bf16[2,8,1226], index: 4, kind: output, shape index: {0}]
  %s5 = inlined_call_operand.vmem [shape: f32[2,8,2], index: 5, kind: output, shape index: {1}]
  %6 = xla_tuple %s4, %s5
  %s7 = sld [smem:[#allocation0]]
  $region57: #{upsample_block_forward.5} parent=0
    _
  %s9 = ssub.s32 1, %s7
  %s10 = scalar_select 0, %s9, %s7
  loop: start=0, step=1, limit=4
  $region2: #{upsample_block_forward.5} parent=0 // loop_pre_header
    _
  $region3: #{upsample_block_forward.5} parent=0 // loop_header
    %s12 = sphi 0, %s16
    %p13 = scmp.ge.s32.totalorder %s12, 4
    %s22 = sphi 0, %s24
    %s25 = sphi 0, %s22
    %s26 = sphi 0, %s25
    %s42 = sphi 0, %s26
    %s46 = sphi 0, %s46
    %s48 = sphi 0, %s46
    %s49 = sphi 0, %s48
    %s63 = sphi 0, %s49
    %s67 = sphi 0, %s67
    %s69 = sphi 0, %s67
    %s70 = sphi 0, %s69
    %s84 = sphi 0, %s70
    %s88 = sphi 0, %s88
    %s90 = sphi 0, %s88
    %s91 = sphi 0, %s90
    %s105 = sphi 0, %s91
    %s111 = sphi 0, %s113
    %s114 = sphi 0, %s111
    %s115 = sphi 0, %s114
    %s131 = sphi 0, %s115
    %s137 = sphi 0, %s139
    %s140 = sphi 0, %s137
    %s141 = sphi 0, %s140
    %s157 = sphi 0, %s141
  $region4: #{upsample_block_forward.5} parent=0 // loop_header_branch
    %15 = sbr.rel (%p13) target = $region8
  $region5: #{upsample_block_forward.5} parent=0 // loop_body
    %s17 = ssub.s32 %s12, 1
    %s18 = ssub.s32 %s12, 2
    %s19 = sadd.s32 %s12, 1
    %s20 = ssub.s32 %s12, %s19
    %p21 = scmp.eq.s32.totalorder %s20, 0
    %s23 = sadd.s32 %s22, 1
    %s24 = scalar_select %p21, %s22, %s23
    %p27 = pneg %p21
    %p28 = scmp.eq.s32.totalorder %s12, 1
    %p29 = por %p27, %p28
    %p30 = scmp.ne.s32.totalorder %s22, %s25
    %p31 = scmp.eq.s32.totalorder %s12, 0
    %p32 = por %p30, %p31
    %p33 = scmp.ne.s32.totalorder %s22, %s25
    %p34 = scmp.eq.s32.totalorder %s17, 1
    %p35 = por %p33, %p34
    %p36 = scmp.ne.s32.totalorder %s25, %s26
    %p37 = scmp.eq.s32.totalorder %s17, 0
    %p38 = por %p36, %p37
    %p39 = scmp.ne.s32.totalorder %s25, %s26
    %p40 = scmp.eq.s32.totalorder %s18, 1
    %p41 = por %p39, %p40
    %p43 = scmp.ne.s32.totalorder %s26, %s42
    %p44 = scmp.eq.s32.totalorder %s18, 0
    %p45 = por %p43, %p44
    %s47 = sadd.s32 %s46, 1
    %p50 = scmp.eq.s32.totalorder %s12, 1
    %p51 = scmp.ne.s32.totalorder %s46, %s48
    %p52 = scmp.eq.s32.totalorder %s12, 0
    %p53 = por %p51, %p52
    %p54 = scmp.ne.s32.totalorder %s46, %s48
    %p55 = scmp.eq.s32.totalorder %s17, 1
    %p56 = por %p54, %p55
    %p57 = scmp.ne.s32.totalorder %s48, %s49
    %p58 = scmp.eq.s32.totalorder %s17, 0
    %p59 = por %p57, %p58
    %p60 = scmp.ne.s32.totalorder %s48, %s49
    %p61 = scmp.eq.s32.totalorder %s18, 1
    %p62 = por %p60, %p61
    %p64 = scmp.ne.s32.totalorder %s49, %s63
    %p65 = scmp.eq.s32.totalorder %s18, 0
    %p66 = por %p64, %p65
    %s68 = sadd.s32 %s67, 1
    %p71 = scmp.eq.s32.totalorder %s12, 1
    %p72 = scmp.ne.s32.totalorder %s67, %s69
    %p73 = scmp.eq.s32.totalorder %s12, 0
    %p74 = por %p72, %p73
    %p75 = scmp.ne.s32.totalorder %s67, %s69
    %p76 = scmp.eq.s32.totalorder %s17, 1
    %p77 = por %p75, %p76
    %p78 = scmp.ne.s32.totalorder %s69, %s70
    %p79 = scmp.eq.s32.totalorder %s17, 0
    %p80 = por %p78, %p79
    %p81 = scmp.ne.s32.totalorder %s69, %s70
    %p82 = scmp.eq.s32.totalorder %s18, 1
    %p83 = por %p81, %p82
    %p85 = scmp.ne.s32.totalorder %s70, %s84
    %p86 = scmp.eq.s32.totalorder %s18, 0
    %p87 = por %p85, %p86
    %s89 = sadd.s32 %s88, 1
    %p92 = scmp.eq.s32.totalorder %s12, 1
    %p93 = scmp.ne.s32.totalorder %s88, %s90
    %p94 = scmp.eq.s32.totalorder %s12, 0
    %p95 = por %p93, %p94
    %p96 = scmp.ne.s32.totalorder %s88, %s90
    %p97 = scmp.eq.s32.totalorder %s17, 1
    %p98 = por %p96, %p97
    %p99 = scmp.ne.s32.totalorder %s90, %s91
    %p100 = scmp.eq.s32.totalorder %s17, 0
    %p101 = por %p99, %p100
    %p102 = scmp.ne.s32.totalorder %s90, %s91
    %p103 = scmp.eq.s32.totalorder %s18, 1
    %p104 = por %p102, %p103
    %p106 = scmp.ne.s32.totalorder %s91, %s105
    %p107 = scmp.eq.s32.totalorder %s18, 0
    %p108 = por %p106, %p107
    %s109 = ssub.s32 %s12, %s19
    %p110 = scmp.eq.s32.totalorder %s109, 0
    %s112 = sadd.s32 %s111, 1
    %s113 = scalar_select %p110, %s111, %s112
    %p116 = pneg %p110
    %p117 = scmp.eq.s32.totalorder %s12, 1
    %p118 = por %p116, %p117
    %p119 = scmp.ne.s32.totalorder %s111, %s114
    %p120 = scmp.eq.s32.totalorder %s12, 0
    %p121 = por %p119, %p120
    %p122 = scmp.ne.s32.totalorder %s111, %s114
    %p123 = scmp.eq.s32.totalorder %s17, 1
    %p124 = por %p122, %p123
    %p125 = scmp.ne.s32.totalorder %s114, %s115
    %p126 = scmp.eq.s32.totalorder %s17, 0
    %p127 = por %p125, %p126
    %p128 = scmp.ne.s32.totalorder %s114, %s115
    %p129 = scmp.eq.s32.totalorder %s18, 1
    %p130 = por %p128, %p129
    %p132 = scmp.ne.s32.totalorder %s115, %s131
    %p133 = scmp.eq.s32.totalorder %s18, 0
    %p134 = por %p132, %p133
    %s135 = ssub.s32 %s12, %s19
    %p136 = scmp.eq.s32.totalorder %s135, 0
    %s138 = sadd.s32 %s137, 1
    %s139 = scalar_select %p136, %s137, %s138
    %p142 = pneg %p136
    %p143 = scmp.eq.s32.totalorder %s12, 1
    %p144 = por %p142, %p143
    %p145 = scmp.ne.s32.totalorder %s137, %s140
    %p146 = scmp.eq.s32.totalorder %s12, 0
    %p147 = por %p145, %p146
    %p148 = scmp.ne.s32.totalorder %s137, %s140
    %p149 = scmp.eq.s32.totalorder %s17, 1
    %p150 = por %p148, %p149
    %p151 = scmp.ne.s32.totalorder %s140, %s141
    %p152 = scmp.eq.s32.totalorder %s17, 0
    %p153 = por %p151, %p152
    %p154 = scmp.ne.s32.totalorder %s140, %s141
    %p155 = scmp.eq.s32.totalorder %s18, 1
    %p156 = por %p154, %p155
    %p158 = scmp.ne.s32.totalorder %s141, %s157
    %p159 = scmp.eq.s32.totalorder %s18, 0
    %p160 = por %p158, %p159
    %p161 = scmp.le.s32.totalorder 1, %s12
    %p162 = scmp.lt.s32.totalorder %s12, 3
    %p163 = pnand %p161, %p162
    %p164 = pneg %p163
    // Predicated region
    $region9: #{upsample_block_forward.5} parent=5 // pred_check
      _
    $region10: #{upsample_block_forward.5} parent=5 // pred_check_branch
      %166 = sbr.rel (%p163) target = $region12
    $region11: #{upsample_block_forward.5} parent=5 // pred_region
      %s167 = ssub.s32 %s12, 1
      // Predicated region
      $region13: #{upsample_block_forward.5} parent=11 // pred_check
        %p168 = pneg %p59
      $region14: #{upsample_block_forward.5} parent=11 // pred_check_branch
        %170 = sbr.rel (%p168) target = $region16
      $region15: #{upsample_block_forward.5} parent=11 // pred_region
        _
      $region16: #{upsample_block_forward.5} parent=11 // pred_fallthru
        _
      // Predicated region
      $region17: #{upsample_block_forward.5} parent=11 // pred_check
        %p171 = pneg %p80
      $region18: #{upsample_block_forward.5} parent=11 // pred_check_branch
        %173 = sbr.rel (%p171) target = $region20
      $region19: #{upsample_block_forward.5} parent=11 // pred_region
        _
      $region20: #{upsample_block_forward.5} parent=11 // pred_fallthru
        _
      // Predicated region
      $region21: #{upsample_block_forward.5} parent=11 // pred_check
        %p174 = pneg %p101
      $region22: #{upsample_block_forward.5} parent=11 // pred_check_branch
        %176 = sbr.rel (%p174) target = $region24
      $region23: #{upsample_block_forward.5} parent=11 // pred_region
        _
      $region24: #{upsample_block_forward.5} parent=11 // pred_fallthru
        _
    $region12: #{upsample_block_forward.5} parent=5 // pred_fallthru
      _
    %p177 = scmp.lt.s32.totalorder %s12, 2
    // Predicated region
    $region25: #{upsample_block_forward.5} parent=5 // pred_check
      %p178 = pneg %p177
    $region26: #{upsample_block_forward.5} parent=5 // pred_check_branch
      %180 = sbr.rel (%p178) target = $region28
    $region27: #{upsample_block_forward.5} parent=5 // pred_region
      // Predicated region
      $region29: #{upsample_block_forward.5} parent=27 // pred_check
        %p181 = pneg %p32
      $region30: #{upsample_block_forward.5} parent=27 // pred_check_branch
        %183 = sbr.rel (%p181) target = $region32
      $region31: #{upsample_block_forward.5} parent=27 // pred_region
        %p184 = scmp.lt.s32.totalorder %s12, 1
        %s185 = scalar_select %p184, %s12, 1
        %s186 = smul.addr %s185, 20
        %s187 = smul.addr %s186, 4
        %s188 = scalar_lea.vmem %s0, %s187
      $region32: #{upsample_block_forward.5} parent=27 // pred_fallthru
        _
    $region28: #{upsample_block_forward.5} parent=5 // pred_fallthru
      _
    %p189 = scmp.le.s32.totalorder 1, %s12
    %p190 = scmp.lt.s32.totalorder %s12, 3
    %p191 = pnand %p189, %p190
    %p192 = pneg %p191
    // Predicated region
    $region33: #{upsample_block_forward.5} parent=5 // pred_check
      _
    $region34: #{upsample_block_forward.5} parent=5 // pred_check_branch
      %194 = sbr.rel (%p191) target = $region36
    $region35: #{upsample_block_forward.5} parent=5 // pred_region
      %s195 = ssub.s32 %s12, 1
      %p196 = scmp.lt.s32.totalorder %s17, 1
      %s197 = scalar_select %p196, %s17, 1
      %s198 = smul.addr %s197, 20
      %s199 = smul.addr %s198, 4
      %s200 = scalar_lea.vmem %s0, %s199
      %p201 = pneg %p38
      %p202 = pneg %p35
      %p203 = pneg %p59
      %p204 = pneg %p56
      %p205 = pneg %p80
      %p206 = pneg %p77
      %p207 = pneg %p101
      %p208 = pneg %p98
      %p209 = pneg %p127
      %p210 = pneg %p124
      %p211 = scmp.lt.s32.totalorder %s17, 1
      %s212 = scalar_select %p211, %s17, 1
      %s213 = smul.addr %s212, 10
      %s214 = smul.addr %s213, 4
      %s215 = scalar_lea.vmem %s4, %s214
      %p216 = pneg %p153
      %p217 = pneg %p150
      %p218 = scmp.lt.s32.totalorder %s17, 1
      %s219 = scalar_select %p218, %s17, 1
      %s220 = smul.addr %s219, 8
      %s221 = scalar_lea.vmem %s5, %s220
      %p222 = scmp.lt.s32.totalorder %s17, 1
      %s223 = scalar_select %p222, %s17, 1
      %s224 = smul.addr %s223, 20
      %s225 = smul.addr %s224, 4
      %s226 = scalar_lea.vmem %s0, %s225
      %p227 = scmp.lt.s32.totalorder %s17, 1
      %s228 = scalar_select %p227, %s17, 1
      %s229 = smul.addr %s228, 10
      %s230 = smul.addr %s229, 4
      %s231 = scalar_lea.vmem %s4, %s230
      %p232 = scmp.lt.s32.totalorder %s17, 1
      %s233 = scalar_select %p232, %s17, 1
      %s234 = smul.addr %s233, 8
      %s235 = scalar_lea.vmem %s5, %s234
      %v237 = vld [vmem:[%s226] sm:$0xff]
      %v238 = vld [vmem:[%s226 + $0x8] sm:$0xff]
      %v239 = vld [vmem:[%s226 + $0x10] sm:$0xff]
      %v240 = vld [vmem:[%s226 + $0x18] sm:$0xff]
      %v241 = vld [vmem:[%s226 + $0x20] sm:$0xff]
      %v242 = vld [vmem:[%s226 + $0x28] sm:$0x33]
      %v243 = vld [vmem:[%s226 + $0x30] sm:$0x33]
      %v244 = vld [vmem:[%s226 + $0x38] sm:$0x33]
      %v245 = vld [vmem:[%s226 + $0x40] sm:$0x33]
      %v246 = vld [vmem:[%s226 + $0x48] sm:$0x33]
      %v257 = vunpack.c.l.b16 %v237
      %v258 = vunpack.c.h.b16 %v237
      %v259 = vunpack.c.l.b16 %v238
      %v260 = vunpack.c.h.b16 %v238
      %v261 = vunpack.c.l.b16 %v239
      %v262 = vunpack.c.h.b16 %v239
      %v263 = vunpack.c.l.b16 %v240
      %v264 = vunpack.c.h.b16 %v240
      %v265 = vunpack.c.l.b16 %v241
      %v266 = vunpack.c.h.b16 %v241
      %v267 = vunpack.c.l.b16 %v242
      %v268 = vunpack.c.h.b16 %v242
      %v269 = vunpack.c.l.b16 %v243
      %v270 = vunpack.c.h.b16 %v243
      %v271 = vunpack.c.l.b16 %v244
      %v272 = vunpack.c.h.b16 %v244
      %v273 = vunpack.c.l.b16 %v245
      %v274 = vunpack.c.h.b16 %v245
      %v275 = vunpack.c.l.b16 %v246
      %v276 = vunpack.c.h.b16 %v246
      %v277 = vpack.c.b16 %v267, %v257
      %v278 = vpack.c.b16 %v268, %v258
      %v279 = vpack.c.b16 %v269, %v259
      %v280 = vpack.c.b16 %v270, %v260
      %v281 = vpack.c.b16 %v271, %v261
      %v282 = vpack.c.b16 %v272, %v262
      %v283 = vpack.c.b16 %v273, %v263
      %v284 = vpack.c.b16 %v274, %v264
      %v285 = vpack.c.b16 %v275, %v265
      %v286 = vpack.c.b16 %v276, %v266
      %v287 = vrot.slane %v277, 2
      %v288 = vrot.slane %v278, 2
      %v289 = vrot.slane %v279, 2
      %v290 = vrot.slane %v280, 2
      %v291 = vrot.slane %v281, 2
      %v292 = vrot.slane %v282, 2
      %v293 = vrot.slane %v283, 2
      %v294 = vrot.slane %v284, 2
      %v295 = vrot.slane %v285, 2
      %v296 = vrot.slane %v286, 2
      %297 = vrot.lane.b32.xlu0 %v287, 127
      %v298 = vpop.permute.xlu0 %297
      %299 = vrot.lane.b32.xlu0 %v288, 127
      %v300 = vpop.permute.xlu0 %299
      %301 = vrot.lane.b32.xlu0 %v289, 127
      %v302 = vpop.permute.xlu0 %301
      %303 = vrot.lane.b32.xlu0 %v290, 127
      %v304 = vpop.permute.xlu0 %303
      %305 = vrot.lane.b32.xlu0 %v291, 127
      %v306 = vpop.permute.xlu0 %305
      %307 = vrot.lane.b32.xlu0 %v292, 127
      %v308 = vpop.permute.xlu0 %307
      %309 = vrot.lane.b32.xlu0 %v293, 127
      %v310 = vpop.permute.xlu0 %309
      %311 = vrot.lane.b32.xlu0 %v294, 127
      %v312 = vpop.permute.xlu0 %311
      %313 = vrot.lane.b32.xlu0 %v295, 127
      %v314 = vpop.permute.xlu0 %313
      %315 = vrot.lane.b32.xlu0 %v296, 127
      %v316 = vpop.permute.xlu0 %315
      %vm317 = vcmask 1039360
      %v318 = vsel %vm317, %v298, %v300
      %v319 = vsel %vm317, %v300, %v302
      %v320 = vsel %vm317, %v302, %v304
      %v321 = vsel %vm317, %v304, %v306
      %v322 = vsel %vm317, %v306, %v308
      %v323 = vsel %vm317, %v308, %v310
      %v324 = vsel %vm317, %v310, %v312
      %v325 = vsel %vm317, %v312, %v314
      %v326 = vsel %vm317, %v314, %v316
      %v327 = vpack.c.b16 %v257, %v257
      %v328 = vpack.c.b16 %v258, %v258
      %v329 = vpack.c.b16 %v259, %v259
      %v330 = vpack.c.b16 %v260, %v260
      %v331 = vpack.c.b16 %v261, %v261
      %v332 = vpack.c.b16 %v262, %v262
      %v333 = vpack.c.b16 %v263, %v263
      %v334 = vpack.c.b16 %v264, %v264
      %v335 = vpack.c.b16 %v265, %v265
      %v336 = vpack.c.b16 %v266, %v266
      %v337 = vpack.c.b16 %v267, %v267
      %v338 = vpack.c.b16 %v268, %v268
      %v339 = vpack.c.b16 %v269, %v269
      %v340 = vpack.c.b16 %v270, %v270
      %v341 = vpack.c.b16 %v271, %v271
      %v342 = vpack.c.b16 %v272, %v272
      %v343 = vpack.c.b16 %v273, %v273
      %v344 = vpack.c.b16 %v274, %v274
      %v345 = vpack.c.b16 %v275, %v275
      %v346 = vpack.c.b16 %v276, %v276
      %347 = vrot.lane.b32.xlu0 %v327, 126
      %v348 = vpop.permute.xlu0 %347
      %349 = vrot.lane.b32.xlu0 %v328, 126
      %v350 = vpop.permute.xlu0 %349
      %351 = vrot.lane.b32.xlu0 %v329, 126
      %v352 = vpop.permute.xlu0 %351
      %353 = vrot.lane.b32.xlu0 %v330, 126
      %v354 = vpop.permute.xlu0 %353
      %355 = vrot.lane.b32.xlu0 %v331, 126
      %v356 = vpop.permute.xlu0 %355
      %357 = vrot.lane.b32.xlu0 %v332, 126
      %v358 = vpop.permute.xlu0 %357
      %359 = vrot.lane.b32.xlu0 %v333, 126
      %v360 = vpop.permute.xlu0 %359
      %361 = vrot.lane.b32.xlu0 %v334, 126
      %v362 = vpop.permute.xlu0 %361
      %363 = vrot.lane.b32.xlu0 %v335, 126
      %v364 = vpop.permute.xlu0 %363
      %365 = vrot.lane.b32.xlu0 %v336, 126
      %v366 = vpop.permute.xlu0 %365
      %367 = vrot.lane.b32.xlu0 %v337, 126
      %v368 = vpop.permute.xlu0 %367
      %369 = vrot.lane.b32.xlu0 %v338, 126
      %v370 = vpop.permute.xlu0 %369
      %371 = vrot.lane.b32.xlu0 %v339, 126
      %v372 = vpop.permute.xlu0 %371
      %373 = vrot.lane.b32.xlu0 %v340, 126
      %v374 = vpop.permute.xlu0 %373
      %375 = vrot.lane.b32.xlu0 %v341, 126
      %v376 = vpop.permute.xlu0 %375
      %377 = vrot.lane.b32.xlu0 %v342, 126
      %v378 = vpop.permute.xlu0 %377
      %379 = vrot.lane.b32.xlu0 %v343, 126
      %v380 = vpop.permute.xlu0 %379
      %381 = vrot.lane.b32.xlu0 %v344, 126
      %v382 = vpop.permute.xlu0 %381
      %383 = vrot.lane.b32.xlu0 %v345, 126
      %v384 = vpop.permute.xlu0 %383
      %385 = vrot.lane.b32.xlu0 %v346, 126
      %v386 = vpop.permute.xlu0 %385
      %vm387 = vcmask 1031168
      %v388 = vsel %vm387, %v348, %v350
      %v389 = vsel %vm387, %v350, %v352
      %v390 = vsel %vm387, %v352, %v354
      %v391 = vsel %vm387, %v354, %v356
      %v392 = vsel %vm387, %v356, %v358
      %v393 = vsel %vm387, %v358, %v360
      %v394 = vsel %vm387, %v360, %v362
      %v395 = vsel %vm387, %v362, %v364
      %v396 = vsel %vm387, %v364, %v366
      %v397 = vsel %vm387, %v368, %v370
      %v398 = vsel %vm387, %v370, %v372
      %v399 = vsel %vm387, %v372, %v374
      %v400 = vsel %vm387, %v374, %v376
      %v401 = vsel %vm387, %v376, %v378
      %v402 = vsel %vm387, %v378, %v380
      %v403 = vsel %vm387, %v380, %v382
      %v404 = vsel %vm387, %v382, %v384
      %v405 = vsel %vm387, %v384, %v386
      %v406 = vrot.slane %v277, 6
      %v407 = vrot.slane %v278, 6
      %v408 = vrot.slane %v279, 6
      %v409 = vrot.slane %v280, 6
      %v410 = vrot.slane %v281, 6
      %v411 = vrot.slane %v282, 6
      %v412 = vrot.slane %v283, 6
      %v413 = vrot.slane %v284, 6
      %v414 = vrot.slane %v285, 6
      %v415 = vrot.slane %v286, 6
      %416 = vrot.lane.b32.xlu0 %v406, 94
      %v417 = vpop.permute.xlu0 %416
      %418 = vrot.lane.b32.xlu0 %v407, 94
      %v419 = vpop.permute.xlu0 %418
      %420 = vrot.lane.b32.xlu0 %v408, 94
      %v421 = vpop.permute.xlu0 %420
      %422 = vrot.lane.b32.xlu0 %v409, 94
      %v423 = vpop.permute.xlu0 %422
      %424 = vrot.lane.b32.xlu0 %v410, 94
      %v425 = vpop.permute.xlu0 %424
      %426 = vrot.lane.b32.xlu0 %v411, 94
      %v427 = vpop.permute.xlu0 %426
      %428 = vrot.lane.b32.xlu0 %v412, 94
      %v429 = vpop.permute.xlu0 %428
      %430 = vrot.lane.b32.xlu0 %v413, 94
      %v431 = vpop.permute.xlu0 %430
      %432 = vrot.lane.b32.xlu0 %v414, 94
      %v433 = vpop.permute.xlu0 %432
      %434 = vrot.lane.b32.xlu0 %v415, 94
      %v435 = vpop.permute.xlu0 %434
      %vm436 = vcmask 769024
      %v437 = vsel %vm436, %v417, %v419
      %v438 = vsel %vm436, %v419, %v421
      %v439 = vsel %vm436, %v421, %v423
      %v440 = vsel %vm436, %v423, %v425
      %v441 = vsel %vm436, %v425, %v427
      %v442 = vsel %vm436, %v427, %v429
      %v443 = vsel %vm436, %v429, %v431
      %v444 = vsel %vm436, %v431, %v433
      %v445 = vsel %vm436, %v433, %v435
      %446 = vrot.lane.b32.xlu0 %v277, 93
      %v447 = vpop.permute.xlu0 %446
      %448 = vrot.lane.b32.xlu0 %v278, 93
      %v449 = vpop.permute.xlu0 %448
      %450 = vrot.lane.b32.xlu0 %v279, 93
      %v451 = vpop.permute.xlu0 %450
      %452 = vrot.lane.b32.xlu0 %v280, 93
      %v453 = vpop.permute.xlu0 %452
      %454 = vrot.lane.b32.xlu0 %v281, 93
      %v455 = vpop.permute.xlu0 %454
      %456 = vrot.lane.b32.xlu0 %v282, 93
      %v457 = vpop.permute.xlu0 %456
      %458 = vrot.lane.b32.xlu0 %v283, 93
      %v459 = vpop.permute.xlu0 %458
      %460 = vrot.lane.b32.xlu0 %v284, 93
      %v461 = vpop.permute.xlu0 %460
      %462 = vrot.lane.b32.xlu0 %v285, 93
      %v463 = vpop.permute.xlu0 %462
      %464 = vrot.lane.b32.xlu0 %v286, 93
      %v465 = vpop.permute.xlu0 %464
      %vm466 = vcmask 760832
      %v467 = vsel %vm466, %v447, %v449
      %v468 = vsel %vm466, %v449, %v451
      %v469 = vsel %vm466, %v451, %v453
      %v470 = vsel %vm466, %v453, %v455
      %v471 = vsel %vm466, %v455, %v457
      %v472 = vsel %vm466, %v457, %v459
      %v473 = vsel %vm466, %v459, %v461
      %v474 = vsel %vm466, %v461, %v463
      %v475 = vsel %vm466, %v463, %v465
      %476 = vrot.lane.b32.xlu0 %v287, 92
      %v477 = vpop.permute.xlu0 %476
      %478 = vrot.lane.b32.xlu0 %v288, 92
      %v479 = vpop.permute.xlu0 %478
      %480 = vrot.lane.b32.xlu0 %v289, 92
      %v481 = vpop.permute.xlu0 %480
      %482 = vrot.lane.b32.xlu0 %v290, 92
      %v483 = vpop.permute.xlu0 %482
      %484 = vrot.lane.b32.xlu0 %v291, 92
      %v485 = vpop.permute.xlu0 %484
      %486 = vrot.lane.b32.xlu0 %v292, 92
      %v487 = vpop.permute.xlu0 %486
      %488 = vrot.lane.b32.xlu0 %v293, 92
      %v489 = vpop.permute.xlu0 %488
      %490 = vrot.lane.b32.xlu0 %v294, 92
      %v491 = vpop.permute.xlu0 %490
      %492 = vrot.lane.b32.xlu0 %v295, 92
      %v493 = vpop.permute.xlu0 %492
      %494 = vrot.lane.b32.xlu0 %v296, 92
      %v495 = vpop.permute.xlu0 %494
      %vm496 = vcmask 752640
      %v497 = vsel %vm496, %v477, %v479
      %v498 = vsel %vm496, %v479, %v481
      %v499 = vsel %vm496, %v481, %v483
      %v500 = vsel %vm496, %v483, %v485
      %v501 = vsel %vm496, %v485, %v487
      %v502 = vsel %vm496, %v487, %v489
      %v503 = vsel %vm496, %v489, %v491
      %v504 = vsel %vm496, %v491, %v493
      %v505 = vsel %vm496, %v493, %v495
      %506 = vrot.lane.b32.xlu0 %v327, 60
      %v507 = vpop.permute.xlu0 %506
      %508 = vrot.lane.b32.xlu0 %v328, 60
      %v509 = vpop.permute.xlu0 %508
      %510 = vrot.lane.b32.xlu0 %v329, 60
      %v511 = vpop.permute.xlu0 %510
      %512 = vrot.lane.b32.xlu0 %v330, 60
      %v513 = vpop.permute.xlu0 %512
      %514 = vrot.lane.b32.xlu0 %v331, 60
      %v515 = vpop.permute.xlu0 %514
      %516 = vrot.lane.b32.xlu0 %v332, 60
      %v517 = vpop.permute.xlu0 %516
      %518 = vrot.lane.b32.xlu0 %v333, 60
      %v519 = vpop.permute.xlu0 %518
      %520 = vrot.lane.b32.xlu0 %v334, 60
      %v521 = vpop.permute.xlu0 %520
      %522 = vrot.lane.b32.xlu0 %v335, 60
      %v523 = vpop.permute.xlu0 %522
      %524 = vrot.lane.b32.xlu0 %v336, 60
      %v525 = vpop.permute.xlu0 %524
      %526 = vrot.lane.b32.xlu0 %v337, 60
      %v527 = vpop.permute.xlu0 %526
      %528 = vrot.lane.b32.xlu0 %v338, 60
      %v529 = vpop.permute.xlu0 %528
      %530 = vrot.lane.b32.xlu0 %v339, 60
      %v531 = vpop.permute.xlu0 %530
      %532 = vrot.lane.b32.xlu0 %v340, 60
      %v533 = vpop.permute.xlu0 %532
      %534 = vrot.lane.b32.xlu0 %v341, 60
      %v535 = vpop.permute.xlu0 %534
      %536 = vrot.lane.b32.xlu0 %v342, 60
      %v537 = vpop.permute.xlu0 %536
      %538 = vrot.lane.b32.xlu0 %v343, 60
      %v539 = vpop.permute.xlu0 %538
      %540 = vrot.lane.b32.xlu0 %v344, 60
      %v541 = vpop.permute.xlu0 %540
      %542 = vrot.lane.b32.xlu0 %v345, 60
      %v543 = vpop.permute.xlu0 %542
      %544 = vrot.lane.b32.xlu0 %v346, 60
      %v545 = vpop.permute.xlu0 %544
      %vm546 = vcmask 490496
      %v547 = vsel %vm546, %v507, %v509
      %v548 = vsel %vm546, %v509, %v511
      %v549 = vsel %vm546, %v511, %v513
      %v550 = vsel %vm546, %v513, %v515
      %v551 = vsel %vm546, %v515, %v517
      %v552 = vsel %vm546, %v517, %v519
      %v553 = vsel %vm546, %v519, %v521
      %v554 = vsel %vm546, %v521, %v523
      %v555 = vsel %vm546, %v523, %v525
      %v556 = vsel %vm546, %v527, %v529
      %v557 = vsel %vm546, %v529, %v531
      %v558 = vsel %vm546, %v531, %v533
      %v559 = vsel %vm546, %v533, %v535
      %v560 = vsel %vm546, %v535, %v537
      %v561 = vsel %vm546, %v537, %v539
      %v562 = vsel %vm546, %v539, %v541
      %v563 = vsel %vm546, %v541, %v543
      %v564 = vsel %vm546, %v543, %v545
      %565 = vrot.lane.b32.xlu0 %v406, 59
      %v566 = vpop.permute.xlu0 %565
      %567 = vrot.lane.b32.xlu0 %v407, 59
      %v568 = vpop.permute.xlu0 %567
      %569 = vrot.lane.b32.xlu0 %v408, 59
      %v570 = vpop.permute.xlu0 %569
      %571 = vrot.lane.b32.xlu0 %v409, 59
      %v572 = vpop.permute.xlu0 %571
      %573 = vrot.lane.b32.xlu0 %v410, 59
      %v574 = vpop.permute.xlu0 %573
      %575 = vrot.lane.b32.xlu0 %v411, 59
      %v576 = vpop.permute.xlu0 %575
      %577 = vrot.lane.b32.xlu0 %v412, 59
      %v578 = vpop.permute.xlu0 %577
      %579 = vrot.lane.b32.xlu0 %v413, 59
      %v580 = vpop.permute.xlu0 %579
      %581 = vrot.lane.b32.xlu0 %v414, 59
      %v582 = vpop.permute.xlu0 %581
      %583 = vrot.lane.b32.xlu0 %v415, 59
      %v584 = vpop.permute.xlu0 %583
      %vm585 = vcmask 482304
      %v586 = vsel %vm585, %v566, %v568
      %v587 = vsel %vm585, %v568, %v570
      %v588 = vsel %vm585, %v570, %v572
      %v589 = vsel %vm585, %v572, %v574
      %v590 = vsel %vm585, %v574, %v576
      %v591 = vsel %vm585, %v576, %v578
      %v592 = vsel %vm585, %v578, %v580
      %v593 = vsel %vm585, %v580, %v582
      %v594 = vsel %vm585, %v582, %v584
      %595 = vrot.lane.b32.xlu0 %v277, 58
      %v596 = vpop.permute.xlu0 %595
      %597 = vrot.lane.b32.xlu0 %v278, 58
      %v598 = vpop.permute.xlu0 %597
      %599 = vrot.lane.b32.xlu0 %v279, 58
      %v600 = vpop.permute.xlu0 %599
      %601 = vrot.lane.b32.xlu0 %v280, 58
      %v602 = vpop.permute.xlu0 %601
      %603 = vrot.lane.b32.xlu0 %v281, 58
      %v604 = vpop.permute.xlu0 %603
      %605 = vrot.lane.b32.xlu0 %v282, 58
      %v606 = vpop.permute.xlu0 %605
      %607 = vrot.lane.b32.xlu0 %v283, 58
      %v608 = vpop.permute.xlu0 %607
      %609 = vrot.lane.b32.xlu0 %v284, 58
      %v610 = vpop.permute.xlu0 %609
      %611 = vrot.lane.b32.xlu0 %v285, 58
      %v612 = vpop.permute.xlu0 %611
      %613 = vrot.lane.b32.xlu0 %v286, 58
      %v614 = vpop.permute.xlu0 %613
      %vm615 = vcmask 474112
      %v616 = vsel %vm615, %v596, %v598
      %v617 = vsel %vm615, %v598, %v600
      %v618 = vsel %vm615, %v600, %v602
      %v619 = vsel %vm615, %v602, %v604
      %v620 = vsel %vm615, %v604, %v606
      %v621 = vsel %vm615, %v606, %v608
      %v622 = vsel %vm615, %v608, %v610
      %v623 = vsel %vm615, %v610, %v612
      %v624 = vsel %vm615, %v612, %v614
      %vm625 = vcmask 1045504
      %v628 = vsel %vm625, %v277, %v318
      %v632 = vsel %vm625, %v278, %v319
      %v636 = vsel %vm625, %v279, %v320
      %v640 = vsel %vm625, %v280, %v321
      %v644 = vsel %vm625, %v281, %v322
      %v648 = vsel %vm625, %v282, %v323
      %v652 = vsel %vm625, %v283, %v324
      %v656 = vsel %vm625, %v284, %v325
      %v660 = vsel %vm625, %v285, %v326
      %v664 = vsel %vm625, %v286, %v316
      %vm666 = vcmask 1043456
      %v668 = vsel %vm666, %v318, %v388
      %v671 = vsel %vm666, %v319, %v389
      %v674 = vsel %vm666, %v320, %v390
      %v677 = vsel %vm666, %v321, %v391
      %v680 = vsel %vm666, %v322, %v392
      %v683 = vsel %vm666, %v323, %v393
      %v686 = vsel %vm666, %v324, %v394
      %v689 = vsel %vm666, %v325, %v395
      %v692 = vsel %vm666, %v326, %v396
      %v695 = vsel %vm666, %v316, %v366
      %vm697 = vcmask 1041408
      %v700 = vsel %vm697, %v397, %v437
      %v704 = vsel %vm697, %v398, %v438
      %v708 = vsel %vm697, %v399, %v439
      %v712 = vsel %vm697, %v400, %v440
      %v716 = vsel %vm697, %v401, %v441
      %v720 = vsel %vm697, %v402, %v442
      %v724 = vsel %vm697, %v403, %v443
      %v728 = vsel %vm697, %v404, %v444
      %v732 = vsel %vm697, %v405, %v445
      %v736 = vsel %vm697, %v386, %v435
      %v740 = vsel %vm625, %v467, %v497
      %v744 = vsel %vm625, %v468, %v498
      %v748 = vsel %vm625, %v469, %v499
      %v752 = vsel %vm625, %v470, %v500
      %v756 = vsel %vm625, %v471, %v501
      %v760 = vsel %vm625, %v472, %v502
      %v764 = vsel %vm625, %v473, %v503
      %v768 = vsel %vm625, %v474, %v504
      %v772 = vsel %vm625, %v475, %v505
      %v776 = vsel %vm625, %v465, %v495
      %v779 = vsel %vm666, %v497, %v547
      %v782 = vsel %vm666, %v498, %v548
      %v785 = vsel %vm666, %v499, %v549
      %v788 = vsel %vm666, %v500, %v550
      %v791 = vsel %vm666, %v501, %v551
      %v794 = vsel %vm666, %v502, %v552
      %v797 = vsel %vm666, %v503, %v553
      %v800 = vsel %vm666, %v504, %v554
      %v803 = vsel %vm666, %v505, %v555
      %v806 = vsel %vm666, %v495, %v525
      %v810 = vsel %vm697, %v556, %v586
      %v814 = vsel %vm697, %v557, %v587
      %v818 = vsel %vm697, %v558, %v588
      %v822 = vsel %vm697, %v559, %v589
      %v826 = vsel %vm697, %v560, %v590
      %v830 = vsel %vm697, %v561, %v591
      %v834 = vsel %vm697, %v562, %v592
      %v838 = vsel %vm697, %v563, %v593
      %v842 = vsel %vm697, %v564, %v594
      %v846 = vsel %vm697, %v545, %v584
      %v848 = vld [vmem:[%s1] sm:$0xf]
      %v849 = vld [vmem:[%s2] sm:$0xff]
      %851 = vset.pattern.permute.xlu0 0
      %852 = vperm.xlu0 %851, %v849
      %v853 = vpop.permute.xlu0 %852
      %vm855 = vcmask 883712
      %v857 = vsel %vm855, %v848, 0
      %v860 = vsel %vm625, %v616, 0
      %v863 = vsel %vm625, %v617, 0
      %v866 = vsel %vm625, %v618, 0
      %v869 = vsel %vm625, %v619, 0
      %v872 = vsel %vm625, %v620, 0
      %v875 = vsel %vm625, %v621, 0
      %v878 = vsel %vm625, %v622, 0
      %v881 = vsel %vm625, %v623, 0
      %v884 = vsel %vm625, %v624, 0
      %v887 = vsel %vm625, %v614, 0
      %889 = vmatprep.subr.bf16.mxu0 0
      %890 = vmatpush1.bf16.msra.mxu0 0
      %891 = vmatprep.subr.bf16.mxu0 %v863
      %892 = vmatpush1.bf16.msra.mxu0 %v860
      %893 = vmatprep.subr.bf16.mxu0 %v814
      %894 = vmatpush1.bf16.msra.mxu0 %v810
      %895 = vmatprep.subr.bf16.mxu0 %v782
      %896 = vmatpush1.bf16.msra.mxu0 %v779
      %897 = vmatprep.subr.bf16.mxu0 %v744
      %898 = vmatpush1.bf16.msra.mxu0 %v740
      %899 = vmatprep.subr.bf16.mxu0 %v704
      %900 = vmatpush1.bf16.msra.mxu0 %v700
      %901 = vmatprep.subr.bf16.mxu0 %v671
      %902 = vmatpush1.bf16.msra.mxu0 %v668
      %903 = vmatprep.subr.bf16.mxu0 %v632
      %904 = vmatpush1.bf16.msra.mxu0 %v628
      %905 = vmatprep.subr.bf16.mxu0 0
      %906 = vmatpush2.bf16.msra.mxu0 0
      %907 = vmatprep.subr.bf16.mxu0 0
      %908 = vmatpush2.bf16.msra.mxu0 0
      %909 = vmatprep.subr.bf16.mxu0 0
      %910 = vmatpush2.bf16.msra.mxu0 0
      %911 = vmatprep.subr.bf16.mxu0 0
      %912 = vmatpush2.bf16.msra.mxu0 0
      %913 = vmatprep.subr.bf16.mxu0 0
      %914 = vmatpush2.bf16.msra.mxu0 0
      %915 = vmatprep.subr.bf16.mxu0 0
      %916 = vmatpush2.bf16.msra.mxu0 0
      %917 = vmatprep.subr.bf16.mxu0 0
      %918 = vmatpush2.bf16.msra.mxu0 0
      %919 = vmatprep.subr.bf16.mxu0 0
      %920 = vmatpush2.bf16.msra.mxu0 0
      %921 = vmatprep.mubr.bf16.mxu0 0
      %922 = vmatmul.mubr.bf16.gmra.mxu0 %v857
      %v923 = vpop.f32.mrf.mxu0
      %v924 = vadd.f32 %v853, %v923
      %v925 = vpop.f32.mrf.mxu0
      %v926 = vadd.f32 %v853, %v925
      %v927 = vpop.f32.mrf.mxu0
      %v928 = vpop.f32.mrf.mxu0
      %929 = vdwg.mxu0
      %930 = vmatprep.subr.bf16.mxu0 0
      %931 = vmatpush1.bf16.msra.mxu0 0
      %932 = vmatprep.subr.bf16.mxu0 %v869
      %933 = vmatpush1.bf16.msra.mxu0 %v866
      %934 = vmatprep.subr.bf16.mxu0 %v822
      %935 = vmatpush1.bf16.msra.mxu0 %v818
      %936 = vmatprep.subr.bf16.mxu0 %v788
      %937 = vmatpush1.bf16.msra.mxu0 %v785
      %938 = vmatprep.subr.bf16.mxu0 %v752
      %939 = vmatpush1.bf16.msra.mxu0 %v748
      %940 = vmatprep.subr.bf16.mxu0 %v712
      %941 = vmatpush1.bf16.msra.mxu0 %v708
      %942 = vmatprep.subr.bf16.mxu0 %v677
      %943 = vmatpush1.bf16.msra.mxu0 %v674
      %944 = vmatprep.subr.bf16.mxu0 %v640
      %945 = vmatpush1.bf16.msra.mxu0 %v636
      %946 = vmatprep.subr.bf16.mxu0 0
      %947 = vmatpush2.bf16.msra.mxu0 0
      %948 = vmatprep.subr.bf16.mxu0 0
      %949 = vmatpush2.bf16.msra.mxu0 0
      %950 = vmatprep.subr.bf16.mxu0 0
      %951 = vmatpush2.bf16.msra.mxu0 0
      %952 = vmatprep.subr.bf16.mxu0 0
      %953 = vmatpush2.bf16.msra.mxu0 0
      %954 = vmatprep.subr.bf16.mxu0 0
      %955 = vmatpush2.bf16.msra.mxu0 0
      %956 = vmatprep.subr.bf16.mxu0 0
      %957 = vmatpush2.bf16.msra.mxu0 0
      %958 = vmatprep.subr.bf16.mxu0 0
      %959 = vmatpush2.bf16.msra.mxu0 0
      %960 = vmatprep.subr.bf16.mxu0 0
      %961 = vmatpush2.bf16.msra.mxu0 0
      %962 = vmatprep.mubr.bf16.mxu0 0
      %963 = vmatmul.mubr.bf16.gmra.mxu0 %v857
      %v964 = vpop.f32.mrf.mxu0
      %v965 = vadd.f32 %v853, %v964
      %v966 = vpop.f32.mrf.mxu0
      %v967 = vadd.f32 %v853, %v966
      %v968 = vpop.f32.mrf.mxu0
      %v969 = vpop.f32.mrf.mxu0
      %970 = vdwg.mxu0
      %971 = vmatprep.subr.bf16.mxu0 0
      %972 = vmatpush1.bf16.msra.mxu0 0
      %973 = vmatprep.subr.bf16.mxu0 %v875
      %974 = vmatpush1.bf16.msra.mxu0 %v872
      %975 = vmatprep.subr.bf16.mxu0 %v830
      %976 = vmatpush1.bf16.msra.mxu0 %v826
      %977 = vmatprep.subr.bf16.mxu0 %v794
      %978 = vmatpush1.bf16.msra.mxu0 %v791
      %979 = vmatprep.subr.bf16.mxu0 %v760
      %980 = vmatpush1.bf16.msra.mxu0 %v756
      %981 = vmatprep.subr.bf16.mxu0 %v720
      %982 = vmatpush1.bf16.msra.mxu0 %v716
      %983 = vmatprep.subr.bf16.mxu0 %v683
      %984 = vmatpush1.bf16.msra.mxu0 %v680
      %985 = vmatprep.subr.bf16.mxu0 %v648
      %986 = vmatpush1.bf16.msra.mxu0 %v644
      %987 = vmatprep.subr.bf16.mxu0 0
      %988 = vmatpush2.bf16.msra.mxu0 0
      %989 = vmatprep.subr.bf16.mxu0 0
      %990 = vmatpush2.bf16.msra.mxu0 0
      %991 = vmatprep.subr.bf16.mxu0 0
      %992 = vmatpush2.bf16.msra.mxu0 0
      %993 = vmatprep.subr.bf16.mxu0 0
      %994 = vmatpush2.bf16.msra.mxu0 0
      %995 = vmatprep.subr.bf16.mxu0 0
      %996 = vmatpush2.bf16.msra.mxu0 0
      %997 = vmatprep.subr.bf16.mxu0 0
      %998 = vmatpush2.bf16.msra.mxu0 0
      %999 = vmatprep.subr.bf16.mxu0 0
      %1000 = vmatpush2.bf16.msra.mxu0 0
      %1001 = vmatprep.subr.bf16.mxu0 0
      %1002 = vmatpush2.bf16.msra.mxu0 0
      %1003 = vmatprep.mubr.bf16.mxu0 0
      %1004 = vmatmul.mubr.bf16.gmra.mxu0 %v857
      %v1005 = vpop.f32.mrf.mxu0
      %v1006 = vadd.f32 %v853, %v1005
      %v1007 = vpop.f32.mrf.mxu0
      %v1008 = vadd.f32 %v853, %v1007
      %v1009 = vpop.f32.mrf.mxu0
      %v1010 = vpop.f32.mrf.mxu0
      %1011 = vdwg.mxu0
      %1012 = vmatprep.subr.bf16.mxu0 0
      %1013 = vmatpush1.bf16.msra.mxu0 0
      %1014 = vmatprep.subr.bf16.mxu0 %v881
      %1015 = vmatpush1.bf16.msra.mxu0 %v878
      %1016 = vmatprep.subr.bf16.mxu0 %v838
      %1017 = vmatpush1.bf16.msra.mxu0 %v834
      %1018 = vmatprep.subr.bf16.mxu0 %v800
      %1019 = vmatpush1.bf16.msra.mxu0 %v797
      %1020 = vmatprep.subr.bf16.mxu0 %v768
      %1021 = vmatpush1.bf16.msra.mxu0 %v764
      %1022 = vmatprep.subr.bf16.mxu0 %v728
      %1023 = vmatpush1.bf16.msra.mxu0 %v724
      %1024 = vmatprep.subr.bf16.mxu0 %v689
      %1025 = vmatpush1.bf16.msra.mxu0 %v686
      %1026 = vmatprep.subr.bf16.mxu0 %v656
      %1027 = vmatpush1.bf16.msra.mxu0 %v652
      %1028 = vmatprep.subr.bf16.mxu0 0
      %1029 = vmatpush2.bf16.msra.mxu0 0
      %1030 = vmatprep.subr.bf16.mxu0 0
      %1031 = vmatpush2.bf16.msra.mxu0 0
      %1032 = vmatprep.subr.bf16.mxu0 0
      %1033 = vmatpush2.bf16.msra.mxu0 0
      %1034 = vmatprep.subr.bf16.mxu0 0
      %1035 = vmatpush2.bf16.msra.mxu0 0
      %1036 = vmatprep.subr.bf16.mxu0 0
      %1037 = vmatpush2.bf16.msra.mxu0 0
      %1038 = vmatprep.subr.bf16.mxu0 0
      %1039 = vmatpush2.bf16.msra.mxu0 0
      %1040 = vmatprep.subr.bf16.mxu0 0
      %1041 = vmatpush2.bf16.msra.mxu0 0
      %1042 = vmatprep.subr.bf16.mxu0 0
      %1043 = vmatpush2.bf16.msra.mxu0 0
      %1044 = vmatprep.mubr.bf16.mxu0 0
      %1045 = vmatmul.mubr.bf16.gmra.mxu0 %v857
      %v1046 = vpop.f32.mrf.mxu0
      %v1047 = vadd.f32 %v853, %v1046
      %v1048 = vpop.f32.mrf.mxu0
      %v1049 = vadd.f32 %v853, %v1048
      %v1050 = vpop.f32.mrf.mxu0
      %v1051 = vpop.f32.mrf.mxu0
      %1052 = vdwg.mxu0
      %1053 = vmatprep.subr.bf16.mxu0 0
      %1054 = vmatpush1.bf16.msra.mxu0 0
      %1055 = vmatprep.subr.bf16.mxu0 %v887
      %1056 = vmatpush1.bf16.msra.mxu0 %v884
      %1057 = vmatprep.subr.bf16.mxu0 %v846
      %1058 = vmatpush1.bf16.msra.mxu0 %v842
      %1059 = vmatprep.subr.bf16.mxu0 %v806
      %1060 = vmatpush1.bf16.msra.mxu0 %v803
      %1061 = vmatprep.subr.bf16.mxu0 %v776
      %1062 = vmatpush1.bf16.msra.mxu0 %v772
      %1063 = vmatprep.subr.bf16.mxu0 %v736
      %1064 = vmatpush1.bf16.msra.mxu0 %v732
      %1065 = vmatprep.subr.bf16.mxu0 %v695
      %1066 = vmatpush1.bf16.msra.mxu0 %v692
      %1067 = vmatprep.subr.bf16.mxu0 %v664
      %1068 = vmatpush1.bf16.msra.mxu0 %v660
      %1069 = vmatprep.subr.bf16.mxu0 0
      %1070 = vmatpush2.bf16.msra.mxu0 0
      %1071 = vmatprep.subr.bf16.mxu0 0
      %1072 = vmatpush2.bf16.msra.mxu0 0
      %1073 = vmatprep.subr.bf16.mxu0 0
      %1074 = vmatpush2.bf16.msra.mxu0 0
      %1075 = vmatprep.subr.bf16.mxu0 0
      %1076 = vmatpush2.bf16.msra.mxu0 0
      %1077 = vmatprep.subr.bf16.mxu0 0
      %1078 = vmatpush2.bf16.msra.mxu0 0
      %1079 = vmatprep.subr.bf16.mxu0 0
      %1080 = vmatpush2.bf16.msra.mxu0 0
      %1081 = vmatprep.subr.bf16.mxu0 0
      %1082 = vmatpush2.bf16.msra.mxu0 0
      %1083 = vmatprep.subr.bf16.mxu0 0
      %1084 = vmatpush2.bf16.msra.mxu0 0
      %1085 = vmatprep.mubr.bf16.mxu0 0
      %1086 = vmatmul.mubr.bf16.gmra.mxu0 %v857
      %v1087 = vpop.f32.mrf.mxu0
      %v1088 = vadd.f32 %v853, %v1087
      %v1089 = vpop.f32.mrf.mxu0
      %v1090 = vadd.f32 %v853, %v1089
      %v1091 = vpop.f32.mrf.mxu0
      %v1092 = vpop.f32.mrf.mxu0
      %1093 = vdwg.mxu0
      %v1094 = vpack.c.bf16 %v924, %v924
      %v1095 = vpack.c.bf16 %v926, %v926
      %v1096 = vpack.c.bf16 %v965, %v965
      %v1097 = vpack.c.bf16 %v967, %v967
      %v1098 = vpack.c.bf16 %v1006, %v1006
      %v1099 = vpack.c.bf16 %v1008, %v1008
      %v1100 = vpack.c.bf16 %v1047, %v1047
      %v1101 = vpack.c.bf16 %v1049, %v1049
      %v1102 = vpack.c.bf16 %v1088, %v1088
      %v1103 = vpack.c.bf16 %v1090, %v1090
      %v1114 = vunpack.c.l.b16 %v1094
      %v1115 = vunpack.c.l.b16 %v1095
      %v1116 = vunpack.c.l.b16 %v1096
      %v1117 = vunpack.c.l.b16 %v1097
      %v1118 = vunpack.c.l.b16 %v1098
      %v1119 = vunpack.c.l.b16 %v1099
      %v1120 = vunpack.c.l.b16 %v1100
      %v1121 = vunpack.c.l.b16 %v1101
      %v1122 = vunpack.c.l.b16 %v1102
      %v1123 = vunpack.c.l.b16 %v1103
      %v1124 = vpack.c.b16 %v1115, %v1114
      %v1125 = vpack.c.b16 %v1117, %v1116
      %v1126 = vpack.c.b16 %v1119, %v1118
      %v1127 = vpack.c.b16 %v1121, %v1120
      %v1128 = vpack.c.b16 %v1123, %v1122
      %1129 = vrot.lane.b32.xlu0 %v1124, 35
      %v1130 = vpop.permute.xlu0 %1129
      %1131 = vrot.lane.b32.xlu0 %v1125, 35
      %v1132 = vpop.permute.xlu0 %1131
      %1133 = vrot.lane.b32.xlu0 %v1126, 35
      %v1134 = vpop.permute.xlu0 %1133
      %1135 = vrot.lane.b32.xlu0 %v1127, 35
      %v1136 = vpop.permute.xlu0 %1135
      %1137 = vrot.lane.b32.xlu0 %v1128, 35
      %v1138 = vpop.permute.xlu0 %1137
      %v1139 = vrot.slane %v1130, 4
      %v1140 = vrot.slane %v1132, 4
      %v1141 = vrot.slane %v1134, 4
      %v1142 = vrot.slane %v1136, 4
      %v1143 = vrot.slane %v1138, 4
      %vm1144 = vcmask 285696
      %v1145 = vsel %vm1144, %v1139, %v1130
      %vm1146 = vcmask 1043456
      %v1147 = vsel %vm1146, %v1139, %v1140
      %v1148 = vsel %vm1144, %v1147, %v1132
      %v1149 = vsel %vm1146, %v1140, %v1141
      %v1150 = vsel %vm1144, %v1149, %v1134
      %v1151 = vsel %vm1146, %v1141, %v1142
      %v1152 = vsel %vm1144, %v1151, %v1136
      %v1153 = vsel %vm1146, %v1142, %v1143
      %v1154 = vsel %vm1144, %v1153, %v1138
      %vm1160 = vcmask 1043736
      %vm1161 = vcmask 1047556
      %vm1162 = vmor %vm1161, %vm1160
      %1163 = vst.msk [vmem:[%s231] sm:$0xff] %vm1162, %v1145
      %1164 = vst [vmem:[%s231 + $0x8] sm:$0xff] %v1148
      %1165 = vst [vmem:[%s231 + $0x10] sm:$0xff] %v1150
      %1166 = vst [vmem:[%s231 + $0x18] sm:$0xff] %v1152
      %vm1167 = vcmask 318468
      %vm1168 = vmor %vm1167, %vm666
      %1169 = vst.msk [vmem:[%s231 + $0x20] sm:$0xff] %vm1168, %v1154
      %vm1170 = vcmask 281600
      %1171 = vst.msk [vmem:[%s231] sm:$0xf] %vm1170, 0
      %vm1172 = vcmask 601400
      %1173 = vst.msk [vmem:[%s231 + $0x24] sm:$0xf] %vm1172, 0
      %v1174 = vld [vmem:[%s3] sm:$0xff]
      %v1175 = vld [vmem:[%s3 + $0x8] sm:$0x3]
      %v1178 = vlaneseq
      %v1179 = vshrl.u32 %v1178, 7
      %v1180 = vsub.s32 0, %v1179
      %v1181 = vrot.slane %v1174, %v1180
      %v1182 = vlaneseq
      %v1183 = vshrl.u32 %v1182, 7
      %v1184 = vsub.s32 1, %v1183
      %v1185 = vrot.slane %v1174, %v1184
      %v1186 = vlaneseq
      %v1187 = vshrl.u32 %v1186, 7
      %v1188 = vsub.s32 2, %v1187
      %v1189 = vrot.slane %v1174, %v1188
      %v1190 = vlaneseq
      %v1191 = vshrl.u32 %v1190, 7
      %v1192 = vsub.s32 3, %v1191
      %v1193 = vrot.slane %v1174, %v1192
      %v1194 = vlaneseq
      %v1195 = vshrl.u32 %v1194, 7
      %v1196 = vsub.s32 4, %v1195
      %v1197 = vrot.slane %v1174, %v1196
      %v1198 = vlaneseq
      %v1199 = vshrl.u32 %v1198, 7
      %v1200 = vsub.s32 5, %v1199
      %v1201 = vrot.slane %v1174, %v1200
      %v1202 = vlaneseq
      %v1203 = vshrl.u32 %v1202, 7
      %v1204 = vsub.s32 6, %v1203
      %v1205 = vrot.slane %v1174, %v1204
      %v1206 = vlaneseq
      %v1207 = vshrl.u32 %v1206, 7
      %v1208 = vsub.s32 7, %v1207
      %v1209 = vrot.slane %v1174, %v1208
      %v1210 = vlaneseq
      %v1211 = vshrl.u32 %v1210, 7
      %v1212 = vsub.s32 0, %v1211
      %v1213 = vrot.slane %v1175, %v1212
      %v1214 = vlaneseq
      %v1215 = vshrl.u32 %v1214, 7
      %v1216 = vsub.s32 1, %v1215
      %v1217 = vrot.slane %v1175, %v1216
      %1218 = vrot.lane.b32.xlu0 %v1181, 93
      %v1219 = vpop.permute.xlu0 %1218
      %1220 = vrot.lane.b32.xlu0 %v1185, 93
      %v1221 = vpop.permute.xlu0 %1220
      %1222 = vrot.lane.b32.xlu0 %v1189, 93
      %v1223 = vpop.permute.xlu0 %1222
      %1224 = vrot.lane.b32.xlu0 %v1193, 93
      %v1225 = vpop.permute.xlu0 %1224
      %1226 = vrot.lane.b32.xlu0 %v1197, 93
      %v1227 = vpop.permute.xlu0 %1226
      %1228 = vrot.lane.b32.xlu0 %v1201, 93
      %v1229 = vpop.permute.xlu0 %1228
      %1230 = vrot.lane.b32.xlu0 %v1205, 93
      %v1231 = vpop.permute.xlu0 %1230
      %1232 = vrot.lane.b32.xlu0 %v1209, 93
      %v1233 = vpop.permute.xlu0 %1232
      %1234 = vrot.lane.b32.xlu0 %v1213, 93
      %v1235 = vpop.permute.xlu0 %1234
      %1236 = vrot.lane.b32.xlu0 %v1217, 93
      %v1237 = vpop.permute.xlu0 %1236
      %vm1238 = vcmask 760832
      %v1239 = vsel %vm1238, %v1219, %v1221
      %v1240 = vsel %vm1238, %v1221, %v1223
      %v1241 = vsel %vm1238, %v1223, %v1225
      %v1242 = vsel %vm1238, %v1225, %v1227
      %v1243 = vsel %vm1238, %v1227, %v1229
      %v1244 = vsel %vm1238, %v1229, %v1231
      %v1245 = vsel %vm1238, %v1231, %v1233
      %v1246 = vsel %vm1238, %v1233, %v1235
      %v1247 = vsel %vm1238, %v1235, %v1237
      %v1258 = vmul.f32 %v924, %v1239
      %v1259 = vmul.f32 %v926, %v1240
      %v1260 = vmul.f32 %v965, %v1241
      %v1261 = vmul.f32 %v967, %v1242
      %v1262 = vmul.f32 %v1006, %v1243
      %v1263 = vmul.f32 %v1008, %v1244
      %v1264 = vmul.f32 %v1047, %v1245
      %v1265 = vmul.f32 %v1049, %v1246
      %v1266 = vmul.f32 %v1088, %v1247
      %v1267 = vmul.f32 %v1090, %v1237
      %v1268 = vadd.f32 %v1258, %v1259
      %v1269 = vadd.f32 %v1268, %v1260
      %v1270 = vadd.f32 %v1269, %v1261
      %v1271 = vadd.f32 %v1270, %v1262
      %v1272 = vadd.f32 %v1271, %v1263
      %v1273 = vadd.f32 %v1272, %v1264
      %v1274 = vadd.f32 %v1273, %v1265
      %v1275 = vadd.f32 %v1274, %v1266
      %vm1276 = vcmask 31744
      %v1277 = vsel %vm1276, %v1267, 0.0
      %v1278 = vadd.f32 %v1275, %v1277
      %1279 = vadd.xlane.f32.xlu0 %v1278
      %v1280 = vpop.xlane.xlu0 %1279
      %v1281 = vmul.f32 %v1258, %v924
      %v1282 = vmul.f32 %v1259, %v926
      %v1283 = vmul.f32 %v1260, %v965
      %v1284 = vmul.f32 %v1261, %v967
      %v1285 = vmul.f32 %v1262, %v1006
      %v1286 = vmul.f32 %v1263, %v1008
      %v1287 = vmul.f32 %v1264, %v1047
      %v1288 = vmul.f32 %v1265, %v1049
      %v1289 = vmul.f32 %v1266, %v1088
      %v1290 = vmul.f32 %v1267, %v1090
      %v1291 = vadd.f32 %v1281, %v1282
      %v1292 = vadd.f32 %v1291, %v1283
      %v1293 = vadd.f32 %v1292, %v1284
      %v1294 = vadd.f32 %v1293, %v1285
      %v1295 = vadd.f32 %v1294, %v1286
      %v1296 = vadd.f32 %v1295, %v1287
      %v1297 = vadd.f32 %v1296, %v1288
      %v1298 = vadd.f32 %v1297, %v1289
      %v1299 = vsel %vm1276, %v1290, 0.0
      %v1300 = vadd.f32 %v1298, %v1299
      %1301 = vadd.xlane.f32.xlu0 %v1300
      %v1302 = vpop.xlane.xlu0 %1301
      %vm1303 = vcmask 7168
      %v1304 = vsel %vm1303, %v1280, %v1302
      %vm1305 = vcmask 15360
      %1306 = vst.msk [vmem:[%s235] sm:$0xff] %vm1305, %v1304
      %p1307 = scmp.lt.s32.totalorder %s17, 1
      %s1308 = scalar_select %p1307, %s17, 1
      %s1309 = smul.addr %s1308, 10
      %s1310 = smul.addr %s1309, 4
      %s1311 = scalar_lea.vmem %s4, %s1310
      %p1312 = scmp.lt.s32.totalorder %s17, 1
      %s1313 = scalar_select %p1312, %s17, 1
      %s1314 = smul.addr %s1313, 8
      %s1315 = scalar_lea.vmem %s5, %s1314
      // Predicated region
      $region37: #{upsample_block_forward.5} parent=35 // pred_check
        %p1316 = pneg %p124
      $region38: #{upsample_block_forward.5} parent=35 // pred_check_branch
        %1318 = sbr.rel (%p1316) target = $region40
      $region39: #{upsample_block_forward.5} parent=35 // pred_region
        _
      $region40: #{upsample_block_forward.5} parent=35 // pred_fallthru
        _
      // Predicated region
      $region41: #{upsample_block_forward.5} parent=35 // pred_check
        %p1319 = pneg %p150
      $region42: #{upsample_block_forward.5} parent=35 // pred_check_branch
        %1321 = sbr.rel (%p1319) target = $region44
      $region43: #{upsample_block_forward.5} parent=35 // pred_region
        _
      $region44: #{upsample_block_forward.5} parent=35 // pred_fallthru
        _
    $region36: #{upsample_block_forward.5} parent=5 // pred_fallthru
      _
    %p1322 = scmp.le.s32.totalorder 2, %s12
    // Predicated region
    $region45: #{upsample_block_forward.5} parent=5 // pred_check
      %p1323 = pneg %p1322
    $region46: #{upsample_block_forward.5} parent=5 // pred_check_branch
      %1325 = sbr.rel (%p1323) target = $region48
    $region47: #{upsample_block_forward.5} parent=5 // pred_region
      %s1326 = ssub.s32 %s12, 2
      // Predicated region
      $region49: #{upsample_block_forward.5} parent=47 // pred_check
        %p1327 = pneg %p130
      $region50: #{upsample_block_forward.5} parent=47 // pred_check_branch
        %1329 = sbr.rel (%p1327) target = $region52
      $region51: #{upsample_block_forward.5} parent=47 // pred_region
        %p1330 = scmp.lt.s32.totalorder %s18, 1
        %s1331 = scalar_select %p1330, %s18, 1
        %s1332 = smul.addr %s1331, 10
        %s1333 = smul.addr %s1332, 4
        %s1334 = scalar_lea.vmem %s4, %s1333
      $region52: #{upsample_block_forward.5} parent=47 // pred_fallthru
        _
      // Predicated region
      $region53: #{upsample_block_forward.5} parent=47 // pred_check
        %p1335 = pneg %p156
      $region54: #{upsample_block_forward.5} parent=47 // pred_check_branch
        %1337 = sbr.rel (%p1335) target = $region56
      $region55: #{upsample_block_forward.5} parent=47 // pred_region
        %p1338 = scmp.lt.s32.totalorder %s18, 1
        %s1339 = scalar_select %p1338, %s18, 1
        %s1340 = smul.addr %s1339, 8
        %s1341 = scalar_lea.vmem %s5, %s1340
      $region56: #{upsample_block_forward.5} parent=47 // pred_fallthru
        _
    $region48: #{upsample_block_forward.5} parent=5 // pred_fallthru
      _
  $region6: #{upsample_block_forward.5} parent=0 // loop_footer
    %s16 = sadd.s32 1, %s12
  $region7: #{upsample_block_forward.5} parent=0 // loop_footer_branch
    %11 = sbr.rel target = $region3
  $region8: #{upsample_block_forward.5} parent=0 // loop_exit
    _

// kernel: upsample_block_forward.7
$region0: #{upsample_block_forward.7}
  #allocation0 [shape = 'u32[]', space=smem, size = 0x4, offset = 0x4, fixed_abs, tag = 'smem constant byte address 0x4 - core index']
  #allocation1 [shape = 'u32[144,128]{1,0:T(1,128)}', space=vmem, size = 0x12000, scoped, tag = 'internal scratch']
  %s0 = inlined_call_operand.vmem [shape: bf16[2,8,1156], index: 0, kind: input, shape index: {}]
  %s1 = inlined_call_operand.vmem [shape: f32[8,1], index: 1, kind: input, shape index: {}]
  %s2 = inlined_call_operand.vmem [shape: f32[8,1], index: 2, kind: input, shape index: {}]
  %s3 = inlined_call_operand.vmem [shape: f32[2,8,1156], index: 3, kind: output, shape index: {}]
  %s4 = sld [smem:[#allocation0]]
  $region45: #{upsample_block_forward.7} parent=0
    _
  %s6 = ssub.s32 1, %s4
  %s7 = scalar_select 0, %s6, %s4
  loop: start=0, step=1, limit=4
  $region2: #{upsample_block_forward.7} parent=0 // loop_pre_header
    _
  $region3: #{upsample_block_forward.7} parent=0 // loop_header
    %s9 = sphi 0, %s13
    %p10 = scmp.ge.s32.totalorder %s9, 4
    %s19 = sphi 0, %s21
    %s22 = sphi 0, %s19
    %s23 = sphi 0, %s22
    %s39 = sphi 0, %s23
    %s43 = sphi 0, %s43
    %s45 = sphi 0, %s43
    %s46 = sphi 0, %s45
    %s60 = sphi 0, %s46
    %s64 = sphi 0, %s64
    %s66 = sphi 0, %s64
    %s67 = sphi 0, %s66
    %s81 = sphi 0, %s67
    %s87 = sphi 0, %s89
    %s90 = sphi 0, %s87
    %s91 = sphi 0, %s90
    %s107 = sphi 0, %s91
  $region4: #{upsample_block_forward.7} parent=0 // loop_header_branch
    %12 = sbr.rel (%p10) target = $region8
  $region5: #{upsample_block_forward.7} parent=0 // loop_body
    %s14 = ssub.s32 %s9, 1
    %s15 = ssub.s32 %s9, 2
    %s16 = sadd.s32 %s9, 1
    %s17 = ssub.s32 %s9, %s16
    %p18 = scmp.eq.s32.totalorder %s17, 0
    %s20 = sadd.s32 %s19, 1
    %s21 = scalar_select %p18, %s19, %s20
    %p24 = pneg %p18
    %p25 = scmp.eq.s32.totalorder %s9, 1
    %p26 = por %p24, %p25
    %p27 = scmp.ne.s32.totalorder %s19, %s22
    %p28 = scmp.eq.s32.totalorder %s9, 0
    %p29 = por %p27, %p28
    %p30 = scmp.ne.s32.totalorder %s19, %s22
    %p31 = scmp.eq.s32.totalorder %s14, 1
    %p32 = por %p30, %p31
    %p33 = scmp.ne.s32.totalorder %s22, %s23
    %p34 = scmp.eq.s32.totalorder %s14, 0
    %p35 = por %p33, %p34
    %p36 = scmp.ne.s32.totalorder %s22, %s23
    %p37 = scmp.eq.s32.totalorder %s15, 1
    %p38 = por %p36, %p37
    %p40 = scmp.ne.s32.totalorder %s23, %s39
    %p41 = scmp.eq.s32.totalorder %s15, 0
    %p42 = por %p40, %p41
    %s44 = sadd.s32 %s43, 1
    %p47 = scmp.eq.s32.totalorder %s9, 1
    %p48 = scmp.ne.s32.totalorder %s43, %s45
    %p49 = scmp.eq.s32.totalorder %s9, 0
    %p50 = por %p48, %p49
    %p51 = scmp.ne.s32.totalorder %s43, %s45
    %p52 = scmp.eq.s32.totalorder %s14, 1
    %p53 = por %p51, %p52
    %p54 = scmp.ne.s32.totalorder %s45, %s46
    %p55 = scmp.eq.s32.totalorder %s14, 0
    %p56 = por %p54, %p55
    %p57 = scmp.ne.s32.totalorder %s45, %s46
    %p58 = scmp.eq.s32.totalorder %s15, 1
    %p59 = por %p57, %p58
    %p61 = scmp.ne.s32.totalorder %s46, %s60
    %p62 = scmp.eq.s32.totalorder %s15, 0
    %p63 = por %p61, %p62
    %s65 = sadd.s32 %s64, 1
    %p68 = scmp.eq.s32.totalorder %s9, 1
    %p69 = scmp.ne.s32.totalorder %s64, %s66
    %p70 = scmp.eq.s32.totalorder %s9, 0
    %p71 = por %p69, %p70
    %p72 = scmp.ne.s32.totalorder %s64, %s66
    %p73 = scmp.eq.s32.totalorder %s14, 1
    %p74 = por %p72, %p73
    %p75 = scmp.ne.s32.totalorder %s66, %s67
    %p76 = scmp.eq.s32.totalorder %s14, 0
    %p77 = por %p75, %p76
    %p78 = scmp.ne.s32.totalorder %s66, %s67
    %p79 = scmp.eq.s32.totalorder %s15, 1
    %p80 = por %p78, %p79
    %p82 = scmp.ne.s32.totalorder %s67, %s81
    %p83 = scmp.eq.s32.totalorder %s15, 0
    %p84 = por %p82, %p83
    %s85 = ssub.s32 %s9, %s16
    %p86 = scmp.eq.s32.totalorder %s85, 0
    %s88 = sadd.s32 %s87, 1
    %s89 = scalar_select %p86, %s87, %s88
    %p92 = pneg %p86
    %p93 = scmp.eq.s32.totalorder %s9, 1
    %p94 = por %p92, %p93
    %p95 = scmp.ne.s32.totalorder %s87, %s90
    %p96 = scmp.eq.s32.totalorder %s9, 0
    %p97 = por %p95, %p96
    %p98 = scmp.ne.s32.totalorder %s87, %s90
    %p99 = scmp.eq.s32.totalorder %s14, 1
    %p100 = por %p98, %p99
    %p101 = scmp.ne.s32.totalorder %s90, %s91
    %p102 = scmp.eq.s32.totalorder %s14, 0
    %p103 = por %p101, %p102
    %p104 = scmp.ne.s32.totalorder %s90, %s91
    %p105 = scmp.eq.s32.totalorder %s15, 1
    %p106 = por %p104, %p105
    %p108 = scmp.ne.s32.totalorder %s91, %s107
    %p109 = scmp.eq.s32.totalorder %s15, 0
    %p110 = por %p108, %p109
    %p111 = scmp.le.s32.totalorder 1, %s9
    %p112 = scmp.lt.s32.totalorder %s9, 3
    %p113 = pnand %p111, %p112
    %p114 = pneg %p113
    // Predicated region
    $region9: #{upsample_block_forward.7} parent=5 // pred_check
      _
    $region10: #{upsample_block_forward.7} parent=5 // pred_check_branch
      %116 = sbr.rel (%p113) target = $region12
    $region11: #{upsample_block_forward.7} parent=5 // pred_region
      %s117 = ssub.s32 %s9, 1
      // Predicated region
      $region13: #{upsample_block_forward.7} parent=11 // pred_check
        %p118 = pneg %p56
      $region14: #{upsample_block_forward.7} parent=11 // pred_check_branch
        %120 = sbr.rel (%p118) target = $region16
      $region15: #{upsample_block_forward.7} parent=11 // pred_region
        _
      $region16: #{upsample_block_forward.7} parent=11 // pred_fallthru
        _
      // Predicated region
      $region17: #{upsample_block_forward.7} parent=11 // pred_check
        %p121 = pneg %p77
      $region18: #{upsample_block_forward.7} parent=11 // pred_check_branch
        %123 = sbr.rel (%p121) target = $region20
      $region19: #{upsample_block_forward.7} parent=11 // pred_region
        _
      $region20: #{upsample_block_forward.7} parent=11 // pred_fallthru
        _
    $region12: #{upsample_block_forward.7} parent=5 // pred_fallthru
      _
    %p124 = scmp.lt.s32.totalorder %s9, 2
    // Predicated region
    $region21: #{upsample_block_forward.7} parent=5 // pred_check
      %p125 = pneg %p124
    $region22: #{upsample_block_forward.7} parent=5 // pred_check_branch
      %127 = sbr.rel (%p125) target = $region24
    $region23: #{upsample_block_forward.7} parent=5 // pred_region
      // Predicated region
      $region25: #{upsample_block_forward.7} parent=23 // pred_check
        %p128 = pneg %p29
      $region26: #{upsample_block_forward.7} parent=23 // pred_check_branch
        %130 = sbr.rel (%p128) target = $region28
      $region27: #{upsample_block_forward.7} parent=23 // pred_region
        %p131 = scmp.lt.s32.totalorder %s9, 1
        %s132 = scalar_select %p131, %s9, 1
        %s133 = smul.addr %s132, 10
        %s134 = smul.addr %s133, 4
        %s135 = scalar_lea.vmem %s0, %s134
      $region28: #{upsample_block_forward.7} parent=23 // pred_fallthru
        _
    $region24: #{upsample_block_forward.7} parent=5 // pred_fallthru
      _
    %p136 = scmp.le.s32.totalorder 1, %s9
    %p137 = scmp.lt.s32.totalorder %s9, 3
    %p138 = pnand %p136, %p137
    %p139 = pneg %p138
    // Predicated region
    $region29: #{upsample_block_forward.7} parent=5 // pred_check
      _
    $region30: #{upsample_block_forward.7} parent=5 // pred_check_branch
      %141 = sbr.rel (%p138) target = $region32
    $region31: #{upsample_block_forward.7} parent=5 // pred_region
      %s142 = ssub.s32 %s9, 1
      %p143 = scmp.lt.s32.totalorder %s14, 1
      %s144 = scalar_select %p143, %s14, 1
      %s145 = smul.addr %s144, 10
      %s146 = smul.addr %s145, 4
      %s147 = scalar_lea.vmem %s0, %s146
      %p148 = pneg %p35
      %p149 = pneg %p32
      %p150 = pneg %p56
      %p151 = pneg %p53
      %p152 = pneg %p77
      %p153 = pneg %p74
      %p154 = pneg %p103
      %p155 = pneg %p100
      %p156 = scmp.lt.s32.totalorder %s14, 1
      %s157 = scalar_select %p156, %s14, 1
      %s158 = smul.addr %s157, 10
      %s159 = smul.addr %s158, 8
      %s160 = scalar_lea.vmem %s3, %s159
      %p161 = scmp.lt.s32.totalorder %s14, 1
      %s162 = scalar_select %p161, %s14, 1
      %s163 = smul.addr %s162, 10
      %s164 = smul.addr %s163, 4
      %s165 = scalar_lea.vmem %s0, %s164
      %p166 = scmp.lt.s32.totalorder %s14, 1
      %s167 = scalar_select %p166, %s14, 1
      %s168 = smul.addr %s167, 10
      %s169 = smul.addr %s168, 8
      %s170 = scalar_lea.vmem %s3, %s169
      %v171 = vld [vmem:[%s165] sm:$0xff]
      %v172 = vld [vmem:[%s165 + $0x8] sm:$0xff]
      %v173 = vld [vmem:[%s165 + $0x10] sm:$0xff]
      %v174 = vld [vmem:[%s165 + $0x18] sm:$0xff]
      %v175 = vld [vmem:[%s165 + $0x20] sm:$0xff]
      %v176 = vunpack.c.l.bf16 %v171
      %v177 = vunpack.c.h.bf16 %v171
      %v178 = vunpack.c.l.bf16 %v172
      %v179 = vunpack.c.h.bf16 %v172
      %v180 = vunpack.c.l.bf16 %v173
      %v181 = vunpack.c.h.bf16 %v173
      %v182 = vunpack.c.l.bf16 %v174
      %v183 = vunpack.c.h.bf16 %v174
      %v184 = vunpack.c.l.bf16 %v175
      %v185 = vunpack.c.h.bf16 %v175
      %v186 = vld [vmem:[%s1] sm:$0xff]
      %188 = vset.pattern.permute.xlu0 0
      %189 = vperm.xlu0 %188, %v186
      %v190 = vpop.permute.xlu0 %189
      %v192 = vmul.f32 %v176, %v190
      %v193 = vmul.f32 %v177, %v190
      %v194 = vmul.f32 %v178, %v190
      %v195 = vmul.f32 %v179, %v190
      %v196 = vmul.f32 %v180, %v190
      %v197 = vmul.f32 %v181, %v190
      %v198 = vmul.f32 %v182, %v190
      %v199 = vmul.f32 %v183, %v190
      %v200 = vmul.f32 %v184, %v190
      %v201 = vmul.f32 %v185, %v190
      %v202 = vld [vmem:[%s2] sm:$0xff]
      %204 = vset.pattern.permute.xlu0 0
      %205 = vperm.xlu0 %204, %v202
      %v206 = vpop.permute.xlu0 %205
      %v208 = vadd.f32 %v192, %v206
      %v209 = vadd.f32 %v193, %v206
      %v210 = vadd.f32 %v194, %v206
      %v211 = vadd.f32 %v195, %v206
      %v212 = vadd.f32 %v196, %v206
      %v213 = vadd.f32 %v197, %v206
      %v214 = vadd.f32 %v198, %v206
      %v215 = vadd.f32 %v199, %v206
      %v216 = vadd.f32 %v200, %v206
      %v217 = vadd.f32 %v201, %v206
      %v218 = vmax.f32 %v208, 0.0
      %v219 = vmax.f32 %v209, 0.0
      %v220 = vmax.f32 %v210, 0.0
      %v221 = vmax.f32 %v211, 0.0
      %v222 = vmax.f32 %v212, 0.0
      %v223 = vmax.f32 %v213, 0.0
      %v224 = vmax.f32 %v214, 0.0
      %v225 = vmax.f32 %v215, 0.0
      %v226 = vmax.f32 %v216, 0.0
      %v227 = vmax.f32 %v217, 0.0
      %228 = vst [vmem:[%s170] sm:$0xff] %v218
      %229 = vst [vmem:[%s170 + $0x8] sm:$0xff] %v219
      %230 = vst [vmem:[%s170 + $0x10] sm:$0xff] %v220
      %231 = vst [vmem:[%s170 + $0x18] sm:$0xff] %v221
      %232 = vst [vmem:[%s170 + $0x20] sm:$0xff] %v222
      %233 = vst [vmem:[%s170 + $0x28] sm:$0xff] %v223
      %234 = vst [vmem:[%s170 + $0x30] sm:$0xff] %v224
      %235 = vst [vmem:[%s170 + $0x38] sm:$0xff] %v225
      %236 = vst [vmem:[%s170 + $0x40] sm:$0xff] %v226
      %vm237 = vcmask 31744
      %238 = vst.msk [vmem:[%s170 + $0x48] sm:$0xff] %vm237, %v227
      %p239 = scmp.lt.s32.totalorder %s14, 1
      %s240 = scalar_select %p239, %s14, 1
      %s241 = smul.addr %s240, 10
      %s242 = smul.addr %s241, 8
      %s243 = scalar_lea.vmem %s3, %s242
      // Predicated region
      $region33: #{upsample_block_forward.7} parent=31 // pred_check
        %p244 = pneg %p100
      $region34: #{upsample_block_forward.7} parent=31 // pred_check_branch
        %246 = sbr.rel (%p244) target = $region36
      $region35: #{upsample_block_forward.7} parent=31 // pred_region
        _
      $region36: #{upsample_block_forward.7} parent=31 // pred_fallthru
        _
    $region32: #{upsample_block_forward.7} parent=5 // pred_fallthru
      _
    %p247 = scmp.le.s32.totalorder 2, %s9
    // Predicated region
    $region37: #{upsample_block_forward.7} parent=5 // pred_check
      %p248 = pneg %p247
    $region38: #{upsample_block_forward.7} parent=5 // pred_check_branch
      %250 = sbr.rel (%p248) target = $region40
    $region39: #{upsample_block_forward.7} parent=5 // pred_region
      %s251 = ssub.s32 %s9, 2
      // Predicated region
      $region41: #{upsample_block_forward.7} parent=39 // pred_check
        %p252 = pneg %p106
      $region42: #{upsample_block_forward.7} parent=39 // pred_check_branch
        %254 = sbr.rel (%p252) target = $region44
      $region43: #{upsample_block_forward.7} parent=39 // pred_region
        %p255 = scmp.lt.s32.totalorder %s15, 1
        %s256 = scalar_select %p255, %s15, 1
        %s257 = smul.addr %s256, 10
        %s258 = smul.addr %s257, 8
        %s259 = scalar_lea.vmem %s3, %s258
      $region44: #{upsample_block_forward.7} parent=39 // pred_fallthru
        _
    $region40: #{upsample_block_forward.7} parent=5 // pred_fallthru
      _
  $region6: #{upsample_block_forward.7} parent=0 // loop_footer
    %s13 = sadd.s32 1, %s9
  $region7: #{upsample_block_forward.7} parent=0 // loop_footer_branch
    %8 = sbr.rel target = $region3
  $region8: #{upsample_block_forward.7} parent=0 // loop_exit
    _

// kernel: upsample_block_forward.6
$region0: #{upsample_block_forward.6}
  #allocation0 [shape = 'u32[]', space=smem, size = 0x4, offset = 0x4, fixed_abs, tag = 'smem constant byte address 0x4 - core index']
  #allocation1 [shape = 'u32[144,128]{1,0:T(1,128)}', space=vmem, size = 0x12000, scoped, tag = 'internal scratch']
  %s0 = inlined_call_operand.vmem [shape: bf16[2,8,1226], index: 0, kind: input, shape index: {}]
  %s1 = inlined_call_operand.vmem [shape: f32[8,1], index: 1, kind: input, shape index: {}]
  %s2 = inlined_call_operand.vmem [shape: f32[8,1], index: 2, kind: input, shape index: {}]
  %s3 = inlined_call_operand.vmem [shape: bf16[8,72], index: 3, kind: input, shape index: {}]
  %s4 = inlined_call_operand.vmem [shape: f32[8,1], index: 4, kind: input, shape index: {}]
  %s5 = inlined_call_operand.vmem [shape: f32[1,1226], index: 5, kind: input, shape index: {}]
  %s6 = inlined_call_operand.vmem [shape: bf16[2,8,1156], index: 6, kind: output, shape index: {0}]
  %s7 = inlined_call_operand.vmem [shape: f32[2,8,2], index: 7, kind: output, shape index: {1}]
  %8 = xla_tuple %s6, %s7
  %s9 = sld [smem:[#allocation0]]
  $region65: #{upsample_block_forward.6} parent=0
    _
  %s11 = ssub.s32 1, %s9
  %s12 = scalar_select 0, %s11, %s9
  loop: start=0, step=1, limit=4
  $region2: #{upsample_block_forward.6} parent=0 // loop_pre_header
    _
  $region3: #{upsample_block_forward.6} parent=0 // loop_header
    %s14 = sphi 0, %s18
    %p15 = scmp.ge.s32.totalorder %s14, 4
    %s24 = sphi 0, %s26
    %s27 = sphi 0, %s24
    %s28 = sphi 0, %s27
    %s44 = sphi 0, %s28
    %s48 = sphi 0, %s48
    %s50 = sphi 0, %s48
    %s51 = sphi 0, %s50
    %s65 = sphi 0, %s51
    %s69 = sphi 0, %s69
    %s71 = sphi 0, %s69
    %s72 = sphi 0, %s71
    %s86 = sphi 0, %s72
    %s90 = sphi 0, %s90
    %s92 = sphi 0, %s90
    %s93 = sphi 0, %s92
    %s107 = sphi 0, %s93
    %s111 = sphi 0, %s111
    %s113 = sphi 0, %s111
    %s114 = sphi 0, %s113
    %s128 = sphi 0, %s114
    %s132 = sphi 0, %s132
    %s134 = sphi 0, %s132
    %s135 = sphi 0, %s134
    %s149 = sphi 0, %s135
    %s155 = sphi 0, %s157
    %s158 = sphi 0, %s155
    %s159 = sphi 0, %s158
    %s175 = sphi 0, %s159
    %s181 = sphi 0, %s183
    %s184 = sphi 0, %s181
    %s185 = sphi 0, %s184
    %s201 = sphi 0, %s185
  $region4: #{upsample_block_forward.6} parent=0 // loop_header_branch
    %17 = sbr.rel (%p15) target = $region8
  $region5: #{upsample_block_forward.6} parent=0 // loop_body
    %s19 = ssub.s32 %s14, 1
    %s20 = ssub.s32 %s14, 2
    %s21 = sadd.s32 %s14, 1
    %s22 = ssub.s32 %s14, %s21
    %p23 = scmp.eq.s32.totalorder %s22, 0
    %s25 = sadd.s32 %s24, 1
    %s26 = scalar_select %p23, %s24, %s25
    %p29 = pneg %p23
    %p30 = scmp.eq.s32.totalorder %s14, 1
    %p31 = por %p29, %p30
    %p32 = scmp.ne.s32.totalorder %s24, %s27
    %p33 = scmp.eq.s32.totalorder %s14, 0
    %p34 = por %p32, %p33
    %p35 = scmp.ne.s32.totalorder %s24, %s27
    %p36 = scmp.eq.s32.totalorder %s19, 1
    %p37 = por %p35, %p36
    %p38 = scmp.ne.s32.totalorder %s27, %s28
    %p39 = scmp.eq.s32.totalorder %s19, 0
    %p40 = por %p38, %p39
    %p41 = scmp.ne.s32.totalorder %s27, %s28
    %p42 = scmp.eq.s32.totalorder %s20, 1
    %p43 = por %p41, %p42
    %p45 = scmp.ne.s32.totalorder %s28, %s44
    %p46 = scmp.eq.s32.totalorder %s20, 0
    %p47 = por %p45, %p46
    %s49 = sadd.s32 %s48, 1
    %p52 = scmp.eq.s32.totalorder %s14, 1
    %p53 = scmp.ne.s32.totalorder %s48, %s50
    %p54 = scmp.eq.s32.totalorder %s14, 0
    %p55 = por %p53, %p54
    %p56 = scmp.ne.s32.totalorder %s48, %s50
    %p57 = scmp.eq.s32.totalorder %s19, 1
    %p58 = por %p56, %p57
    %p59 = scmp.ne.s32.totalorder %s50, %s51
    %p60 = scmp.eq.s32.totalorder %s19, 0
    %p61 = por %p59, %p60
    %p62 = scmp.ne.s32.totalorder %s50, %s51
    %p63 = scmp.eq.s32.totalorder %s20, 1
    %p64 = por %p62, %p63
    %p66 = scmp.ne.s32.totalorder %s51, %s65
    %p67 = scmp.eq.s32.totalorder %s20, 0
    %p68 = por %p66, %p67
    %s70 = sadd.s32 %s69, 1
    %p73 = scmp.eq.s32.totalorder %s14, 1
    %p74 = scmp.ne.s32.totalorder %s69, %s71
    %p75 = scmp.eq.s32.totalorder %s14, 0
    %p76 = por %p74, %p75
    %p77 = scmp.ne.s32.totalorder %s69, %s71
    %p78 = scmp.eq.s32.totalorder %s19, 1
    %p79 = por %p77, %p78
    %p80 = scmp.ne.s32.totalorder %s71, %s72
    %p81 = scmp.eq.s32.totalorder %s19, 0
    %p82 = por %p80, %p81
    %p83 = scmp.ne.s32.totalorder %s71, %s72
    %p84 = scmp.eq.s32.totalorder %s20, 1
    %p85 = por %p83, %p84
    %p87 = scmp.ne.s32.totalorder %s72, %s86
    %p88 = scmp.eq.s32.totalorder %s20, 0
    %p89 = por %p87, %p88
    %s91 = sadd.s32 %s90, 1
    %p94 = scmp.eq.s32.totalorder %s14, 1
    %p95 = scmp.ne.s32.totalorder %s90, %s92
    %p96 = scmp.eq.s32.totalorder %s14, 0
    %p97 = por %p95, %p96
    %p98 = scmp.ne.s32.totalorder %s90, %s92
    %p99 = scmp.eq.s32.totalorder %s19, 1
    %p100 = por %p98, %p99
    %p101 = scmp.ne.s32.totalorder %s92, %s93
    %p102 = scmp.eq.s32.totalorder %s19, 0
    %p103 = por %p101, %p102
    %p104 = scmp.ne.s32.totalorder %s92, %s93
    %p105 = scmp.eq.s32.totalorder %s20, 1
    %p106 = por %p104, %p105
    %p108 = scmp.ne.s32.totalorder %s93, %s107
    %p109 = scmp.eq.s32.totalorder %s20, 0
    %p110 = por %p108, %p109
    %s112 = sadd.s32 %s111, 1
    %p115 = scmp.eq.s32.totalorder %s14, 1
    %p116 = scmp.ne.s32.totalorder %s111, %s113
    %p117 = scmp.eq.s32.totalorder %s14, 0
    %p118 = por %p116, %p117
    %p119 = scmp.ne.s32.totalorder %s111, %s113
    %p120 = scmp.eq.s32.totalorder %s19, 1
    %p121 = por %p119, %p120
    %p122 = scmp.ne.s32.totalorder %s113, %s114
    %p123 = scmp.eq.s32.totalorder %s19, 0
    %p124 = por %p122, %p123
    %p125 = scmp.ne.s32.totalorder %s113, %s114
    %p126 = scmp.eq.s32.totalorder %s20, 1
    %p127 = por %p125, %p126
    %p129 = scmp.ne.s32.totalorder %s114, %s128
    %p130 = scmp.eq.s32.totalorder %s20, 0
    %p131 = por %p129, %p130
    %s133 = sadd.s32 %s132, 1
    %p136 = scmp.eq.s32.totalorder %s14, 1
    %p137 = scmp.ne.s32.totalorder %s132, %s134
    %p138 = scmp.eq.s32.totalorder %s14, 0
    %p139 = por %p137, %p138
    %p140 = scmp.ne.s32.totalorder %s132, %s134
    %p141 = scmp.eq.s32.totalorder %s19, 1
    %p142 = por %p140, %p141
    %p143 = scmp.ne.s32.totalorder %s134, %s135
    %p144 = scmp.eq.s32.totalorder %s19, 0
    %p145 = por %p143, %p144
    %p146 = scmp.ne.s32.totalorder %s134, %s135
    %p147 = scmp.eq.s32.totalorder %s20, 1
    %p148 = por %p146, %p147
    %p150 = scmp.ne.s32.totalorder %s135, %s149
    %p151 = scmp.eq.s32.totalorder %s20, 0
    %p152 = por %p150, %p151
    %s153 = ssub.s32 %s14, %s21
    %p154 = scmp.eq.s32.totalorder %s153, 0
    %s156 = sadd.s32 %s155, 1
    %s157 = scalar_select %p154, %s155, %s156
    %p160 = pneg %p154
    %p161 = scmp.eq.s32.totalorder %s14, 1
    %p162 = por %p160, %p161
    %p163 = scmp.ne.s32.totalorder %s155, %s158
    %p164 = scmp.eq.s32.totalorder %s14, 0
    %p165 = por %p163, %p164
    %p166 = scmp.ne.s32.totalorder %s155, %s158
    %p167 = scmp.eq.s32.totalorder %s19, 1
    %p168 = por %p166, %p167
    %p169 = scmp.ne.s32.totalorder %s158, %s159
    %p170 = scmp.eq.s32.totalorder %s19, 0
    %p171 = por %p169, %p170
    %p172 = scmp.ne.s32.totalorder %s158, %s159
    %p173 = scmp.eq.s32.totalorder %s20, 1
    %p174 = por %p172, %p173
    %p176 = scmp.ne.s32.totalorder %s159, %s175
    %p177 = scmp.eq.s32.totalorder %s20, 0
    %p178 = por %p176, %p177
    %s179 = ssub.s32 %s14, %s21
    %p180 = scmp.eq.s32.totalorder %s179, 0
    %s182 = sadd.s32 %s181, 1
    %s183 = scalar_select %p180, %s181, %s182
    %p186 = pneg %p180
    %p187 = scmp.eq.s32.totalorder %s14, 1
    %p188 = por %p186, %p187
    %p189 = scmp.ne.s32.totalorder %s181, %s184
    %p190 = scmp.eq.s32.totalorder %s14, 0
    %p191 = por %p189, %p190
    %p192 = scmp.ne.s32.totalorder %s181, %s184
    %p193 = scmp.eq.s32.totalorder %s19, 1
    %p194 = por %p192, %p193
    %p195 = scmp.ne.s32.totalorder %s184, %s185
    %p196 = scmp.eq.s32.totalorder %s19, 0
    %p197 = por %p195, %p196
    %p198 = scmp.ne.s32.totalorder %s184, %s185
    %p199 = scmp.eq.s32.totalorder %s20, 1
    %p200 = por %p198, %p199
    %p202 = scmp.ne.s32.totalorder %s185, %s201
    %p203 = scmp.eq.s32.totalorder %s20, 0
    %p204 = por %p202, %p203
    %p205 = scmp.le.s32.totalorder 1, %s14
    %p206 = scmp.lt.s32.totalorder %s14, 3
    %p207 = pnand %p205, %p206
    %p208 = pneg %p207
    // Predicated region
    $region9: #{upsample_block_forward.6} parent=5 // pred_check
      _
    $region10: #{upsample_block_forward.6} parent=5 // pred_check_branch
      %210 = sbr.rel (%p207) target = $region12
    $region11: #{upsample_block_forward.6} parent=5 // pred_region
      %s211 = ssub.s32 %s14, 1
      // Predicated region
      $region13: #{upsample_block_forward.6} parent=11 // pred_check
        %p212 = pneg %p61
      $region14: #{upsample_block_forward.6} parent=11 // pred_check_branch
        %214 = sbr.rel (%p212) target = $region16
      $region15: #{upsample_block_forward.6} parent=11 // pred_region
        _
      $region16: #{upsample_block_forward.6} parent=11 // pred_fallthru
        _
      // Predicated region
      $region17: #{upsample_block_forward.6} parent=11 // pred_check
        %p215 = pneg %p82
      $region18: #{upsample_block_forward.6} parent=11 // pred_check_branch
        %217 = sbr.rel (%p215) target = $region20
      $region19: #{upsample_block_forward.6} parent=11 // pred_region
        _
      $region20: #{upsample_block_forward.6} parent=11 // pred_fallthru
        _
      // Predicated region
      $region21: #{upsample_block_forward.6} parent=11 // pred_check
        %p218 = pneg %p103
      $region22: #{upsample_block_forward.6} parent=11 // pred_check_branch
        %220 = sbr.rel (%p218) target = $region24
      $region23: #{upsample_block_forward.6} parent=11 // pred_region
        _
      $region24: #{upsample_block_forward.6} parent=11 // pred_fallthru
        _
      // Predicated region
      $region25: #{upsample_block_forward.6} parent=11 // pred_check
        %p221 = pneg %p124
      $region26: #{upsample_block_forward.6} parent=11 // pred_check_branch
        %223 = sbr.rel (%p221) target = $region28
      $region27: #{upsample_block_forward.6} parent=11 // pred_region
        _
      $region28: #{upsample_block_forward.6} parent=11 // pred_fallthru
        _
      // Predicated region
      $region29: #{upsample_block_forward.6} parent=11 // pred_check
        %p224 = pneg %p145
      $region30: #{upsample_block_forward.6} parent=11 // pred_check_branch
        %226 = sbr.rel (%p224) target = $region32
      $region31: #{upsample_block_forward.6} parent=11 // pred_region
        _
      $region32: #{upsample_block_forward.6} parent=11 // pred_fallthru
        _
    $region12: #{upsample_block_forward.6} parent=5 // pred_fallthru
      _
    %p227 = scmp.lt.s32.totalorder %s14, 2
    // Predicated region
    $region33: #{upsample_block_forward.6} parent=5 // pred_check
      %p228 = pneg %p227
    $region34: #{upsample_block_forward.6} parent=5 // pred_check_branch
      %230 = sbr.rel (%p228) target = $region36
    $region35: #{upsample_block_forward.6} parent=5 // pred_region
      // Predicated region
      $region37: #{upsample_block_forward.6} parent=35 // pred_check
        %p231 = pneg %p34
      $region38: #{upsample_block_forward.6} parent=35 // pred_check_branch
        %233 = sbr.rel (%p231) target = $region40
      $region39: #{upsample_block_forward.6} parent=35 // pred_region
        %p234 = scmp.lt.s32.totalorder %s14, 1
        %s235 = scalar_select %p234, %s14, 1
        %s236 = smul.addr %s235, 10
        %s237 = smul.addr %s236, 4
        %s238 = scalar_lea.vmem %s0, %s237
      $region40: #{upsample_block_forward.6} parent=35 // pred_fallthru
        _
    $region36: #{upsample_block_forward.6} parent=5 // pred_fallthru
      _
    %p239 = scmp.le.s32.totalorder 1, %s14
    %p240 = scmp.lt.s32.totalorder %s14, 3
    %p241 = pnand %p239, %p240
    %p242 = pneg %p241
    // Predicated region
    $region41: #{upsample_block_forward.6} parent=5 // pred_check
      _
    $region42: #{upsample_block_forward.6} parent=5 // pred_check_branch
      %244 = sbr.rel (%p241) target = $region44
    $region43: #{upsample_block_forward.6} parent=5 // pred_region
      %s245 = ssub.s32 %s14, 1
      %p246 = scmp.lt.s32.totalorder %s19, 1
      %s247 = scalar_select %p246, %s19, 1
      %s248 = smul.addr %s247, 10
      %s249 = smul.addr %s248, 4
      %s250 = scalar_lea.vmem %s0, %s249
      %p251 = pneg %p40
      %p252 = pneg %p37
      %p253 = pneg %p61
      %p254 = pneg %p58
      %p255 = pneg %p82
      %p256 = pneg %p79
      %p257 = pneg %p103
      %p258 = pneg %p100
      %p259 = pneg %p124
      %p260 = pneg %p121
      %p261 = pneg %p145
      %p262 = pneg %p142
      %p263 = pneg %p171
      %p264 = pneg %p168
      %p265 = scmp.lt.s32.totalorder %s19, 1
      %s266 = scalar_select %p265, %s19, 1
      %s267 = smul.addr %s266, 10
      %s268 = smul.addr %s267, 4
      %s269 = scalar_lea.vmem %s6, %s268
      %p270 = pneg %p197
      %p271 = pneg %p194
      %p272 = scmp.lt.s32.totalorder %s19, 1
      %s273 = scalar_select %p272, %s19, 1
      %s274 = smul.addr %s273, 8
      %s275 = scalar_lea.vmem %s7, %s274
      %p276 = scmp.lt.s32.totalorder %s19, 1
      %s277 = scalar_select %p276, %s19, 1
      %s278 = smul.addr %s277, 10
      %s279 = smul.addr %s278, 4
      %s280 = scalar_lea.vmem %s0, %s279
      %p281 = scmp.lt.s32.totalorder %s19, 1
      %s282 = scalar_select %p281, %s19, 1
      %s283 = smul.addr %s282, 10
      %s284 = smul.addr %s283, 4
      %s285 = scalar_lea.vmem %s6, %s284
      %p286 = scmp.lt.s32.totalorder %s19, 1
      %s287 = scalar_select %p286, %s19, 1
      %s288 = smul.addr %s287, 8
      %s289 = scalar_lea.vmem %s7, %s288
      %v291 = vld [vmem:[%s280] sm:$0xff]
      %v292 = vld [vmem:[%s280 + $0x8] sm:$0xff]
      %v293 = vld [vmem:[%s280 + $0x10] sm:$0xff]
      %v294 = vld [vmem:[%s280 + $0x18] sm:$0xff]
      %v295 = vld [vmem:[%s280 + $0x20] sm:$0xff]
      %v296 = vunpack.c.l.bf16 %v291
      %v297 = vunpack.c.h.bf16 %v291
      %v298 = vunpack.c.l.bf16 %v292
      %v299 = vunpack.c.h.bf16 %v292
      %v300 = vunpack.c.l.bf16 %v293
      %v301 = vunpack.c.h.bf16 %v293
      %v302 = vunpack.c.l.bf16 %v294
      %v303 = vunpack.c.h.bf16 %v294
      %v304 = vunpack.c.l.bf16 %v295
      %v305 = vunpack.c.h.bf16 %v295
      %v306 = vld [vmem:[%s5] sm:$0xff]
      %v307 = vld [vmem:[%s5 + $0x8] sm:$0x3]
      %v308 = vld [vmem:[%s1] sm:$0xff]
      %310 = vset.pattern.permute.xlu0 0
      %311 = vperm.xlu0 %310, %v308
      %v312 = vpop.permute.xlu0 %311
      %v314 = vmul.f32 %v296, %v312
      %v315 = vmul.f32 %v297, %v312
      %v316 = vmul.f32 %v298, %v312
      %v317 = vmul.f32 %v299, %v312
      %v318 = vmul.f32 %v300, %v312
      %v319 = vmul.f32 %v301, %v312
      %v320 = vmul.f32 %v302, %v312
      %v321 = vmul.f32 %v303, %v312
      %v322 = vmul.f32 %v304, %v312
      %v323 = vmul.f32 %v305, %v312
      %v324 = vld [vmem:[%s2] sm:$0xff]
      %326 = vset.pattern.permute.xlu0 0
      %327 = vperm.xlu0 %326, %v324
      %v328 = vpop.permute.xlu0 %327
      %v330 = vadd.f32 %v314, %v328
      %v331 = vadd.f32 %v315, %v328
      %v332 = vadd.f32 %v316, %v328
      %v333 = vadd.f32 %v317, %v328
      %v334 = vadd.f32 %v318, %v328
      %v335 = vadd.f32 %v319, %v328
      %v336 = vadd.f32 %v320, %v328
      %v337 = vadd.f32 %v321, %v328
      %v338 = vadd.f32 %v322, %v328
      %v339 = vadd.f32 %v323, %v328
      %v340 = vmax.f32 %v330, 0.0
      %v341 = vmax.f32 %v331, 0.0
      %v342 = vmax.f32 %v332, 0.0
      %v343 = vmax.f32 %v333, 0.0
      %v344 = vmax.f32 %v334, 0.0
      %v345 = vmax.f32 %v335, 0.0
      %v346 = vmax.f32 %v336, 0.0
      %v347 = vmax.f32 %v337, 0.0
      %v348 = vmax.f32 %v338, 0.0
      %v349 = vmax.f32 %v339, 0.0
      %v352 = vlaneseq
      %v353 = vshrl.u32 %v352, 7
      %v354 = vsub.s32 0, %v353
      %v355 = vrot.slane %v306, %v354
      %v356 = vlaneseq
      %v357 = vshrl.u32 %v356, 7
      %v358 = vsub.s32 1, %v357
      %v359 = vrot.slane %v306, %v358
      %v360 = vlaneseq
      %v361 = vshrl.u32 %v360, 7
      %v362 = vsub.s32 2, %v361
      %v363 = vrot.slane %v306, %v362
      %v364 = vlaneseq
      %v365 = vshrl.u32 %v364, 7
      %v366 = vsub.s32 3, %v365
      %v367 = vrot.slane %v306, %v366
      %v368 = vlaneseq
      %v369 = vshrl.u32 %v368, 7
      %v370 = vsub.s32 4, %v369
      %v371 = vrot.slane %v306, %v370
      %v372 = vlaneseq
      %v373 = vshrl.u32 %v372, 7
      %v374 = vsub.s32 5, %v373
      %v375 = vrot.slane %v306, %v374
      %v376 = vlaneseq
      %v377 = vshrl.u32 %v376, 7
      %v378 = vsub.s32 6, %v377
      %v379 = vrot.slane %v306, %v378
      %v380 = vlaneseq
      %v381 = vshrl.u32 %v380, 7
      %v382 = vsub.s32 7, %v381
      %v383 = vrot.slane %v306, %v382
      %v384 = vlaneseq
      %v385 = vshrl.u32 %v384, 7
      %v386 = vsub.s32 0, %v385
      %v387 = vrot.slane %v307, %v386
      %v388 = vlaneseq
      %v389 = vshrl.u32 %v388, 7
      %v390 = vsub.s32 1, %v389
      %v391 = vrot.slane %v307, %v390
      %v402 = vmul.f32 %v340, %v355
      %v403 = vmul.f32 %v341, %v359
      %v404 = vmul.f32 %v342, %v363
      %v405 = vmul.f32 %v343, %v367
      %v406 = vmul.f32 %v344, %v371
      %v407 = vmul.f32 %v345, %v375
      %v408 = vmul.f32 %v346, %v379
      %v409 = vmul.f32 %v347, %v383
      %v410 = vmul.f32 %v348, %v387
      %v411 = vmul.f32 %v349, %v391
      %v412 = vpack.c.bf16 %v402, %v402
      %v413 = vpack.c.bf16 %v403, %v403
      %v414 = vpack.c.bf16 %v404, %v404
      %v415 = vpack.c.bf16 %v405, %v405
      %v416 = vpack.c.bf16 %v406, %v406
      %v417 = vpack.c.bf16 %v407, %v407
      %v418 = vpack.c.bf16 %v408, %v408
      %v419 = vpack.c.bf16 %v409, %v409
      %v420 = vpack.c.bf16 %v410, %v410
      %v421 = vpack.c.bf16 %v411, %v411
      %v432 = vrot.slane %v412, 4
      %v433 = vrot.slane %v413, 4
      %v434 = vrot.slane %v414, 4
      %v435 = vrot.slane %v415, 4
      %v436 = vrot.slane %v416, 4
      %v437 = vrot.slane %v417, 4
      %v438 = vrot.slane %v418, 4
      %v439 = vrot.slane %v419, 4
      %v440 = vrot.slane %v420, 4
      %v441 = vrot.slane %v421, 4
      %442 = vrot.lane.b32.xlu0 %v432, 127
      %v443 = vpop.permute.xlu0 %442
      %444 = vrot.lane.b32.xlu0 %v433, 127
      %v445 = vpop.permute.xlu0 %444
      %446 = vrot.lane.b32.xlu0 %v434, 127
      %v447 = vpop.permute.xlu0 %446
      %448 = vrot.lane.b32.xlu0 %v435, 127
      %v449 = vpop.permute.xlu0 %448
      %450 = vrot.lane.b32.xlu0 %v436, 127
      %v451 = vpop.permute.xlu0 %450
      %452 = vrot.lane.b32.xlu0 %v437, 127
      %v453 = vpop.permute.xlu0 %452
      %454 = vrot.lane.b32.xlu0 %v438, 127
      %v455 = vpop.permute.xlu0 %454
      %456 = vrot.lane.b32.xlu0 %v439, 127
      %v457 = vpop.permute.xlu0 %456
      %458 = vrot.lane.b32.xlu0 %v440, 127
      %v459 = vpop.permute.xlu0 %458
      %460 = vrot.lane.b32.xlu0 %v441, 127
      %v461 = vpop.permute.xlu0 %460
      %vm462 = vcmask 1039360
      %v463 = vsel %vm462, %v443, %v445
      %v464 = vsel %vm462, %v445, %v447
      %v465 = vsel %vm462, %v447, %v449
      %v466 = vsel %vm462, %v449, %v451
      %v467 = vsel %vm462, %v451, %v453
      %v468 = vsel %vm462, %v453, %v455
      %v469 = vsel %vm462, %v455, %v457
      %v470 = vsel %vm462, %v457, %v459
      %v471 = vsel %vm462, %v459, %v461
      %472 = vrot.lane.b32.xlu0 %v412, 126
      %v473 = vpop.permute.xlu0 %472
      %474 = vrot.lane.b32.xlu0 %v413, 126
      %v475 = vpop.permute.xlu0 %474
      %476 = vrot.lane.b32.xlu0 %v414, 126
      %v477 = vpop.permute.xlu0 %476
      %478 = vrot.lane.b32.xlu0 %v415, 126
      %v479 = vpop.permute.xlu0 %478
      %480 = vrot.lane.b32.xlu0 %v416, 126
      %v481 = vpop.permute.xlu0 %480
      %482 = vrot.lane.b32.xlu0 %v417, 126
      %v483 = vpop.permute.xlu0 %482
      %484 = vrot.lane.b32.xlu0 %v418, 126
      %v485 = vpop.permute.xlu0 %484
      %486 = vrot.lane.b32.xlu0 %v419, 126
      %v487 = vpop.permute.xlu0 %486
      %488 = vrot.lane.b32.xlu0 %v420, 126
      %v489 = vpop.permute.xlu0 %488
      %490 = vrot.lane.b32.xlu0 %v421, 126
      %v491 = vpop.permute.xlu0 %490
      %vm492 = vcmask 1031168
      %v493 = vsel %vm492, %v473, %v475
      %v494 = vsel %vm492, %v475, %v477
      %v495 = vsel %vm492, %v477, %v479
      %v496 = vsel %vm492, %v479, %v481
      %v497 = vsel %vm492, %v481, %v483
      %v498 = vsel %vm492, %v483, %v485
      %v499 = vsel %vm492, %v485, %v487
      %v500 = vsel %vm492, %v487, %v489
      %v501 = vsel %vm492, %v489, %v491
      %502 = vrot.lane.b32.xlu0 %v432, 94
      %v503 = vpop.permute.xlu0 %502
      %504 = vrot.lane.b32.xlu0 %v433, 94
      %v505 = vpop.permute.xlu0 %504
      %506 = vrot.lane.b32.xlu0 %v434, 94
      %v507 = vpop.permute.xlu0 %506
      %508 = vrot.lane.b32.xlu0 %v435, 94
      %v509 = vpop.permute.xlu0 %508
      %510 = vrot.lane.b32.xlu0 %v436, 94
      %v511 = vpop.permute.xlu0 %510
      %512 = vrot.lane.b32.xlu0 %v437, 94
      %v513 = vpop.permute.xlu0 %512
      %514 = vrot.lane.b32.xlu0 %v438, 94
      %v515 = vpop.permute.xlu0 %514
      %516 = vrot.lane.b32.xlu0 %v439, 94
      %v517 = vpop.permute.xlu0 %516
      %518 = vrot.lane.b32.xlu0 %v440, 94
      %v519 = vpop.permute.xlu0 %518
      %520 = vrot.lane.b32.xlu0 %v441, 94
      %v521 = vpop.permute.xlu0 %520
      %vm522 = vcmask 769024
      %v523 = vsel %vm522, %v503, %v505
      %v524 = vsel %vm522, %v505, %v507
      %v525 = vsel %vm522, %v507, %v509
      %v526 = vsel %vm522, %v509, %v511
      %v527 = vsel %vm522, %v511, %v513
      %v528 = vsel %vm522, %v513, %v515
      %v529 = vsel %vm522, %v515, %v517
      %v530 = vsel %vm522, %v517, %v519
      %v531 = vsel %vm522, %v519, %v521
      %532 = vrot.lane.b32.xlu0 %v412, 93
      %v533 = vpop.permute.xlu0 %532
      %534 = vrot.lane.b32.xlu0 %v413, 93
      %v535 = vpop.permute.xlu0 %534
      %536 = vrot.lane.b32.xlu0 %v414, 93
      %v537 = vpop.permute.xlu0 %536
      %538 = vrot.lane.b32.xlu0 %v415, 93
      %v539 = vpop.permute.xlu0 %538
      %540 = vrot.lane.b32.xlu0 %v416, 93
      %v541 = vpop.permute.xlu0 %540
      %542 = vrot.lane.b32.xlu0 %v417, 93
      %v543 = vpop.permute.xlu0 %542
      %544 = vrot.lane.b32.xlu0 %v418, 93
      %v545 = vpop.permute.xlu0 %544
      %546 = vrot.lane.b32.xlu0 %v419, 93
      %v547 = vpop.permute.xlu0 %546
      %548 = vrot.lane.b32.xlu0 %v420, 93
      %v549 = vpop.permute.xlu0 %548
      %550 = vrot.lane.b32.xlu0 %v421, 93
      %v551 = vpop.permute.xlu0 %550
      %vm552 = vcmask 760832
      %v553 = vsel %vm552, %v533, %v535
      %v554 = vsel %vm552, %v535, %v537
      %v555 = vsel %vm552, %v537, %v539
      %v556 = vsel %vm552, %v539, %v541
      %v557 = vsel %vm552, %v541, %v543
      %v558 = vsel %vm552, %v543, %v545
      %v559 = vsel %vm552, %v545, %v547
      %v560 = vsel %vm552, %v547, %v549
      %v561 = vsel %vm552, %v549, %v551
      %562 = vrot.lane.b32.xlu0 %v432, 92
      %v563 = vpop.permute.xlu0 %562
      %564 = vrot.lane.b32.xlu0 %v433, 92
      %v565 = vpop.permute.xlu0 %564
      %566 = vrot.lane.b32.xlu0 %v434, 92
      %v567 = vpop.permute.xlu0 %566
      %568 = vrot.lane.b32.xlu0 %v435, 92
      %v569 = vpop.permute.xlu0 %568
      %570 = vrot.lane.b32.xlu0 %v436, 92
      %v571 = vpop.permute.xlu0 %570
      %572 = vrot.lane.b32.xlu0 %v437, 92
      %v573 = vpop.permute.xlu0 %572
      %574 = vrot.lane.b32.xlu0 %v438, 92
      %v575 = vpop.permute.xlu0 %574
      %576 = vrot.lane.b32.xlu0 %v439, 92
      %v577 = vpop.permute.xlu0 %576
      %578 = vrot.lane.b32.xlu0 %v440, 92
      %v579 = vpop.permute.xlu0 %578
      %580 = vrot.lane.b32.xlu0 %v441, 92
      %v581 = vpop.permute.xlu0 %580
      %vm582 = vcmask 752640
      %v583 = vsel %vm582, %v563, %v565
      %v584 = vsel %vm582, %v565, %v567
      %v585 = vsel %vm582, %v567, %v569
      %v586 = vsel %vm582, %v569, %v571
      %v587 = vsel %vm582, %v571, %v573
      %v588 = vsel %vm582, %v573, %v575
      %v589 = vsel %vm582, %v575, %v577
      %v590 = vsel %vm582, %v577, %v579
      %v591 = vsel %vm582, %v579, %v581
      %592 = vrot.lane.b32.xlu0 %v412, 60
      %v593 = vpop.permute.xlu0 %592
      %594 = vrot.lane.b32.xlu0 %v413, 60
      %v595 = vpop.permute.xlu0 %594
      %596 = vrot.lane.b32.xlu0 %v414, 60
      %v597 = vpop.permute.xlu0 %596
      %598 = vrot.lane.b32.xlu0 %v415, 60
      %v599 = vpop.permute.xlu0 %598
      %600 = vrot.lane.b32.xlu0 %v416, 60
      %v601 = vpop.permute.xlu0 %600
      %602 = vrot.lane.b32.xlu0 %v417, 60
      %v603 = vpop.permute.xlu0 %602
      %604 = vrot.lane.b32.xlu0 %v418, 60
      %v605 = vpop.permute.xlu0 %604
      %606 = vrot.lane.b32.xlu0 %v419, 60
      %v607 = vpop.permute.xlu0 %606
      %608 = vrot.lane.b32.xlu0 %v420, 60
      %v609 = vpop.permute.xlu0 %608
      %610 = vrot.lane.b32.xlu0 %v421, 60
      %v611 = vpop.permute.xlu0 %610
      %vm612 = vcmask 490496
      %v613 = vsel %vm612, %v593, %v595
      %v614 = vsel %vm612, %v595, %v597
      %v615 = vsel %vm612, %v597, %v599
      %v616 = vsel %vm612, %v599, %v601
      %v617 = vsel %vm612, %v601, %v603
      %v618 = vsel %vm612, %v603, %v605
      %v619 = vsel %vm612, %v605, %v607
      %v620 = vsel %vm612, %v607, %v609
      %v621 = vsel %vm612, %v609, %v611
      %622 = vrot.lane.b32.xlu0 %v432, 59
      %v623 = vpop.permute.xlu0 %622
      %624 = vrot.lane.b32.xlu0 %v433, 59
      %v625 = vpop.permute.xlu0 %624
      %626 = vrot.lane.b32.xlu0 %v434, 59
      %v627 = vpop.permute.xlu0 %626
      %628 = vrot.lane.b32.xlu0 %v435, 59
      %v629 = vpop.permute.xlu0 %628
      %630 = vrot.lane.b32.xlu0 %v436, 59
      %v631 = vpop.permute.xlu0 %630
      %632 = vrot.lane.b32.xlu0 %v437, 59
      %v633 = vpop.permute.xlu0 %632
      %634 = vrot.lane.b32.xlu0 %v438, 59
      %v635 = vpop.permute.xlu0 %634
      %636 = vrot.lane.b32.xlu0 %v439, 59
      %v637 = vpop.permute.xlu0 %636
      %638 = vrot.lane.b32.xlu0 %v440, 59
      %v639 = vpop.permute.xlu0 %638
      %640 = vrot.lane.b32.xlu0 %v441, 59
      %v641 = vpop.permute.xlu0 %640
      %vm642 = vcmask 482304
      %v643 = vsel %vm642, %v623, %v625
      %v644 = vsel %vm642, %v625, %v627
      %v645 = vsel %vm642, %v627, %v629
      %v646 = vsel %vm642, %v629, %v631
      %v647 = vsel %vm642, %v631, %v633
      %v648 = vsel %vm642, %v633, %v635
      %v649 = vsel %vm642, %v635, %v637
      %v650 = vsel %vm642, %v637, %v639
      %v651 = vsel %vm642, %v639, %v641
      %652 = vrot.lane.b32.xlu0 %v412, 58
      %v653 = vpop.permute.xlu0 %652
      %654 = vrot.lane.b32.xlu0 %v413, 58
      %v655 = vpop.permute.xlu0 %654
      %656 = vrot.lane.b32.xlu0 %v414, 58
      %v657 = vpop.permute.xlu0 %656
      %658 = vrot.lane.b32.xlu0 %v415, 58
      %v659 = vpop.permute.xlu0 %658
      %660 = vrot.lane.b32.xlu0 %v416, 58
      %v661 = vpop.permute.xlu0 %660
      %662 = vrot.lane.b32.xlu0 %v417, 58
      %v663 = vpop.permute.xlu0 %662
      %664 = vrot.lane.b32.xlu0 %v418, 58
      %v665 = vpop.permute.xlu0 %664
      %666 = vrot.lane.b32.xlu0 %v419, 58
      %v667 = vpop.permute.xlu0 %666
      %668 = vrot.lane.b32.xlu0 %v420, 58
      %v669 = vpop.permute.xlu0 %668
      %670 = vrot.lane.b32.xlu0 %v421, 58
      %v671 = vpop.permute.xlu0 %670
      %vm672 = vcmask 474112
      %v673 = vsel %vm672, %v653, %v655
      %v674 = vsel %vm672, %v655, %v657
      %v675 = vsel %vm672, %v657, %v659
      %v676 = vsel %vm672, %v659, %v661
      %v677 = vsel %vm672, %v661, %v663
      %v678 = vsel %vm672, %v663, %v665
      %v679 = vsel %vm672, %v665, %v667
      %v680 = vsel %vm672, %v667, %v669
      %v681 = vsel %vm672, %v669, %v671
      %vm682 = vcmask 1043456
      %v685 = vsel %vm682, %v412, %v463
      %v689 = vsel %vm682, %v413, %v464
      %v693 = vsel %vm682, %v414, %v465
      %v697 = vsel %vm682, %v415, %v466
      %v701 = vsel %vm682, %v416, %v467
      %v705 = vsel %vm682, %v417, %v468
      %v709 = vsel %vm682, %v418, %v469
      %v713 = vsel %vm682, %v419, %v470
      %v717 = vsel %vm682, %v420, %v471
      %v721 = vsel %vm682, %v421, %v461
      %v725 = vsel %vm682, %v493, %v523
      %v729 = vsel %vm682, %v494, %v524
      %v733 = vsel %vm682, %v495, %v525
      %v737 = vsel %vm682, %v496, %v526
      %v741 = vsel %vm682, %v497, %v527
      %v745 = vsel %vm682, %v498, %v528
      %v749 = vsel %vm682, %v499, %v529
      %v753 = vsel %vm682, %v500, %v530
      %v757 = vsel %vm682, %v501, %v531
      %v761 = vsel %vm682, %v491, %v521
      %v765 = vsel %vm682, %v553, %v583
      %v769 = vsel %vm682, %v554, %v584
      %v773 = vsel %vm682, %v555, %v585
      %v777 = vsel %vm682, %v556, %v586
      %v781 = vsel %vm682, %v557, %v587
      %v785 = vsel %vm682, %v558, %v588
      %v789 = vsel %vm682, %v559, %v589
      %v793 = vsel %vm682, %v560, %v590
      %v797 = vsel %vm682, %v561, %v591
      %v801 = vsel %vm682, %v551, %v581
      %v805 = vsel %vm682, %v613, %v643
      %v809 = vsel %vm682, %v614, %v644
      %v813 = vsel %vm682, %v615, %v645
      %v817 = vsel %vm682, %v616, %v646
      %v821 = vsel %vm682, %v617, %v647
      %v825 = vsel %vm682, %v618, %v648
      %v829 = vsel %vm682, %v619, %v649
      %v833 = vsel %vm682, %v620, %v650
      %v837 = vsel %vm682, %v621, %v651
      %v841 = vsel %vm682, %v611, %v641
      %v843 = vld [vmem:[%s3] sm:$0xf]
      %v844 = vld [vmem:[%s4] sm:$0xff]
      %846 = vset.pattern.permute.xlu0 0
      %847 = vperm.xlu0 %846, %v844
      %v848 = vpop.permute.xlu0 %847
      %vm850 = vcmask 588800
      %v852 = vsel %vm850, %v843, 0
      %v855 = vsel %vm682, %v673, 0
      %v858 = vsel %vm682, %v674, 0
      %v861 = vsel %vm682, %v675, 0
      %v864 = vsel %vm682, %v676, 0
      %v867 = vsel %vm682, %v677, 0
      %v870 = vsel %vm682, %v678, 0
      %v873 = vsel %vm682, %v679, 0
      %v876 = vsel %vm682, %v680, 0
      %v879 = vsel %vm682, %v681, 0
      %v882 = vsel %vm682, %v671, 0
      %884 = vmatprep.subr.bf16.mxu0 0
      %885 = vmatpush1.bf16.msra.mxu0 0
      %886 = vmatprep.subr.bf16.mxu0 0
      %887 = vmatpush1.bf16.msra.mxu0 0
      %888 = vmatprep.subr.bf16.mxu0 0
      %889 = vmatpush1.bf16.msra.mxu0 0
      %890 = vmatprep.subr.bf16.mxu0 %v858
      %891 = vmatpush1.bf16.msra.mxu0 %v855
      %892 = vmatprep.subr.bf16.mxu0 %v809
      %893 = vmatpush1.bf16.msra.mxu0 %v805
      %894 = vmatprep.subr.bf16.mxu0 %v769
      %895 = vmatpush1.bf16.msra.mxu0 %v765
      %896 = vmatprep.subr.bf16.mxu0 %v729
      %897 = vmatpush1.bf16.msra.mxu0 %v725
      %898 = vmatprep.subr.bf16.mxu0 %v689
      %899 = vmatpush1.bf16.msra.mxu0 %v685
      %900 = vmatprep.subr.bf16.mxu0 0
      %901 = vmatpush2.bf16.msra.mxu0 0
      %902 = vmatprep.subr.bf16.mxu0 0
      %903 = vmatpush2.bf16.msra.mxu0 0
      %904 = vmatprep.subr.bf16.mxu0 0
      %905 = vmatpush2.bf16.msra.mxu0 0
      %906 = vmatprep.subr.bf16.mxu0 0
      %907 = vmatpush2.bf16.msra.mxu0 0
      %908 = vmatprep.subr.bf16.mxu0 0
      %909 = vmatpush2.bf16.msra.mxu0 0
      %910 = vmatprep.subr.bf16.mxu0 0
      %911 = vmatpush2.bf16.msra.mxu0 0
      %912 = vmatprep.subr.bf16.mxu0 0
      %913 = vmatpush2.bf16.msra.mxu0 0
      %914 = vmatprep.subr.bf16.mxu0 0
      %915 = vmatpush2.bf16.msra.mxu0 0
      %916 = vmatprep.mubr.bf16.mxu0 0
      %917 = vmatmul.mubr.bf16.gmra.mxu0 %v852
      %v918 = vpop.f32.mrf.mxu0
      %v919 = vadd.f32 %v848, %v918
      %v920 = vpop.f32.mrf.mxu0
      %v921 = vadd.f32 %v848, %v920
      %v922 = vpop.f32.mrf.mxu0
      %v923 = vpop.f32.mrf.mxu0
      %924 = vdwg.mxu0
      %925 = vmatprep.subr.bf16.mxu0 0
      %926 = vmatpush1.bf16.msra.mxu0 0
      %927 = vmatprep.subr.bf16.mxu0 0
      %928 = vmatpush1.bf16.msra.mxu0 0
      %929 = vmatprep.subr.bf16.mxu0 0
      %930 = vmatpush1.bf16.msra.mxu0 0
      %931 = vmatprep.subr.bf16.mxu0 %v864
      %932 = vmatpush1.bf16.msra.mxu0 %v861
      %933 = vmatprep.subr.bf16.mxu0 %v817
      %934 = vmatpush1.bf16.msra.mxu0 %v813
      %935 = vmatprep.subr.bf16.mxu0 %v777
      %936 = vmatpush1.bf16.msra.mxu0 %v773
      %937 = vmatprep.subr.bf16.mxu0 %v737
      %938 = vmatpush1.bf16.msra.mxu0 %v733
      %939 = vmatprep.subr.bf16.mxu0 %v697
      %940 = vmatpush1.bf16.msra.mxu0 %v693
      %941 = vmatprep.subr.bf16.mxu0 0
      %942 = vmatpush2.bf16.msra.mxu0 0
      %943 = vmatprep.subr.bf16.mxu0 0
      %944 = vmatpush2.bf16.msra.mxu0 0
      %945 = vmatprep.subr.bf16.mxu0 0
      %946 = vmatpush2.bf16.msra.mxu0 0
      %947 = vmatprep.subr.bf16.mxu0 0
      %948 = vmatpush2.bf16.msra.mxu0 0
      %949 = vmatprep.subr.bf16.mxu0 0
      %950 = vmatpush2.bf16.msra.mxu0 0
      %951 = vmatprep.subr.bf16.mxu0 0
      %952 = vmatpush2.bf16.msra.mxu0 0
      %953 = vmatprep.subr.bf16.mxu0 0
      %954 = vmatpush2.bf16.msra.mxu0 0
      %955 = vmatprep.subr.bf16.mxu0 0
      %956 = vmatpush2.bf16.msra.mxu0 0
      %957 = vmatprep.mubr.bf16.mxu0 0
      %958 = vmatmul.mubr.bf16.gmra.mxu0 %v852
      %v959 = vpop.f32.mrf.mxu0
      %v960 = vadd.f32 %v848, %v959
      %v961 = vpop.f32.mrf.mxu0
      %v962 = vadd.f32 %v848, %v961
      %v963 = vpop.f32.mrf.mxu0
      %v964 = vpop.f32.mrf.mxu0
      %965 = vdwg.mxu0
      %966 = vmatprep.subr.bf16.mxu0 0
      %967 = vmatpush1.bf16.msra.mxu0 0
      %968 = vmatprep.subr.bf16.mxu0 0
      %969 = vmatpush1.bf16.msra.mxu0 0
      %970 = vmatprep.subr.bf16.mxu0 0
      %971 = vmatpush1.bf16.msra.mxu0 0
      %972 = vmatprep.subr.bf16.mxu0 %v870
      %973 = vmatpush1.bf16.msra.mxu0 %v867
      %974 = vmatprep.subr.bf16.mxu0 %v825
      %975 = vmatpush1.bf16.msra.mxu0 %v821
      %976 = vmatprep.subr.bf16.mxu0 %v785
      %977 = vmatpush1.bf16.msra.mxu0 %v781
      %978 = vmatprep.subr.bf16.mxu0 %v745
      %979 = vmatpush1.bf16.msra.mxu0 %v741
      %980 = vmatprep.subr.bf16.mxu0 %v705
      %981 = vmatpush1.bf16.msra.mxu0 %v701
      %982 = vmatprep.subr.bf16.mxu0 0
      %983 = vmatpush2.bf16.msra.mxu0 0
      %984 = vmatprep.subr.bf16.mxu0 0
      %985 = vmatpush2.bf16.msra.mxu0 0
      %986 = vmatprep.subr.bf16.mxu0 0
      %987 = vmatpush2.bf16.msra.mxu0 0
      %988 = vmatprep.subr.bf16.mxu0 0
      %989 = vmatpush2.bf16.msra.mxu0 0
      %990 = vmatprep.subr.bf16.mxu0 0
      %991 = vmatpush2.bf16.msra.mxu0 0
      %992 = vmatprep.subr.bf16.mxu0 0
      %993 = vmatpush2.bf16.msra.mxu0 0
      %994 = vmatprep.subr.bf16.mxu0 0
      %995 = vmatpush2.bf16.msra.mxu0 0
      %996 = vmatprep.subr.bf16.mxu0 0
      %997 = vmatpush2.bf16.msra.mxu0 0
      %998 = vmatprep.mubr.bf16.mxu0 0
      %999 = vmatmul.mubr.bf16.gmra.mxu0 %v852
      %v1000 = vpop.f32.mrf.mxu0
      %v1001 = vadd.f32 %v848, %v1000
      %v1002 = vpop.f32.mrf.mxu0
      %v1003 = vadd.f32 %v848, %v1002
      %v1004 = vpop.f32.mrf.mxu0
      %v1005 = vpop.f32.mrf.mxu0
      %1006 = vdwg.mxu0
      %1007 = vmatprep.subr.bf16.mxu0 0
      %1008 = vmatpush1.bf16.msra.mxu0 0
      %1009 = vmatprep.subr.bf16.mxu0 0
      %1010 = vmatpush1.bf16.msra.mxu0 0
      %1011 = vmatprep.subr.bf16.mxu0 0
      %1012 = vmatpush1.bf16.msra.mxu0 0
      %1013 = vmatprep.subr.bf16.mxu0 %v876
      %1014 = vmatpush1.bf16.msra.mxu0 %v873
      %1015 = vmatprep.subr.bf16.mxu0 %v833
      %1016 = vmatpush1.bf16.msra.mxu0 %v829
      %1017 = vmatprep.subr.bf16.mxu0 %v793
      %1018 = vmatpush1.bf16.msra.mxu0 %v789
      %1019 = vmatprep.subr.bf16.mxu0 %v753
      %1020 = vmatpush1.bf16.msra.mxu0 %v749
      %1021 = vmatprep.subr.bf16.mxu0 %v713
      %1022 = vmatpush1.bf16.msra.mxu0 %v709
      %1023 = vmatprep.subr.bf16.mxu0 0
      %1024 = vmatpush2.bf16.msra.mxu0 0
      %1025 = vmatprep.subr.bf16.mxu0 0
      %1026 = vmatpush2.bf16.msra.mxu0 0
      %1027 = vmatprep.subr.bf16.mxu0 0
      %1028 = vmatpush2.bf16.msra.mxu0 0
      %1029 = vmatprep.subr.bf16.mxu0 0
      %1030 = vmatpush2.bf16.msra.mxu0 0
      %1031 = vmatprep.subr.bf16.mxu0 0
      %1032 = vmatpush2.bf16.msra.mxu0 0
      %1033 = vmatprep.subr.bf16.mxu0 0
      %1034 = vmatpush2.bf16.msra.mxu0 0
      %1035 = vmatprep.subr.bf16.mxu0 0
      %1036 = vmatpush2.bf16.msra.mxu0 0
      %1037 = vmatprep.subr.bf16.mxu0 0
      %1038 = vmatpush2.bf16.msra.mxu0 0
      %1039 = vmatprep.mubr.bf16.mxu0 0
      %1040 = vmatmul.mubr.bf16.gmra.mxu0 %v852
      %v1041 = vpop.f32.mrf.mxu0
      %v1042 = vadd.f32 %v848, %v1041
      %v1043 = vpop.f32.mrf.mxu0
      %v1044 = vadd.f32 %v848, %v1043
      %v1045 = vpop.f32.mrf.mxu0
      %v1046 = vpop.f32.mrf.mxu0
      %1047 = vdwg.mxu0
      %1048 = vmatprep.subr.bf16.mxu0 0
      %1049 = vmatpush1.bf16.msra.mxu0 0
      %1050 = vmatprep.subr.bf16.mxu0 0
      %1051 = vmatpush1.bf16.msra.mxu0 0
      %1052 = vmatprep.subr.bf16.mxu0 0
      %1053 = vmatpush1.bf16.msra.mxu0 0
      %1054 = vmatprep.subr.bf16.mxu0 %v882
      %1055 = vmatpush1.bf16.msra.mxu0 %v879
      %1056 = vmatprep.subr.bf16.mxu0 %v841
      %1057 = vmatpush1.bf16.msra.mxu0 %v837
      %1058 = vmatprep.subr.bf16.mxu0 %v801
      %1059 = vmatpush1.bf16.msra.mxu0 %v797
      %1060 = vmatprep.subr.bf16.mxu0 %v761
      %1061 = vmatpush1.bf16.msra.mxu0 %v757
      %1062 = vmatprep.subr.bf16.mxu0 %v721
      %1063 = vmatpush1.bf16.msra.mxu0 %v717
      %1064 = vmatprep.subr.bf16.mxu0 0
      %1065 = vmatpush2.bf16.msra.mxu0 0
      %1066 = vmatprep.subr.bf16.mxu0 0
      %1067 = vmatpush2.bf16.msra.mxu0 0
      %1068 = vmatprep.subr.bf16.mxu0 0
      %1069 = vmatpush2.bf16.msra.mxu0 0
      %1070 = vmatprep.subr.bf16.mxu0 0
      %1071 = vmatpush2.bf16.msra.mxu0 0
      %1072 = vmatprep.subr.bf16.mxu0 0
      %1073 = vmatpush2.bf16.msra.mxu0 0
      %1074 = vmatprep.subr.bf16.mxu0 0
      %1075 = vmatpush2.bf16.msra.mxu0 0
      %1076 = vmatprep.subr.bf16.mxu0 0
      %1077 = vmatpush2.bf16.msra.mxu0 0
      %1078 = vmatprep.subr.bf16.mxu0 0
      %1079 = vmatpush2.bf16.msra.mxu0 0
      %1080 = vmatprep.mubr.bf16.mxu0 0
      %1081 = vmatmul.mubr.bf16.gmra.mxu0 %v852
      %v1082 = vpop.f32.mrf.mxu0
      %v1083 = vadd.f32 %v848, %v1082
      %v1084 = vpop.f32.mrf.mxu0
      %v1085 = vadd.f32 %v848, %v1084
      %v1086 = vpop.f32.mrf.mxu0
      %v1087 = vpop.f32.mrf.mxu0
      %1088 = vdwg.mxu0
      %v1089 = vpack.c.bf16 %v919, %v919
      %v1090 = vpack.c.bf16 %v921, %v921
      %v1091 = vpack.c.bf16 %v960, %v960
      %v1092 = vpack.c.bf16 %v962, %v962
      %v1093 = vpack.c.bf16 %v1001, %v1001
      %v1094 = vpack.c.bf16 %v1003, %v1003
      %v1095 = vpack.c.bf16 %v1042, %v1042
      %v1096 = vpack.c.bf16 %v1044, %v1044
      %v1097 = vpack.c.bf16 %v1083, %v1083
      %v1098 = vpack.c.bf16 %v1085, %v1085
      %v1109 = vunpack.c.l.b16 %v1089
      %v1110 = vunpack.c.l.b16 %v1090
      %v1111 = vunpack.c.l.b16 %v1091
      %v1112 = vunpack.c.l.b16 %v1092
      %v1113 = vunpack.c.l.b16 %v1093
      %v1114 = vunpack.c.l.b16 %v1094
      %v1115 = vunpack.c.l.b16 %v1095
      %v1116 = vunpack.c.l.b16 %v1096
      %v1117 = vunpack.c.l.b16 %v1097
      %v1118 = vunpack.c.l.b16 %v1098
      %v1119 = vpack.c.b16 %v1110, %v1109
      %v1120 = vpack.c.b16 %v1112, %v1111
      %v1121 = vpack.c.b16 %v1114, %v1113
      %v1122 = vpack.c.b16 %v1116, %v1115
      %v1123 = vpack.c.b16 %v1118, %v1117
      %1129 = vst [vmem:[%s285] sm:$0xff] %v1119
      %1130 = vst [vmem:[%s285 + $0x8] sm:$0xff] %v1120
      %1131 = vst [vmem:[%s285 + $0x10] sm:$0xff] %v1121
      %1132 = vst [vmem:[%s285 + $0x18] sm:$0xff] %v1122
      %vm1133 = vcmask 31748
      %vm1134 = vmor %vm1133, %vm682
      %1135 = vst.msk [vmem:[%s285 + $0x20] sm:$0xff] %vm1134, %v1123
      %1136 = vrot.lane.b32.xlu0 %v355, 93
      %v1137 = vpop.permute.xlu0 %1136
      %1138 = vrot.lane.b32.xlu0 %v359, 93
      %v1139 = vpop.permute.xlu0 %1138
      %1140 = vrot.lane.b32.xlu0 %v363, 93
      %v1141 = vpop.permute.xlu0 %1140
      %1142 = vrot.lane.b32.xlu0 %v367, 93
      %v1143 = vpop.permute.xlu0 %1142
      %1144 = vrot.lane.b32.xlu0 %v371, 93
      %v1145 = vpop.permute.xlu0 %1144
      %1146 = vrot.lane.b32.xlu0 %v375, 93
      %v1147 = vpop.permute.xlu0 %1146
      %1148 = vrot.lane.b32.xlu0 %v379, 93
      %v1149 = vpop.permute.xlu0 %1148
      %1150 = vrot.lane.b32.xlu0 %v383, 93
      %v1151 = vpop.permute.xlu0 %1150
      %1152 = vrot.lane.b32.xlu0 %v387, 93
      %v1153 = vpop.permute.xlu0 %1152
      %1154 = vrot.lane.b32.xlu0 %v391, 93
      %v1155 = vpop.permute.xlu0 %1154
      %vm1156 = vcmask 760832
      %v1157 = vsel %vm1156, %v1137, %v1139
      %v1158 = vsel %vm1156, %v1139, %v1141
      %v1159 = vsel %vm1156, %v1141, %v1143
      %v1160 = vsel %vm1156, %v1143, %v1145
      %v1161 = vsel %vm1156, %v1145, %v1147
      %v1162 = vsel %vm1156, %v1147, %v1149
      %v1163 = vsel %vm1156, %v1149, %v1151
      %v1164 = vsel %vm1156, %v1151, %v1153
      %v1165 = vsel %vm1156, %v1153, %v1155
      %v1176 = vmul.f32 %v919, %v1157
      %v1177 = vmul.f32 %v921, %v1158
      %v1178 = vmul.f32 %v960, %v1159
      %v1179 = vmul.f32 %v962, %v1160
      %v1180 = vmul.f32 %v1001, %v1161
      %v1181 = vmul.f32 %v1003, %v1162
      %v1182 = vmul.f32 %v1042, %v1163
      %v1183 = vmul.f32 %v1044, %v1164
      %v1184 = vmul.f32 %v1083, %v1165
      %v1185 = vmul.f32 %v1085, %v1155
      %v1186 = vadd.f32 %v1176, %v1177
      %v1187 = vadd.f32 %v1186, %v1178
      %v1188 = vadd.f32 %v1187, %v1179
      %v1189 = vadd.f32 %v1188, %v1180
      %v1190 = vadd.f32 %v1189, %v1181
      %v1191 = vadd.f32 %v1190, %v1182
      %v1192 = vadd.f32 %v1191, %v1183
      %v1193 = vadd.f32 %v1192, %v1184
      %vm1194 = vcmask 31744
      %v1195 = vsel %vm1194, %v1185, 0.0
      %v1196 = vadd.f32 %v1193, %v1195
      %1197 = vadd.xlane.f32.xlu0 %v1196
      %v1198 = vpop.xlane.xlu0 %1197
      %v1199 = vmul.f32 %v1176, %v919
      %v1200 = vmul.f32 %v1177, %v921
      %v1201 = vmul.f32 %v1178, %v960
      %v1202 = vmul.f32 %v1179, %v962
      %v1203 = vmul.f32 %v1180, %v1001
      %v1204 = vmul.f32 %v1181, %v1003
      %v1205 = vmul.f32 %v1182, %v1042
      %v1206 = vmul.f32 %v1183, %v1044
      %v1207 = vmul.f32 %v1184, %v1083
      %v1208 = vmul.f32 %v1185, %v1085
      %v1209 = vadd.f32 %v1199, %v1200
      %v1210 = vadd.f32 %v1209, %v1201
      %v1211 = vadd.f32 %v1210, %v1202
      %v1212 = vadd.f32 %v1211, %v1203
      %v1213 = vadd.f32 %v1212, %v1204
      %v1214 = vadd.f32 %v1213, %v1205
      %v1215 = vadd.f32 %v1214, %v1206
      %v1216 = vadd.f32 %v1215, %v1207
      %v1217 = vsel %vm1194, %v1208, 0.0
      %v1218 = vadd.f32 %v1216, %v1217
      %1219 = vadd.xlane.f32.xlu0 %v1218
      %v1220 = vpop.xlane.xlu0 %1219
      %vm1221 = vcmask 7168
      %v1222 = vsel %vm1221, %v1198, %v1220
      %vm1223 = vcmask 15360
      %1224 = vst.msk [vmem:[%s289] sm:$0xff] %vm1223, %v1222
      %p1225 = scmp.lt.s32.totalorder %s19, 1
      %s1226 = scalar_select %p1225, %s19, 1
      %s1227 = smul.addr %s1226, 10
      %s1228 = smul.addr %s1227, 4
      %s1229 = scalar_lea.vmem %s6, %s1228
      %p1230 = scmp.lt.s32.totalorder %s19, 1
      %s1231 = scalar_select %p1230, %s19, 1
      %s1232 = smul.addr %s1231, 8
      %s1233 = scalar_lea.vmem %s7, %s1232
      // Predicated region
      $region45: #{upsample_block_forward.6} parent=43 // pred_check
        %p1234 = pneg %p168
      $region46: #{upsample_block_forward.6} parent=43 // pred_check_branch
        %1236 = sbr.rel (%p1234) target = $region48
      $region47: #{upsample_block_forward.6} parent=43 // pred_region
        _
      $region48: #{upsample_block_forward.6} parent=43 // pred_fallthru
        _
      // Predicated region
      $region49: #{upsample_block_forward.6} parent=43 // pred_check
        %p1237 = pneg %p194
      $region50: #{upsample_block_forward.6} parent=43 // pred_check_branch
        %1239 = sbr.rel (%p1237) target = $region52
      $region51: #{upsample_block_forward.6} parent=43 // pred_region
        _
      $region52: #{upsample_block_forward.6} parent=43 // pred_fallthru
        _
    $region44: #{upsample_block_forward.6} parent=5 // pred_fallthru
      _
    %p1240 = scmp.le.s32.totalorder 2, %s14
    // Predicated region
    $region53: #{upsample_block_forward.6} parent=5 // pred_check
      %p1241 = pneg %p1240
    $region54: #{upsample_block_forward.6} parent=5 // pred_check_branch
      %1243 = sbr.rel (%p1241) target = $region56
    $region55: #{upsample_block_forward.6} parent=5 // pred_region
      %s1244 = ssub.s32 %s14, 2
      // Predicated region
      $region57: #{upsample_block_forward.6} parent=55 // pred_check
        %p1245 = pneg %p174
      $region58: #{upsample_block_forward.6} parent=55 // pred_check_branch
        %1247 = sbr.rel (%p1245) target = $region60
      $region59: #{upsample_block_forward.6} parent=55 // pred_region
        %p1248 = scmp.lt.s32.totalorder %s20, 1
        %s1249 = scalar_select %p1248, %s20, 1
        %s1250 = smul.addr %s1249, 10
        %s1251 = smul.addr %s1250, 4
        %s1252 = scalar_lea.vmem %s6, %s1251
      $region60: #{upsample_block_forward.6} parent=55 // pred_fallthru
        _
      // Predicated region
      $region61: #{upsample_block_forward.6} parent=55 // pred_check
        %p1253 = pneg %p200
      $region62: #{upsample_block_forward.6} parent=55 // pred_check_branch
        %1255 = sbr.rel (%p1253) target = $region64
      $region63: #{upsample_block_forward.6} parent=55 // pred_region
        %p1256 = scmp.lt.s32.totalorder %s20, 1
        %s1257 = scalar_select %p1256, %s20, 1
        %s1258 = smul.addr %s1257, 8
        %s1259 = scalar_lea.vmem %s7, %s1258
      $region64: #{upsample_block_forward.6} parent=55 // pred_fallthru
        _
    $region56: #{upsample_block_forward.6} parent=5 // pred_fallthru
      _
  $region6: #{upsample_block_forward.6} parent=0 // loop_footer
    %s18 = sadd.s32 1, %s14
  $region7: #{upsample_block_forward.6} parent=0 // loop_footer_branch
    %13 = sbr.rel target = $region3
  $region8: #{upsample_block_forward.6} parent=0 // loop_exit
    _

</llo_original>
